<compile_context>
chip_gen: v5e
topology: v5e:2x2
jax: 0.10.0
libtpu: 0.0.40
codegen_flags: <defaults>
</compile_context>

<pallas_src>
import math

import numpy as np

import jax
import jax.numpy as jnp
from jax.experimental import pallas as pl
from jax.experimental.pallas import tpu as pltpu


def _round_up(n, m):
    return ((n + m - 1) // m) * m


def _pad2d(a, rows, cols):
    r, c = a.shape
    if r == rows and c == cols:
        return a
    return jnp.pad(a, ((0, rows - r), (0, cols - c)))


# ---------------------------------------------------------------------------
# Exact (erf-based) GELU matching PyTorch nn.GELU() default (approximate='none').
# erf uses the Eigen/XLA f32 rational-polynomial approximation (pure VPU FMAs).
# In-kernel, the final divide is replaced by an EUP reciprocal (its own VLIW
# slot) refined with one Newton step, so f32 accuracy is kept while the VPU
# only sees multiplies/adds.
# ---------------------------------------------------------------------------
_INV_SQRT2 = np.float32(1.0 / math.sqrt(2.0))


def _erf_pq_f32(x):
    x = jnp.clip(x, -4.0, 4.0)
    x2 = x * x
    p = jnp.float32(-2.72614225801306e-10)
    p = p * x2 + jnp.float32(2.77068142495902e-08)
    p = p * x2 + jnp.float32(-2.10102402082508e-06)
    p = p * x2 + jnp.float32(-5.69250639462346e-05)
    p = p * x2 + jnp.float32(-7.34990630326855e-04)
    p = p * x2 + jnp.float32(-2.95459980854025e-02)
    p = p * x2 + jnp.float32(-1.60960333262415e-02)
    p = p * x
    q = jnp.float32(-1.45660718464996e-05)
    q = q * x2 + jnp.float32(-2.13374055278905e-04)
    q = q * x2 + jnp.float32(-1.68282697438203e-03)
    q = q * x2 + jnp.float32(-7.37332916720468e-03)
    q = q * x2 + jnp.float32(-1.42647390514189e-02)
    return p, q


def _gelu_f32(x, *, in_kernel):
    p, q = _erf_pq_f32(x * _INV_SQRT2)
    if in_kernel:
        r = pl.reciprocal(q, approx=True)            # EUP slot (not VPU)
        r = r * (jnp.float32(2.0) - q * r)           # 1 NR step -> ~f32 accuracy
        erf = p * r
    else:
        erf = p / q
    return jnp.float32(0.5) * x * (jnp.float32(1.0) + erf)


# ---------------------------------------------------------------------------
# Fused feed-forward kernel: three matmuls + biases + two GELUs per row tile.
# Weights stay VMEM-resident across the grid (constant index maps).
# ---------------------------------------------------------------------------
def ffn_kernel(x_ref, w1_ref, b1_ref, w2_ref, b2_ref, w3_ref, b3_ref, o_ref):
    # Matmul operands stay in their storage dtype (bf16 feeds the MXU
    # natively); accumulation, bias add and GELU are f32.
    h = jnp.dot(x_ref[...], w1_ref[...], preferred_element_type=jnp.float32)
    h = _gelu_f32(h + b1_ref[...], in_kernel=True)
    h = jnp.dot(h.astype(w2_ref.dtype), w2_ref[...],
                preferred_element_type=jnp.float32)
    h = _gelu_f32(h + b2_ref[...], in_kernel=True)
    y = jnp.dot(h.astype(w3_ref.dtype), w3_ref[...],
                preferred_element_type=jnp.float32)
    y = y + b3_ref[...]
    # nn.Dropout is identity in eval/inference mode.
    # TODO(synk): training-mode stochastic dropout (pltpu.prng_*) not emitted.
    o_ref[...] = y.astype(o_ref.dtype)


def feed_forward(x, params, *, compute_dtype=None, out_dtype=None, tm=128):
    """x: (B, T, n_embd) -> (B, T, n_embd).

    compute_dtype: dtype fed to the MXU (bf16 recommended on v6e/v7x);
    accumulation, bias and GELU are always f32.  tm should be a multiple of
    128 (128 everywhere; 256 is also fine on v6e/v7x).
    """
    B, T, E = x.shape
    w1, b1, w2, b2, w3, b3 = params
    H1, H2 = w1.shape[1], w2.shape[1]
    assert tm % 8 == 0

    out_dtype = np.dtype(out_dtype) if out_dtype is not None else x.dtype
    cd = np.dtype(compute_dtype) if compute_dtype is not None else x.dtype

    M = B * T
    Mp = _round_up(M, tm)                       # ragged rows -> zero pad
    Ep = _round_up(E, 128)                      # lane-dense feature dims
    H1p = _round_up(H1, 128)
    H2p = _round_up(H2, 128)

    x2 = _pad2d(x.reshape(M, E).astype(cd), Mp, Ep)
    w1p = _pad2d(w1.astype(cd), Ep, H1p)
    w2p = _pad2d(w2.astype(cd), H1p, H2p)
    w3p = _pad2d(w3.astype(cd), H2p, Ep)
    b1p = _pad2d(b1.astype(jnp.float32), 1, H1p)
    b2p = _pad2d(b2.astype(jnp.float32), 1, H2p)
    b3p = _pad2d(b3.astype(jnp.float32), 1, Ep)

    # VMEM budget: resident weights (x2 double-buffer headroom) + x/out tiles
    # (double-buffered) + f32 intermediates.  Capped at 64 MiB (valid per-TC
    # on v7x as well as v5e/v6e).
    itemsize = lambda d: np.dtype(d).itemsize
    w_bytes = ((Ep * H1p + H1p * H2p + H2p * Ep) * itemsize(cd)
               + (H1p + H2p + Ep) * 4)
    io_bytes = 2 * tm * Ep * itemsize(cd) + 2 * tm * Ep * itemsize(out_dtype)
    h_bytes = 4 * tm * max(H1p, H2p) * 4
    vmem_limit = int(min(64 * 2 ** 20,
                         max(2 * w_bytes + io_bytes + h_bytes, 32 * 2 ** 20)))

    out = pl.pallas_call(
        ffn_kernel,
        out_shape=jax.ShapeDtypeStruct((Mp, Ep), out_dtype),
        grid_spec=pltpu.PrefetchScalarGridSpec(
            num_scalar_prefetch=0,
            grid=(Mp // tm,),
            in_specs=[
                pl.BlockSpec((tm, Ep), lambda i: (i, 0)),    # x row tile
                pl.BlockSpec((Ep, H1p), lambda i: (0, 0)),   # W1 (resident)
                pl.BlockSpec((1, H1p), lambda i: (0, 0)),    # b1
                pl.BlockSpec((H1p, H2p), lambda i: (0, 0)),  # W2 (resident)
                pl.BlockSpec((1, H2p), lambda i: (0, 0)),    # b2
                pl.BlockSpec((H2p, Ep), lambda i: (0, 0)),   # W3 (resident)
                pl.BlockSpec((1, Ep), lambda i: (0, 0)),     # b3
            ],
            out_specs=pl.BlockSpec((tm, Ep), lambda i: (i, 0)),
        ),
        compiler_params=pltpu.CompilerParams(
            dimension_semantics=("parallel",),   # shards row tiles across TCs
            vmem_limit_bytes=vmem_limit,
        ),
    )(x2, w1p, b1p, w2p, b2p, w3p, b3p)

    return out[:M, :E].reshape(B, T, E)


# ---------------------------------------------------------------------------
# Parameter init (mimics nn.Linear uniform(-1/sqrt(fan_in), 1/sqrt(fan_in))).
# ---------------------------------------------------------------------------
def init_params(key, n_embd, dtype=jnp.float32):
    dims = [(n_embd, 4 * n_embd), (4 * n_embd, 2 * n_embd), (2 * n_embd, n_embd)]
    params = []
    for fan_in, fan_out in dims:
        key, kw, kb = jax.random.split(key, 3)
        bound = 1.0 / math.sqrt(fan_in)
        # Stored as (in, out) — transpose of PyTorch's (out, in) weight layout.
        w = jax.random.uniform(kw, (fan_in, fan_out), dtype, -bound, bound)
        b = jax.random.uniform(kb, (1, fan_out), dtype, -bound, bound)
        params += [w, b]
    return params


def ref_forward(x, params, *, compute_dtype=None):
    """Pure-JAX reference with identical dtype handling, for correctness."""
    B, T, E = x.shape
    w1, b1, w2, b2, w3, b3 = params
    cd = np.dtype(compute_dtype) if compute_dtype is not None else x.dtype
    h = x.reshape(B * T, E).astype(cd)
    h = jnp.dot(h, w1.astype(cd), preferred_element_type=jnp.float32) + b1
    h = _gelu_f32(h, in_kernel=False)
    h = jnp.dot(h.astype(cd), w2.astype(cd), preferred_element_type=jnp.float32) + b2
    h = _gelu_f32(h, in_kernel=False)
    y = jnp.dot(h.astype(cd), w3.astype(cd), preferred_element_type=jnp.float32) + b3
    return y.reshape(B, T, E).astype(x.dtype)


if __name__ == "__main__":
    key = jax.random.PRNGKey(0)
    k1, k2, k3, k4 = jax.random.split(key, 4)

    # --- Case 1: lane-aligned shapes, f32 operands (tight check) -----------
    n_embd, B, T = 128, 4, 32            # hidden sizes: 512 -> 256 -> 128
    x = jax.random.normal(k1, (B, T, n_embd), dtype=jnp.float32)
    params = init_params(k2, n_embd)
    y = jax.block_until_ready(feed_forward(x, params))
    y_ref = ref_forward(x, params)
    assert y.shape == (B, T, n_embd)
    assert jnp.allclose(y, y_ref, atol=1e-3, rtol=1e-3), "f32 mismatch vs reference"

    # --- Case 2: small ragged shapes (n_embd=32) on the native-bf16 MXU path
    # Exercises row/feature zero-padding to lane-dense multiples of 128.
    n_embd2, B2, T2 = 32, 2, 8
    x2 = jax.random.normal(k3, (B2, T2, n_embd2), dtype=jnp.float32)
    params2 = init_params(k4, n_embd2)
    y2 = jax.block_until_ready(
        feed_forward(x2, params2, compute_dtype=jnp.bfloat16))
    y2_ref = ref_forward(x2, params2, compute_dtype=jnp.bfloat16)
    assert y2.shape == (B2, T2, n_embd2)
    assert jnp.allclose(y2, y2_ref, atol=3e-2, rtol=3e-2), "bf16 mismatch vs reference"

    print("KERNEL_OK")
</pallas_src>

<mosaic_0001>
module attributes {stable_mosaic.version = 11 : i64} {
  func.func @ffn_kernel(%arg0: i32, %arg1: memref<128x128xf32, #tpu.memory_space<vmem>>, %arg2: memref<128x512xf32, #tpu.memory_space<vmem>>, %arg3: memref<1x512xf32, #tpu.memory_space<vmem>>, %arg4: memref<512x256xf32, #tpu.memory_space<vmem>>, %arg5: memref<1x256xf32, #tpu.memory_space<vmem>>, %arg6: memref<256x128xf32, #tpu.memory_space<vmem>>, %arg7: memref<1x128xf32, #tpu.memory_space<vmem>>, %arg8: memref<128x128xf32, #tpu.memory_space<vmem>>) attributes {dimension_semantics = [#tpu.dimension_semantics<parallel>], iteration_bounds = array<i64: 1>, scalar_prefetch = 0 : i64, scratch_operands = 0 : i64, tpu.core_type = #tpu.core_type<tc>, window_params = [{transform_indices = @transform_0, window_bounds = array<i64: 128, 128>}, {pipeline_mode = #tpu.pipeline_mode<synchronous>, transform_indices = @transform_1, window_bounds = array<i64: 128, 512>}, {pipeline_mode = #tpu.pipeline_mode<synchronous>, transform_indices = @transform_2, window_bounds = array<i64: 1, 512>}, {pipeline_mode = #tpu.pipeline_mode<synchronous>, transform_indices = @transform_3, window_bounds = array<i64: 512, 256>}, {pipeline_mode = #tpu.pipeline_mode<synchronous>, transform_indices = @transform_4, window_bounds = array<i64: 1, 256>}, {pipeline_mode = #tpu.pipeline_mode<synchronous>, transform_indices = @transform_5, window_bounds = array<i64: 256, 128>}, {pipeline_mode = #tpu.pipeline_mode<synchronous>, transform_indices = @transform_6, window_bounds = array<i64: 1, 128>}, {transform_indices = @transform_7, window_bounds = array<i64: 128, 128>}]} {
    %c0 = arith.constant 0 : index
    %c0_0 = arith.constant 0 : index
    %0 = vector.load %arg1[%c0, %c0_0] : memref<128x128xf32, #tpu.memory_space<vmem>>, vector<128x128xf32>
    %c0_1 = arith.constant 0 : index
    %c0_2 = arith.constant 0 : index
    %1 = vector.load %arg2[%c0_1, %c0_2] : memref<128x512xf32, #tpu.memory_space<vmem>>, vector<128x512xf32>
    %cst = arith.constant dense<0.000000e+00> : vector<128x512xf32>
    %2 = tpu.matmul %0, %1, %cst {dimension_numbers = #tpu.dot_dimension_numbers<[1], [0], [0], [1], [0, 0, 1, 1], [], []>} : vector<128x128xf32>, vector<128x512xf32>, vector<128x512xf32> -> vector<128x512xf32>
    %c0_3 = arith.constant 0 : index
    %c0_4 = arith.constant 0 : index
    %3 = vector.load %arg3[%c0_3, %c0_4] : memref<1x512xf32, #tpu.memory_space<vmem>>, vector<1x512xf32>
    %4 = vector.broadcast %3 : vector<1x512xf32> to vector<128x512xf32>
    %5 = arith.addf %2, %4 : vector<128x512xf32>
    %cst_5 = arith.constant 0.707106769 : f32
    %6 = vector.broadcast %cst_5 : f32 to vector<128x512xf32>
    %7 = arith.mulf %5, %6 : vector<128x512xf32>
    %cst_6 = arith.constant -4.000000e+00 : f32
    %cst_7 = arith.constant 4.000000e+00 : f32
    %8 = vector.broadcast %cst_6 : f32 to vector<128x512xf32>
    %9 = arith.maximumf %8, %7 : vector<128x512xf32>
    %10 = vector.broadcast %cst_7 : f32 to vector<128x512xf32>
    %11 = arith.minimumf %10, %9 : vector<128x512xf32>
    %12 = arith.mulf %11, %11 : vector<128x512xf32>
    %cst_8 = arith.constant -2.72614237E-10 : f32
    %13 = vector.broadcast %cst_8 : f32 to vector<128x512xf32>
    %14 = arith.mulf %13, %12 : vector<128x512xf32>
    %cst_9 = arith.constant 2.77068146E-8 : f32
    %15 = vector.broadcast %cst_9 : f32 to vector<128x512xf32>
    %16 = arith.addf %14, %15 : vector<128x512xf32>
    %17 = arith.mulf %16, %12 : vector<128x512xf32>
    %cst_10 = arith.constant -2.10102394E-6 : f32
    %18 = vector.broadcast %cst_10 : f32 to vector<128x512xf32>
    %19 = arith.addf %17, %18 : vector<128x512xf32>
    %20 = arith.mulf %19, %12 : vector<128x512xf32>
    %cst_11 = arith.constant -5.69250624E-5 : f32
    %21 = vector.broadcast %cst_11 : f32 to vector<128x512xf32>
    %22 = arith.addf %20, %21 : vector<128x512xf32>
    %23 = arith.mulf %22, %12 : vector<128x512xf32>
    %cst_12 = arith.constant -7.34990637E-4 : f32
    %24 = vector.broadcast %cst_12 : f32 to vector<128x512xf32>
    %25 = arith.addf %23, %24 : vector<128x512xf32>
    %26 = arith.mulf %25, %12 : vector<128x512xf32>
    %cst_13 = arith.constant -0.0295459982 : f32
    %27 = vector.broadcast %cst_13 : f32 to vector<128x512xf32>
    %28 = arith.addf %26, %27 : vector<128x512xf32>
    %29 = arith.mulf %28, %12 : vector<128x512xf32>
    %cst_14 = arith.constant -0.0160960332 : f32
    %30 = vector.broadcast %cst_14 : f32 to vector<128x512xf32>
    %31 = arith.addf %29, %30 : vector<128x512xf32>
    %32 = arith.mulf %31, %11 : vector<128x512xf32>
    %cst_15 = arith.constant -1.45660715E-5 : f32
    %33 = vector.broadcast %cst_15 : f32 to vector<128x512xf32>
    %34 = arith.mulf %33, %12 : vector<128x512xf32>
    %cst_16 = arith.constant -2.13374049E-4 : f32
    %35 = vector.broadcast %cst_16 : f32 to vector<128x512xf32>
    %36 = arith.addf %34, %35 : vector<128x512xf32>
    %37 = arith.mulf %36, %12 : vector<128x512xf32>
    %cst_17 = arith.constant -0.00168282702 : f32
    %38 = vector.broadcast %cst_17 : f32 to vector<128x512xf32>
    %39 = arith.addf %37, %38 : vector<128x512xf32>
    %40 = arith.mulf %39, %12 : vector<128x512xf32>
    %cst_18 = arith.constant -0.00737332925 : f32
    %41 = vector.broadcast %cst_18 : f32 to vector<128x512xf32>
    %42 = arith.addf %40, %41 : vector<128x512xf32>
    %43 = arith.mulf %42, %12 : vector<128x512xf32>
    %cst_19 = arith.constant -0.0142647391 : f32
    %44 = vector.broadcast %cst_19 : f32 to vector<128x512xf32>
    %45 = arith.addf %43, %44 : vector<128x512xf32>
    %46 = tpu.reciprocal %45 {approx = true} : vector<128x512xf32> -> vector<128x512xf32>
    %47 = arith.mulf %45, %46 : vector<128x512xf32>
    %cst_20 = arith.constant 2.000000e+00 : f32
    %48 = vector.broadcast %cst_20 : f32 to vector<128x512xf32>
    %49 = arith.subf %48, %47 : vector<128x512xf32>
    %50 = arith.mulf %46, %49 : vector<128x512xf32>
    %51 = arith.mulf %32, %50 : vector<128x512xf32>
    %cst_21 = arith.constant 5.000000e-01 : f32
    %52 = vector.broadcast %cst_21 : f32 to vector<128x512xf32>
    %53 = arith.mulf %52, %5 : vector<128x512xf32>
    %cst_22 = arith.constant 1.000000e+00 : f32
    %54 = vector.broadcast %cst_22 : f32 to vector<128x512xf32>
    %55 = arith.addf %54, %51 : vector<128x512xf32>
    %56 = arith.mulf %53, %55 : vector<128x512xf32>
    %c0_23 = arith.constant 0 : index
    %c0_24 = arith.constant 0 : index
    %57 = vector.load %arg4[%c0_23, %c0_24] : memref<512x256xf32, #tpu.memory_space<vmem>>, vector<512x256xf32>
    %cst_25 = arith.constant dense<0.000000e+00> : vector<128x256xf32>
    %58 = tpu.matmul %56, %57, %cst_25 {dimension_numbers = #tpu.dot_dimension_numbers<[1], [0], [0], [1], [0, 0, 1, 1], [], []>} : vector<128x512xf32>, vector<512x256xf32>, vector<128x256xf32> -> vector<128x256xf32>
    %c0_26 = arith.constant 0 : index
    %c0_27 = arith.constant 0 : index
    %59 = vector.load %arg5[%c0_26, %c0_27] : memref<1x256xf32, #tpu.memory_space<vmem>>, vector<1x256xf32>
    %60 = vector.broadcast %59 : vector<1x256xf32> to vector<128x256xf32>
    %61 = arith.addf %58, %60 : vector<128x256xf32>
    %cst_28 = arith.constant 0.707106769 : f32
    %62 = vector.broadcast %cst_28 : f32 to vector<128x256xf32>
    %63 = arith.mulf %61, %62 : vector<128x256xf32>
    %cst_29 = arith.constant -4.000000e+00 : f32
    %cst_30 = arith.constant 4.000000e+00 : f32
    %64 = vector.broadcast %cst_29 : f32 to vector<128x256xf32>
    %65 = arith.maximumf %64, %63 : vector<128x256xf32>
    %66 = vector.broadcast %cst_30 : f32 to vector<128x256xf32>
    %67 = arith.minimumf %66, %65 : vector<128x256xf32>
    %68 = arith.mulf %67, %67 : vector<128x256xf32>
    %cst_31 = arith.constant -2.72614237E-10 : f32
    %69 = vector.broadcast %cst_31 : f32 to vector<128x256xf32>
    %70 = arith.mulf %69, %68 : vector<128x256xf32>
    %cst_32 = arith.constant 2.77068146E-8 : f32
    %71 = vector.broadcast %cst_32 : f32 to vector<128x256xf32>
    %72 = arith.addf %70, %71 : vector<128x256xf32>
    %73 = arith.mulf %72, %68 : vector<128x256xf32>
    %cst_33 = arith.constant -2.10102394E-6 : f32
    %74 = vector.broadcast %cst_33 : f32 to vector<128x256xf32>
    %75 = arith.addf %73, %74 : vector<128x256xf32>
    %76 = arith.mulf %75, %68 : vector<128x256xf32>
    %cst_34 = arith.constant -5.69250624E-5 : f32
    %77 = vector.broadcast %cst_34 : f32 to vector<128x256xf32>
    %78 = arith.addf %76, %77 : vector<128x256xf32>
    %79 = arith.mulf %78, %68 : vector<128x256xf32>
    %cst_35 = arith.constant -7.34990637E-4 : f32
    %80 = vector.broadcast %cst_35 : f32 to vector<128x256xf32>
    %81 = arith.addf %79, %80 : vector<128x256xf32>
    %82 = arith.mulf %81, %68 : vector<128x256xf32>
    %cst_36 = arith.constant -0.0295459982 : f32
    %83 = vector.broadcast %cst_36 : f32 to vector<128x256xf32>
    %84 = arith.addf %82, %83 : vector<128x256xf32>
    %85 = arith.mulf %84, %68 : vector<128x256xf32>
    %cst_37 = arith.constant -0.0160960332 : f32
    %86 = vector.broadcast %cst_37 : f32 to vector<128x256xf32>
    %87 = arith.addf %85, %86 : vector<128x256xf32>
    %88 = arith.mulf %87, %67 : vector<128x256xf32>
    %cst_38 = arith.constant -1.45660715E-5 : f32
    %89 = vector.broadcast %cst_38 : f32 to vector<128x256xf32>
    %90 = arith.mulf %89, %68 : vector<128x256xf32>
    %cst_39 = arith.constant -2.13374049E-4 : f32
    %91 = vector.broadcast %cst_39 : f32 to vector<128x256xf32>
    %92 = arith.addf %90, %91 : vector<128x256xf32>
    %93 = arith.mulf %92, %68 : vector<128x256xf32>
    %cst_40 = arith.constant -0.00168282702 : f32
    %94 = vector.broadcast %cst_40 : f32 to vector<128x256xf32>
    %95 = arith.addf %93, %94 : vector<128x256xf32>
    %96 = arith.mulf %95, %68 : vector<128x256xf32>
    %cst_41 = arith.constant -0.00737332925 : f32
    %97 = vector.broadcast %cst_41 : f32 to vector<128x256xf32>
    %98 = arith.addf %96, %97 : vector<128x256xf32>
    %99 = arith.mulf %98, %68 : vector<128x256xf32>
    %cst_42 = arith.constant -0.0142647391 : f32
    %100 = vector.broadcast %cst_42 : f32 to vector<128x256xf32>
    %101 = arith.addf %99, %100 : vector<128x256xf32>
    %102 = tpu.reciprocal %101 {approx = true} : vector<128x256xf32> -> vector<128x256xf32>
    %103 = arith.mulf %101, %102 : vector<128x256xf32>
    %cst_43 = arith.constant 2.000000e+00 : f32
    %104 = vector.broadcast %cst_43 : f32 to vector<128x256xf32>
    %105 = arith.subf %104, %103 : vector<128x256xf32>
    %106 = arith.mulf %102, %105 : vector<128x256xf32>
    %107 = arith.mulf %88, %106 : vector<128x256xf32>
    %cst_44 = arith.constant 5.000000e-01 : f32
    %108 = vector.broadcast %cst_44 : f32 to vector<128x256xf32>
    %109 = arith.mulf %108, %61 : vector<128x256xf32>
    %cst_45 = arith.constant 1.000000e+00 : f32
    %110 = vector.broadcast %cst_45 : f32 to vector<128x256xf32>
    %111 = arith.addf %110, %107 : vector<128x256xf32>
    %112 = arith.mulf %109, %111 : vector<128x256xf32>
    %c0_46 = arith.constant 0 : index
    %c0_47 = arith.constant 0 : index
    %113 = vector.load %arg6[%c0_46, %c0_47] : memref<256x128xf32, #tpu.memory_space<vmem>>, vector<256x128xf32>
    %cst_48 = arith.constant dense<0.000000e+00> : vector<128x128xf32>
    %114 = tpu.matmul %112, %113, %cst_48 {dimension_numbers = #tpu.dot_dimension_numbers<[1], [0], [0], [1], [0, 0, 1, 1], [], []>} : vector<128x256xf32>, vector<256x128xf32>, vector<128x128xf32> -> vector<128x128xf32>
    %c0_49 = arith.constant 0 : index
    %c0_50 = arith.constant 0 : index
    %115 = vector.load %arg7[%c0_49, %c0_50] : memref<1x128xf32, #tpu.memory_space<vmem>>, vector<1x128xf32>
    %116 = vector.broadcast %115 : vector<1x128xf32> to vector<128x128xf32>
    %117 = arith.addf %114, %116 : vector<128x128xf32>
    %c0_51 = arith.constant 0 : index
    %c0_52 = arith.constant 0 : index
    %118 = vector.load %arg8[%c0_51, %c0_52] : memref<128x128xf32, #tpu.memory_space<vmem>>, vector<128x128xf32>
    tpu.vector_store %arg8[%c0_51, %c0_52], %117 {strides = array<i32>} : memref<128x128xf32, #tpu.memory_space<vmem>>, vector<128x128xf32>,
    return
  }
  func.func @transform_0(%arg0: i32) -> (i32, i32) {
    %c0_i32 = arith.constant 0 : i32
    %c0_i32_0 = arith.constant 0 : i32
    return %arg0, %c0_i32 : i32, i32
  }
  func.func @transform_1(%arg0: i32) -> (i32, i32) {
    %c0_i32 = arith.constant 0 : i32
    %c0_i32_0 = arith.constant 0 : i32
    %c0_i32_1 = arith.constant 0 : i32
    return %c0_i32, %c0_i32_0 : i32, i32
  }
  func.func @transform_2(%arg0: i32) -> (i32, i32) {
    %c0_i32 = arith.constant 0 : i32
    %c0_i32_0 = arith.constant 0 : i32
    %c0_i32_1 = arith.constant 0 : i32
    return %c0_i32, %c0_i32_0 : i32, i32
  }
  func.func @transform_3(%arg0: i32) -> (i32, i32) {
    %c0_i32 = arith.constant 0 : i32
    %c0_i32_0 = arith.constant 0 : i32
    %c0_i32_1 = arith.constant 0 : i32
    return %c0_i32, %c0_i32_0 : i32, i32
  }
  func.func @transform_4(%arg0: i32) -> (i32, i32) {
    %c0_i32 = arith.constant 0 : i32
    %c0_i32_0 = arith.constant 0 : i32
    %c0_i32_1 = arith.constant 0 : i32
    return %c0_i32, %c0_i32_0 : i32, i32
  }
  func.func @transform_5(%arg0: i32) -> (i32, i32) {
    %c0_i32 = arith.constant 0 : i32
    %c0_i32_0 = arith.constant 0 : i32
    %c0_i32_1 = arith.constant 0 : i32
    return %c0_i32, %c0_i32_0 : i32, i32
  }
  func.func @transform_6(%arg0: i32) -> (i32, i32) {
    %c0_i32 = arith.constant 0 : i32
    %c0_i32_0 = arith.constant 0 : i32
    %c0_i32_1 = arith.constant 0 : i32
    return %c0_i32, %c0_i32_0 : i32, i32
  }
  func.func @transform_7(%arg0: i32) -> (i32, i32) {
    %c0_i32 = arith.constant 0 : i32
    %c0_i32_0 = arith.constant 0 : i32
    return %arg0, %c0_i32 : i32, i32
  }
}

</mosaic_0001>

<llo_original>
// kernel: tpu_custom_call.1
$region0: #{tpu_custom_call.1}
  #allocation0 [shape = 'u32[]', space=smem, size = 0x4, offset = 0x4, fixed_abs, tag = 'smem constant byte address 0x4 - core index']
  #allocation1 [shape = 'u32[72,128]{1,0:T(1,128)}', space=vmem, size = 0x9000, scoped, tag = 'internal scratch']
  %s0 = inlined_call_operand.hbm [shape: f32[128,128], index: 0, kind: input, shape index: {}]
  %s1 = inlined_call_operand.hbm [shape: f32[128,512], index: 1, kind: input, shape index: {}]
  %s2 = inlined_call_operand.hbm [shape: f32[1,512], index: 2, kind: input, shape index: {}]
  %s3 = inlined_call_operand.hbm [shape: f32[512,256], index: 3, kind: input, shape index: {}]
  %s4 = inlined_call_operand.vmem [shape: f32[1,256], index: 4, kind: input, shape index: {}]
  %s5 = inlined_call_operand.hbm [shape: f32[256,128], index: 5, kind: input, shape index: {}]
  %s6 = inlined_call_operand.vmem [shape: f32[1,128], index: 6, kind: input, shape index: {}]
  %s7 = inlined_call_operand.hbm [shape: f32[128,128], index: 7, kind: output, shape index: {}]
  %s8 = sld [smem:[#allocation0]]
  $region58: #{tpu_custom_call.1} parent=0
    _
  %s10 = ssub.s32 1, %s8
  %s11 = scalar_select 0, %s10, %s8
  $region1: #{tpu_custom_call.1} parent=0
    #allocation2 [shape = 'u8[65536]{0}', space=vmem, size = 0x10000, scoped, tag = 'input window, operand 0, single buffered']
    #allocation3 [shape = 's32[1]{0}', space=sflag, size = 0x4, scoped, tag = 'scoped memory for tpu_custom_call.1']
    #allocation4 [shape = 's32[1]{0}', space=sflag, size = 0x4, scoped, tag = 'scoped memory for tpu_custom_call.1']
    #allocation5 [shape = 'u8[262144]{0}', space=vmem, size = 0x40000, scoped, tag = 'input window, operand 1, single buffered']
    #allocation6 [shape = 's32[1]{0}', space=sflag, size = 0x4, scoped, tag = 'scoped memory for tpu_custom_call.1']
    #allocation7 [shape = 'u8[2048]{0}', space=vmem, size = 0x800, scoped, tag = 'input window, operand 2, single buffered']
    #allocation8 [shape = 'u8[524288]{0}', space=vmem, size = 0x80000, scoped, tag = 'input window, operand 3, single buffered']
    #allocation9 [shape = 's32[1]{0}', space=sflag, size = 0x4, scoped, tag = 'scoped memory for tpu_custom_call.1']
    #allocation10 [shape = 'u8[131072]{0}', space=vmem, size = 0x20000, scoped, tag = 'input window, operand 5, single buffered']
    #allocation11 [shape = 'u8[65536]{0}', space=vmem, size = 0x10000, scoped, tag = 'output window, operand 0, single buffered']
    %12 = vsyncpa [#allocation3], 0
    %13 = vsyncpa [#allocation6], 0
    %14 = vsyncpa [#allocation9], 0
    %15 = vsyncpa [#allocation4], 0
    // Predicated region
    $region2: #{tpu_custom_call.1} parent=1 // pred_check
      _
    $region3: #{tpu_custom_call.1} parent=1 // pred_check_branch
      %17 = sbr.rel (0) target = $region5
    $region4: #{tpu_custom_call.1} parent=1 // pred_region
      %19 = vsyncadd [#allocation3], 0
      %s20 = sshll.u32 %s0, 4
      %s21 = int_to_ptr.hbm [resolvable:$true] %s20
      %s22 = sshll.u32 [#allocation2], 4
      %s23 = int_to_ptr.vmem [resolvable:$true] %s22
      %28 = dma.hbm_to_vmem [thread:$0]  %s21, 2048, %s23, [#allocation3], 128, 128, 8
    $region5: #{tpu_custom_call.1} parent=1 // pred_fallthru
      _
    // Predicated region
    $region6: #{tpu_custom_call.1} parent=1 // pred_check
      _
    $region7: #{tpu_custom_call.1} parent=1 // pred_check_branch
      %30 = sbr.rel (0) target = $region9
    $region8: #{tpu_custom_call.1} parent=1 // pred_region
      %32 = vsyncadd [#allocation6], 0
      %s33 = sshll.u32 %s1, 4
      %s34 = int_to_ptr.hbm [resolvable:$true] %s33
      %s35 = sshll.u32 [#allocation5], 4
      %s36 = int_to_ptr.vmem [resolvable:$true] %s35
      %41 = dma.hbm_to_vmem [thread:$0]  %s34, 8192, %s36, [#allocation6], 512, 512, 32
    $region9: #{tpu_custom_call.1} parent=1 // pred_fallthru
      _
    // Predicated region
    $region10: #{tpu_custom_call.1} parent=1 // pred_check
      _
    $region11: #{tpu_custom_call.1} parent=1 // pred_check_branch
      %43 = sbr.rel (0) target = $region13
    $region12: #{tpu_custom_call.1} parent=1 // pred_region
      %45 = vsyncadd [#allocation6], 0
      %s47 = sshll.u32 %s2, 4
      %s48 = int_to_ptr.hbm [resolvable:$true] %s47
      %s49 = sshll.u32 [#allocation7], 4
      %s50 = int_to_ptr.vmem [resolvable:$true] %s49
      %52 = dma.hbm_to_vmem [thread:$0]  %s48, 64, %s50, [#allocation6]
    $region13: #{tpu_custom_call.1} parent=1 // pred_fallthru
      _
    // Predicated region
    $region14: #{tpu_custom_call.1} parent=1 // pred_check
      _
    $region15: #{tpu_custom_call.1} parent=1 // pred_check_branch
      %54 = sbr.rel (0) target = $region17
    $region16: #{tpu_custom_call.1} parent=1 // pred_region
      %56 = vsyncadd [#allocation9], 0
      %s57 = sshll.u32 %s3, 4
      %s58 = int_to_ptr.hbm [resolvable:$true] %s57
      %s59 = sshll.u32 [#allocation8], 4
      %s60 = int_to_ptr.vmem [resolvable:$true] %s59
      %65 = dma.hbm_to_vmem [thread:$0]  %s58, 16384, %s60, [#allocation9], 256, 256, 16
    $region17: #{tpu_custom_call.1} parent=1 // pred_fallthru
      _
    // Predicated region
    $region18: #{tpu_custom_call.1} parent=1 // pred_check
      _
    $region19: #{tpu_custom_call.1} parent=1 // pred_check_branch
      %67 = sbr.rel (0) target = $region21
    $region20: #{tpu_custom_call.1} parent=1 // pred_region
      _
    $region21: #{tpu_custom_call.1} parent=1 // pred_fallthru
      _
    // Predicated region
    $region22: #{tpu_custom_call.1} parent=1 // pred_check
      _
    $region23: #{tpu_custom_call.1} parent=1 // pred_check_branch
      %69 = sbr.rel (0) target = $region25
    $region24: #{tpu_custom_call.1} parent=1 // pred_region
      %71 = vsyncadd [#allocation9], 0
      %s72 = sshll.u32 %s5, 4
      %s73 = int_to_ptr.hbm [resolvable:$true] %s72
      %s74 = sshll.u32 [#allocation10], 4
      %s75 = int_to_ptr.vmem [resolvable:$true] %s74
      %80 = dma.hbm_to_vmem [thread:$0]  %s73, 4096, %s75, [#allocation9], 128, 128, 8
    $region25: #{tpu_custom_call.1} parent=1 // pred_fallthru
      _
    // Predicated region
    $region26: #{tpu_custom_call.1} parent=1 // pred_check
      _
    $region27: #{tpu_custom_call.1} parent=1 // pred_check_branch
      %82 = sbr.rel (0) target = $region29
    $region28: #{tpu_custom_call.1} parent=1 // pred_region
      _
    $region29: #{tpu_custom_call.1} parent=1 // pred_fallthru
      _
    // Predicated region
    $region30: #{tpu_custom_call.1} parent=1 // pred_check
      _
    $region31: #{tpu_custom_call.1} parent=1 // pred_check_branch
      %84 = sbr.rel (0) target = $region33
    $region32: #{tpu_custom_call.1} parent=1 // pred_region
      %86 = dma.done [#allocation3], 2048
    $region33: #{tpu_custom_call.1} parent=1 // pred_fallthru
      _
    // Predicated region
    $region34: #{tpu_custom_call.1} parent=1 // pred_check
      _
    $region35: #{tpu_custom_call.1} parent=1 // pred_check_branch
      %88 = sbr.rel (0) target = $region37
    $region36: #{tpu_custom_call.1} parent=1 // pred_region
      %90 = dma.done [#allocation6], 8192
    $region37: #{tpu_custom_call.1} parent=1 // pred_fallthru
      _
    // Predicated region
    $region38: #{tpu_custom_call.1} parent=1 // pred_check
      _
    $region39: #{tpu_custom_call.1} parent=1 // pred_check_branch
      %92 = sbr.rel (0) target = $region41
    $region40: #{tpu_custom_call.1} parent=1 // pred_region
      %94 = dma.done [#allocation6], 64
    $region41: #{tpu_custom_call.1} parent=1 // pred_fallthru
      _
    // Predicated region
    $region42: #{tpu_custom_call.1} parent=1 // pred_check
      _
    $region43: #{tpu_custom_call.1} parent=1 // pred_check_branch
      %96 = sbr.rel (0) target = $region45
    $region44: #{tpu_custom_call.1} parent=1 // pred_region
      %98 = dma.done [#allocation9], 16384
    $region45: #{tpu_custom_call.1} parent=1 // pred_fallthru
      _
    // Predicated region
    $region46: #{tpu_custom_call.1} parent=1 // pred_check
      _
    $region47: #{tpu_custom_call.1} parent=1 // pred_check_branch
      %100 = sbr.rel (0) target = $region49
    $region48: #{tpu_custom_call.1} parent=1 // pred_region
      %102 = dma.done [#allocation9], 4096
    $region49: #{tpu_custom_call.1} parent=1 // pred_fallthru
      _
    %v103 = vld [vmem:[#allocation2] sm:$0xff]
    %v104 = vld [vmem:[#allocation2 + $0x8] sm:$0xff]
    %v105 = vld [vmem:[#allocation2 + $0x10] sm:$0xff]
    %v106 = vld [vmem:[#allocation2 + $0x18] sm:$0xff]
    %v107 = vld [vmem:[#allocation2 + $0x20] sm:$0xff]
    %v108 = vld [vmem:[#allocation2 + $0x28] sm:$0xff]
    %v109 = vld [vmem:[#allocation2 + $0x30] sm:$0xff]
    %v110 = vld [vmem:[#allocation2 + $0x38] sm:$0xff]
    %v111 = vld [vmem:[#allocation2 + $0x40] sm:$0xff]
    %v112 = vld [vmem:[#allocation2 + $0x48] sm:$0xff]
    %v113 = vld [vmem:[#allocation2 + $0x50] sm:$0xff]
    %v114 = vld [vmem:[#allocation2 + $0x58] sm:$0xff]
    %v115 = vld [vmem:[#allocation2 + $0x60] sm:$0xff]
    %v116 = vld [vmem:[#allocation2 + $0x68] sm:$0xff]
    %v117 = vld [vmem:[#allocation2 + $0x70] sm:$0xff]
    %v118 = vld [vmem:[#allocation2 + $0x78] sm:$0xff]
    %v119 = vld [vmem:[#allocation5] sm:$0xff]
    %v120 = vld [vmem:[#allocation5 + $0x8] sm:$0xff]
    %v121 = vld [vmem:[#allocation5 + $0x10] sm:$0xff]
    %v122 = vld [vmem:[#allocation5 + $0x18] sm:$0xff]
    %v123 = vld [vmem:[#allocation5 + $0x20] sm:$0xff]
    %v124 = vld [vmem:[#allocation5 + $0x28] sm:$0xff]
    %v125 = vld [vmem:[#allocation5 + $0x30] sm:$0xff]
    %v126 = vld [vmem:[#allocation5 + $0x38] sm:$0xff]
    %v127 = vld [vmem:[#allocation5 + $0x40] sm:$0xff]
    %v128 = vld [vmem:[#allocation5 + $0x48] sm:$0xff]
    %v129 = vld [vmem:[#allocation5 + $0x50] sm:$0xff]
    %v130 = vld [vmem:[#allocation5 + $0x58] sm:$0xff]
    %v131 = vld [vmem:[#allocation5 + $0x60] sm:$0xff]
    %v132 = vld [vmem:[#allocation5 + $0x68] sm:$0xff]
    %v133 = vld [vmem:[#allocation5 + $0x70] sm:$0xff]
    %v134 = vld [vmem:[#allocation5 + $0x78] sm:$0xff]
    %v135 = vld [vmem:[#allocation5 + $0x80] sm:$0xff]
    %v136 = vld [vmem:[#allocation5 + $0x88] sm:$0xff]
    %v137 = vld [vmem:[#allocation5 + $0x90] sm:$0xff]
    %v138 = vld [vmem:[#allocation5 + $0x98] sm:$0xff]
    %v139 = vld [vmem:[#allocation5 + $0xa0] sm:$0xff]
    %v140 = vld [vmem:[#allocation5 + $0xa8] sm:$0xff]
    %v141 = vld [vmem:[#allocation5 + $0xb0] sm:$0xff]
    %v142 = vld [vmem:[#allocation5 + $0xb8] sm:$0xff]
    %v143 = vld [vmem:[#allocation5 + $0xc0] sm:$0xff]
    %v144 = vld [vmem:[#allocation5 + $0xc8] sm:$0xff]
    %v145 = vld [vmem:[#allocation5 + $0xd0] sm:$0xff]
    %v146 = vld [vmem:[#allocation5 + $0xd8] sm:$0xff]
    %v147 = vld [vmem:[#allocation5 + $0xe0] sm:$0xff]
    %v148 = vld [vmem:[#allocation5 + $0xe8] sm:$0xff]
    %v149 = vld [vmem:[#allocation5 + $0xf0] sm:$0xff]
    %v150 = vld [vmem:[#allocation5 + $0xf8] sm:$0xff]
    %v151 = vld [vmem:[#allocation5 + $0x100] sm:$0xff]
    %v152 = vld [vmem:[#allocation5 + $0x108] sm:$0xff]
    %v153 = vld [vmem:[#allocation5 + $0x110] sm:$0xff]
    %v154 = vld [vmem:[#allocation5 + $0x118] sm:$0xff]
    %v155 = vld [vmem:[#allocation5 + $0x120] sm:$0xff]
    %v156 = vld [vmem:[#allocation5 + $0x128] sm:$0xff]
    %v157 = vld [vmem:[#allocation5 + $0x130] sm:$0xff]
    %v158 = vld [vmem:[#allocation5 + $0x138] sm:$0xff]
    %v159 = vld [vmem:[#allocation5 + $0x140] sm:$0xff]
    %v160 = vld [vmem:[#allocation5 + $0x148] sm:$0xff]
    %v161 = vld [vmem:[#allocation5 + $0x150] sm:$0xff]
    %v162 = vld [vmem:[#allocation5 + $0x158] sm:$0xff]
    %v163 = vld [vmem:[#allocation5 + $0x160] sm:$0xff]
    %v164 = vld [vmem:[#allocation5 + $0x168] sm:$0xff]
    %v165 = vld [vmem:[#allocation5 + $0x170] sm:$0xff]
    %v166 = vld [vmem:[#allocation5 + $0x178] sm:$0xff]
    %v167 = vld [vmem:[#allocation5 + $0x180] sm:$0xff]
    %v168 = vld [vmem:[#allocation5 + $0x188] sm:$0xff]
    %v169 = vld [vmem:[#allocation5 + $0x190] sm:$0xff]
    %v170 = vld [vmem:[#allocation5 + $0x198] sm:$0xff]
    %v171 = vld [vmem:[#allocation5 + $0x1a0] sm:$0xff]
    %v172 = vld [vmem:[#allocation5 + $0x1a8] sm:$0xff]
    %v173 = vld [vmem:[#allocation5 + $0x1b0] sm:$0xff]
    %v174 = vld [vmem:[#allocation5 + $0x1b8] sm:$0xff]
    %v175 = vld [vmem:[#allocation5 + $0x1c0] sm:$0xff]
    %v176 = vld [vmem:[#allocation5 + $0x1c8] sm:$0xff]
    %v177 = vld [vmem:[#allocation5 + $0x1d0] sm:$0xff]
    %v178 = vld [vmem:[#allocation5 + $0x1d8] sm:$0xff]
    %v179 = vld [vmem:[#allocation5 + $0x1e0] sm:$0xff]
    %v180 = vld [vmem:[#allocation5 + $0x1e8] sm:$0xff]
    %v181 = vld [vmem:[#allocation5 + $0x1f0] sm:$0xff]
    %v182 = vld [vmem:[#allocation5 + $0x1f8] sm:$0xff]
    %v183 = vld [vmem:[#allocation7] sm:$0xf]
    %v185 = vperm.slane %v183, 0
    %v186 = vperm.slane %v183, 1
    %v187 = vperm.slane %v183, 2
    %v188 = vperm.slane %v183, 3
    %193 = vmatpush.msra.mxu0 %v179
    %194 = vmatpush.msra.mxu0 %v175
    %195 = vmatpush.msra.mxu0 %v171
    %196 = vmatpush.msra.mxu0 %v167
    %197 = vmatpush.msra.mxu0 %v163
    %198 = vmatpush.msra.mxu0 %v159
    %199 = vmatpush.msra.mxu0 %v155
    %200 = vmatpush.msra.mxu0 %v151
    %201 = vmatpush.msra.mxu0 %v147
    %202 = vmatpush.msra.mxu0 %v143
    %203 = vmatpush.msra.mxu0 %v139
    %204 = vmatpush.msra.mxu0 %v135
    %205 = vmatpush.msra.mxu0 %v131
    %206 = vmatpush.msra.mxu0 %v127
    %207 = vmatpush.msra.mxu0 %v123
    %208 = vmatpush.msra.mxu0 %v119
    %209 = vmatmul.f32.gmra.mxu0 %v103
    %v210 = vpop.f32.mrf.mxu0
    %v211 = vadd.f32 %v185, %v210
    %212 = vmatmul.f32.gmra.mxu0 %v104
    %v213 = vpop.f32.mrf.mxu0
    %v214 = vadd.f32 %v185, %v213
    %215 = vmatmul.f32.gmra.mxu0 %v105
    %v216 = vpop.f32.mrf.mxu0
    %v217 = vadd.f32 %v185, %v216
    %218 = vmatmul.f32.gmra.mxu0 %v106
    %v219 = vpop.f32.mrf.mxu0
    %v220 = vadd.f32 %v185, %v219
    %221 = vmatmul.f32.gmra.mxu0 %v107
    %v222 = vpop.f32.mrf.mxu0
    %v223 = vadd.f32 %v185, %v222
    %224 = vmatmul.f32.gmra.mxu0 %v108
    %v225 = vpop.f32.mrf.mxu0
    %v226 = vadd.f32 %v185, %v225
    %227 = vmatmul.f32.gmra.mxu0 %v109
    %v228 = vpop.f32.mrf.mxu0
    %v229 = vadd.f32 %v185, %v228
    %230 = vmatmul.f32.gmra.mxu0 %v110
    %v231 = vpop.f32.mrf.mxu0
    %v232 = vadd.f32 %v185, %v231
    %233 = vmatmul.f32.gmra.mxu0 %v111
    %v234 = vpop.f32.mrf.mxu0
    %v235 = vadd.f32 %v185, %v234
    %236 = vmatmul.f32.gmra.mxu0 %v112
    %v237 = vpop.f32.mrf.mxu0
    %v238 = vadd.f32 %v185, %v237
    %239 = vmatmul.f32.gmra.mxu0 %v113
    %v240 = vpop.f32.mrf.mxu0
    %v241 = vadd.f32 %v185, %v240
    %242 = vmatmul.f32.gmra.mxu0 %v114
    %v243 = vpop.f32.mrf.mxu0
    %v244 = vadd.f32 %v185, %v243
    %245 = vmatmul.f32.gmra.mxu0 %v115
    %v246 = vpop.f32.mrf.mxu0
    %v247 = vadd.f32 %v185, %v246
    %248 = vmatmul.f32.gmra.mxu0 %v116
    %v249 = vpop.f32.mrf.mxu0
    %v250 = vadd.f32 %v185, %v249
    %251 = vmatmul.f32.gmra.mxu0 %v117
    %v252 = vpop.f32.mrf.mxu0
    %v253 = vadd.f32 %v185, %v252
    %254 = vmatmul.f32.gmra.mxu0 %v118
    %v255 = vpop.f32.mrf.mxu0
    %v256 = vadd.f32 %v185, %v255
    %257 = vdwg.mxu0
    %258 = vmatpush.msra.mxu0 %v180
    %259 = vmatpush.msra.mxu0 %v176
    %260 = vmatpush.msra.mxu0 %v172
    %261 = vmatpush.msra.mxu0 %v168
    %262 = vmatpush.msra.mxu0 %v164
    %263 = vmatpush.msra.mxu0 %v160
    %264 = vmatpush.msra.mxu0 %v156
    %265 = vmatpush.msra.mxu0 %v152
    %266 = vmatpush.msra.mxu0 %v148
    %267 = vmatpush.msra.mxu0 %v144
    %268 = vmatpush.msra.mxu0 %v140
    %269 = vmatpush.msra.mxu0 %v136
    %270 = vmatpush.msra.mxu0 %v132
    %271 = vmatpush.msra.mxu0 %v128
    %272 = vmatpush.msra.mxu0 %v124
    %273 = vmatpush.msra.mxu0 %v120
    %274 = vmatmul.f32.gmra.mxu0 %v103
    %v275 = vpop.f32.mrf.mxu0
    %v276 = vadd.f32 %v186, %v275
    %277 = vmatmul.f32.gmra.mxu0 %v104
    %v278 = vpop.f32.mrf.mxu0
    %v279 = vadd.f32 %v186, %v278
    %280 = vmatmul.f32.gmra.mxu0 %v105
    %v281 = vpop.f32.mrf.mxu0
    %v282 = vadd.f32 %v186, %v281
    %283 = vmatmul.f32.gmra.mxu0 %v106
    %v284 = vpop.f32.mrf.mxu0
    %v285 = vadd.f32 %v186, %v284
    %286 = vmatmul.f32.gmra.mxu0 %v107
    %v287 = vpop.f32.mrf.mxu0
    %v288 = vadd.f32 %v186, %v287
    %289 = vmatmul.f32.gmra.mxu0 %v108
    %v290 = vpop.f32.mrf.mxu0
    %v291 = vadd.f32 %v186, %v290
    %292 = vmatmul.f32.gmra.mxu0 %v109
    %v293 = vpop.f32.mrf.mxu0
    %v294 = vadd.f32 %v186, %v293
    %295 = vmatmul.f32.gmra.mxu0 %v110
    %v296 = vpop.f32.mrf.mxu0
    %v297 = vadd.f32 %v186, %v296
    %298 = vmatmul.f32.gmra.mxu0 %v111
    %v299 = vpop.f32.mrf.mxu0
    %v300 = vadd.f32 %v186, %v299
    %301 = vmatmul.f32.gmra.mxu0 %v112
    %v302 = vpop.f32.mrf.mxu0
    %v303 = vadd.f32 %v186, %v302
    %304 = vmatmul.f32.gmra.mxu0 %v113
    %v305 = vpop.f32.mrf.mxu0
    %v306 = vadd.f32 %v186, %v305
    %307 = vmatmul.f32.gmra.mxu0 %v114
    %v308 = vpop.f32.mrf.mxu0
    %v309 = vadd.f32 %v186, %v308
    %310 = vmatmul.f32.gmra.mxu0 %v115
    %v311 = vpop.f32.mrf.mxu0
    %v312 = vadd.f32 %v186, %v311
    %313 = vmatmul.f32.gmra.mxu0 %v116
    %v314 = vpop.f32.mrf.mxu0
    %v315 = vadd.f32 %v186, %v314
    %316 = vmatmul.f32.gmra.mxu0 %v117
    %v317 = vpop.f32.mrf.mxu0
    %v318 = vadd.f32 %v186, %v317
    %319 = vmatmul.f32.gmra.mxu0 %v118
    %v320 = vpop.f32.mrf.mxu0
    %v321 = vadd.f32 %v186, %v320
    %322 = vdwg.mxu0
    %323 = vmatpush.msra.mxu0 %v181
    %324 = vmatpush.msra.mxu0 %v177
    %325 = vmatpush.msra.mxu0 %v173
    %326 = vmatpush.msra.mxu0 %v169
    %327 = vmatpush.msra.mxu0 %v165
    %328 = vmatpush.msra.mxu0 %v161
    %329 = vmatpush.msra.mxu0 %v157
    %330 = vmatpush.msra.mxu0 %v153
    %331 = vmatpush.msra.mxu0 %v149
    %332 = vmatpush.msra.mxu0 %v145
    %333 = vmatpush.msra.mxu0 %v141
    %334 = vmatpush.msra.mxu0 %v137
    %335 = vmatpush.msra.mxu0 %v133
    %336 = vmatpush.msra.mxu0 %v129
    %337 = vmatpush.msra.mxu0 %v125
    %338 = vmatpush.msra.mxu0 %v121
    %339 = vmatmul.f32.gmra.mxu0 %v103
    %v340 = vpop.f32.mrf.mxu0
    %v341 = vadd.f32 %v187, %v340
    %342 = vmatmul.f32.gmra.mxu0 %v104
    %v343 = vpop.f32.mrf.mxu0
    %v344 = vadd.f32 %v187, %v343
    %345 = vmatmul.f32.gmra.mxu0 %v105
    %v346 = vpop.f32.mrf.mxu0
    %v347 = vadd.f32 %v187, %v346
    %348 = vmatmul.f32.gmra.mxu0 %v106
    %v349 = vpop.f32.mrf.mxu0
    %v350 = vadd.f32 %v187, %v349
    %351 = vmatmul.f32.gmra.mxu0 %v107
    %v352 = vpop.f32.mrf.mxu0
    %v353 = vadd.f32 %v187, %v352
    %354 = vmatmul.f32.gmra.mxu0 %v108
    %v355 = vpop.f32.mrf.mxu0
    %v356 = vadd.f32 %v187, %v355
    %357 = vmatmul.f32.gmra.mxu0 %v109
    %v358 = vpop.f32.mrf.mxu0
    %v359 = vadd.f32 %v187, %v358
    %360 = vmatmul.f32.gmra.mxu0 %v110
    %v361 = vpop.f32.mrf.mxu0
    %v362 = vadd.f32 %v187, %v361
    %363 = vmatmul.f32.gmra.mxu0 %v111
    %v364 = vpop.f32.mrf.mxu0
    %v365 = vadd.f32 %v187, %v364
    %366 = vmatmul.f32.gmra.mxu0 %v112
    %v367 = vpop.f32.mrf.mxu0
    %v368 = vadd.f32 %v187, %v367
    %369 = vmatmul.f32.gmra.mxu0 %v113
    %v370 = vpop.f32.mrf.mxu0
    %v371 = vadd.f32 %v187, %v370
    %372 = vmatmul.f32.gmra.mxu0 %v114
    %v373 = vpop.f32.mrf.mxu0
    %v374 = vadd.f32 %v187, %v373
    %375 = vmatmul.f32.gmra.mxu0 %v115
    %v376 = vpop.f32.mrf.mxu0
    %v377 = vadd.f32 %v187, %v376
    %378 = vmatmul.f32.gmra.mxu0 %v116
    %v379 = vpop.f32.mrf.mxu0
    %v380 = vadd.f32 %v187, %v379
    %381 = vmatmul.f32.gmra.mxu0 %v117
    %v382 = vpop.f32.mrf.mxu0
    %v383 = vadd.f32 %v187, %v382
    %384 = vmatmul.f32.gmra.mxu0 %v118
    %v385 = vpop.f32.mrf.mxu0
    %v386 = vadd.f32 %v187, %v385
    %387 = vdwg.mxu0
    %388 = vmatpush.msra.mxu0 %v182
    %389 = vmatpush.msra.mxu0 %v178
    %390 = vmatpush.msra.mxu0 %v174
    %391 = vmatpush.msra.mxu0 %v170
    %392 = vmatpush.msra.mxu0 %v166
    %393 = vmatpush.msra.mxu0 %v162
    %394 = vmatpush.msra.mxu0 %v158
    %395 = vmatpush.msra.mxu0 %v154
    %396 = vmatpush.msra.mxu0 %v150
    %397 = vmatpush.msra.mxu0 %v146
    %398 = vmatpush.msra.mxu0 %v142
    %399 = vmatpush.msra.mxu0 %v138
    %400 = vmatpush.msra.mxu0 %v134
    %401 = vmatpush.msra.mxu0 %v130
    %402 = vmatpush.msra.mxu0 %v126
    %403 = vmatpush.msra.mxu0 %v122
    %404 = vmatmul.f32.gmra.mxu0 %v103
    %v405 = vpop.f32.mrf.mxu0
    %v406 = vadd.f32 %v188, %v405
    %407 = vmatmul.f32.gmra.mxu0 %v104
    %v408 = vpop.f32.mrf.mxu0
    %v409 = vadd.f32 %v188, %v408
    %410 = vmatmul.f32.gmra.mxu0 %v105
    %v411 = vpop.f32.mrf.mxu0
    %v412 = vadd.f32 %v188, %v411
    %413 = vmatmul.f32.gmra.mxu0 %v106
    %v414 = vpop.f32.mrf.mxu0
    %v415 = vadd.f32 %v188, %v414
    %416 = vmatmul.f32.gmra.mxu0 %v107
    %v417 = vpop.f32.mrf.mxu0
    %v418 = vadd.f32 %v188, %v417
    %419 = vmatmul.f32.gmra.mxu0 %v108
    %v420 = vpop.f32.mrf.mxu0
    %v421 = vadd.f32 %v188, %v420
    %422 = vmatmul.f32.gmra.mxu0 %v109
    %v423 = vpop.f32.mrf.mxu0
    %v424 = vadd.f32 %v188, %v423
    %425 = vmatmul.f32.gmra.mxu0 %v110
    %v426 = vpop.f32.mrf.mxu0
    %v427 = vadd.f32 %v188, %v426
    %428 = vmatmul.f32.gmra.mxu0 %v111
    %v429 = vpop.f32.mrf.mxu0
    %v430 = vadd.f32 %v188, %v429
    %431 = vmatmul.f32.gmra.mxu0 %v112
    %v432 = vpop.f32.mrf.mxu0
    %v433 = vadd.f32 %v188, %v432
    %434 = vmatmul.f32.gmra.mxu0 %v113
    %v435 = vpop.f32.mrf.mxu0
    %v436 = vadd.f32 %v188, %v435
    %437 = vmatmul.f32.gmra.mxu0 %v114
    %v438 = vpop.f32.mrf.mxu0
    %v439 = vadd.f32 %v188, %v438
    %440 = vmatmul.f32.gmra.mxu0 %v115
    %v441 = vpop.f32.mrf.mxu0
    %v442 = vadd.f32 %v188, %v441
    %443 = vmatmul.f32.gmra.mxu0 %v116
    %v444 = vpop.f32.mrf.mxu0
    %v445 = vadd.f32 %v188, %v444
    %446 = vmatmul.f32.gmra.mxu0 %v117
    %v447 = vpop.f32.mrf.mxu0
    %v448 = vadd.f32 %v188, %v447
    %449 = vmatmul.f32.gmra.mxu0 %v118
    %v450 = vpop.f32.mrf.mxu0
    %v451 = vadd.f32 %v188, %v450
    %452 = vdwg.mxu0
    %v453 = vmul.f32 %v211, 0.70710677
    %v454 = vmul.f32 %v276, 0.70710677
    %v455 = vmul.f32 %v341, 0.70710677
    %v456 = vmul.f32 %v406, 0.70710677
    %v457 = vmul.f32 %v214, 0.70710677
    %v458 = vmul.f32 %v279, 0.70710677
    %v459 = vmul.f32 %v344, 0.70710677
    %v460 = vmul.f32 %v409, 0.70710677
    %v461 = vmul.f32 %v217, 0.70710677
    %v462 = vmul.f32 %v282, 0.70710677
    %v463 = vmul.f32 %v347, 0.70710677
    %v464 = vmul.f32 %v412, 0.70710677
    %v465 = vmul.f32 %v220, 0.70710677
    %v466 = vmul.f32 %v285, 0.70710677
    %v467 = vmul.f32 %v350, 0.70710677
    %v468 = vmul.f32 %v415, 0.70710677
    %v469 = vmul.f32 %v223, 0.70710677
    %v470 = vmul.f32 %v288, 0.70710677
    %v471 = vmul.f32 %v353, 0.70710677
    %v472 = vmul.f32 %v418, 0.70710677
    %v473 = vmul.f32 %v226, 0.70710677
    %v474 = vmul.f32 %v291, 0.70710677
    %v475 = vmul.f32 %v356, 0.70710677
    %v476 = vmul.f32 %v421, 0.70710677
    %v477 = vmul.f32 %v229, 0.70710677
    %v478 = vmul.f32 %v294, 0.70710677
    %v479 = vmul.f32 %v359, 0.70710677
    %v480 = vmul.f32 %v424, 0.70710677
    %v481 = vmul.f32 %v232, 0.70710677
    %v482 = vmul.f32 %v297, 0.70710677
    %v483 = vmul.f32 %v362, 0.70710677
    %v484 = vmul.f32 %v427, 0.70710677
    %v485 = vmul.f32 %v235, 0.70710677
    %v486 = vmul.f32 %v300, 0.70710677
    %v487 = vmul.f32 %v365, 0.70710677
    %v488 = vmul.f32 %v430, 0.70710677
    %v489 = vmul.f32 %v238, 0.70710677
    %v490 = vmul.f32 %v303, 0.70710677
    %v491 = vmul.f32 %v368, 0.70710677
    %v492 = vmul.f32 %v433, 0.70710677
    %v493 = vmul.f32 %v241, 0.70710677
    %v494 = vmul.f32 %v306, 0.70710677
    %v495 = vmul.f32 %v371, 0.70710677
    %v496 = vmul.f32 %v436, 0.70710677
    %v497 = vmul.f32 %v244, 0.70710677
    %v498 = vmul.f32 %v309, 0.70710677
    %v499 = vmul.f32 %v374, 0.70710677
    %v500 = vmul.f32 %v439, 0.70710677
    %v501 = vmul.f32 %v247, 0.70710677
    %v502 = vmul.f32 %v312, 0.70710677
    %v503 = vmul.f32 %v377, 0.70710677
    %v504 = vmul.f32 %v442, 0.70710677
    %v505 = vmul.f32 %v250, 0.70710677
    %v506 = vmul.f32 %v315, 0.70710677
    %v507 = vmul.f32 %v380, 0.70710677
    %v508 = vmul.f32 %v445, 0.70710677
    %v509 = vmul.f32 %v253, 0.70710677
    %v510 = vmul.f32 %v318, 0.70710677
    %v511 = vmul.f32 %v383, 0.70710677
    %v512 = vmul.f32 %v448, 0.70710677
    %v513 = vmul.f32 %v256, 0.70710677
    %v514 = vmul.f32 %v321, 0.70710677
    %v515 = vmul.f32 %v386, 0.70710677
    %v516 = vmul.f32 %v451, 0.70710677
    %v517 = vmax.f32 %v453, -4.0
    %v518 = vmax.f32 %v454, -4.0
    %v519 = vmax.f32 %v455, -4.0
    %v520 = vmax.f32 %v456, -4.0
    %v521 = vmax.f32 %v457, -4.0
    %v522 = vmax.f32 %v458, -4.0
    %v523 = vmax.f32 %v459, -4.0
    %v524 = vmax.f32 %v460, -4.0
    %v525 = vmax.f32 %v461, -4.0
    %v526 = vmax.f32 %v462, -4.0
    %v527 = vmax.f32 %v463, -4.0
    %v528 = vmax.f32 %v464, -4.0
    %v529 = vmax.f32 %v465, -4.0
    %v530 = vmax.f32 %v466, -4.0
    %v531 = vmax.f32 %v467, -4.0
    %v532 = vmax.f32 %v468, -4.0
    %v533 = vmax.f32 %v469, -4.0
    %v534 = vmax.f32 %v470, -4.0
    %v535 = vmax.f32 %v471, -4.0
    %v536 = vmax.f32 %v472, -4.0
    %v537 = vmax.f32 %v473, -4.0
    %v538 = vmax.f32 %v474, -4.0
    %v539 = vmax.f32 %v475, -4.0
    %v540 = vmax.f32 %v476, -4.0
    %v541 = vmax.f32 %v477, -4.0
    %v542 = vmax.f32 %v478, -4.0
    %v543 = vmax.f32 %v479, -4.0
    %v544 = vmax.f32 %v480, -4.0
    %v545 = vmax.f32 %v481, -4.0
    %v546 = vmax.f32 %v482, -4.0
    %v547 = vmax.f32 %v483, -4.0
    %v548 = vmax.f32 %v484, -4.0
    %v549 = vmax.f32 %v485, -4.0
    %v550 = vmax.f32 %v486, -4.0
    %v551 = vmax.f32 %v487, -4.0
    %v552 = vmax.f32 %v488, -4.0
    %v553 = vmax.f32 %v489, -4.0
    %v554 = vmax.f32 %v490, -4.0
    %v555 = vmax.f32 %v491, -4.0
    %v556 = vmax.f32 %v492, -4.0
    %v557 = vmax.f32 %v493, -4.0
    %v558 = vmax.f32 %v494, -4.0
    %v559 = vmax.f32 %v495, -4.0
    %v560 = vmax.f32 %v496, -4.0
    %v561 = vmax.f32 %v497, -4.0
    %v562 = vmax.f32 %v498, -4.0
    %v563 = vmax.f32 %v499, -4.0
    %v564 = vmax.f32 %v500, -4.0
    %v565 = vmax.f32 %v501, -4.0
    %v566 = vmax.f32 %v502, -4.0
    %v567 = vmax.f32 %v503, -4.0
    %v568 = vmax.f32 %v504, -4.0
    %v569 = vmax.f32 %v505, -4.0
    %v570 = vmax.f32 %v506, -4.0
    %v571 = vmax.f32 %v507, -4.0
    %v572 = vmax.f32 %v508, -4.0
    %v573 = vmax.f32 %v509, -4.0
    %v574 = vmax.f32 %v510, -4.0
    %v575 = vmax.f32 %v511, -4.0
    %v576 = vmax.f32 %v512, -4.0
    %v577 = vmax.f32 %v513, -4.0
    %v578 = vmax.f32 %v514, -4.0
    %v579 = vmax.f32 %v515, -4.0
    %v580 = vmax.f32 %v516, -4.0
    %v581 = vmin.f32 %v517, 4.0
    %v582 = vmin.f32 %v518, 4.0
    %v583 = vmin.f32 %v519, 4.0
    %v584 = vmin.f32 %v520, 4.0
    %v585 = vmin.f32 %v521, 4.0
    %v586 = vmin.f32 %v522, 4.0
    %v587 = vmin.f32 %v523, 4.0
    %v588 = vmin.f32 %v524, 4.0
    %v589 = vmin.f32 %v525, 4.0
    %v590 = vmin.f32 %v526, 4.0
    %v591 = vmin.f32 %v527, 4.0
    %v592 = vmin.f32 %v528, 4.0
    %v593 = vmin.f32 %v529, 4.0
    %v594 = vmin.f32 %v530, 4.0
    %v595 = vmin.f32 %v531, 4.0
    %v596 = vmin.f32 %v532, 4.0
    %v597 = vmin.f32 %v533, 4.0
    %v598 = vmin.f32 %v534, 4.0
    %v599 = vmin.f32 %v535, 4.0
    %v600 = vmin.f32 %v536, 4.0
    %v601 = vmin.f32 %v537, 4.0
    %v602 = vmin.f32 %v538, 4.0
    %v603 = vmin.f32 %v539, 4.0
    %v604 = vmin.f32 %v540, 4.0
    %v605 = vmin.f32 %v541, 4.0
    %v606 = vmin.f32 %v542, 4.0
    %v607 = vmin.f32 %v543, 4.0
    %v608 = vmin.f32 %v544, 4.0
    %v609 = vmin.f32 %v545, 4.0
    %v610 = vmin.f32 %v546, 4.0
    %v611 = vmin.f32 %v547, 4.0
    %v612 = vmin.f32 %v548, 4.0
    %v613 = vmin.f32 %v549, 4.0
    %v614 = vmin.f32 %v550, 4.0
    %v615 = vmin.f32 %v551, 4.0
    %v616 = vmin.f32 %v552, 4.0
    %v617 = vmin.f32 %v553, 4.0
    %v618 = vmin.f32 %v554, 4.0
    %v619 = vmin.f32 %v555, 4.0
    %v620 = vmin.f32 %v556, 4.0
    %v621 = vmin.f32 %v557, 4.0
    %v622 = vmin.f32 %v558, 4.0
    %v623 = vmin.f32 %v559, 4.0
    %v624 = vmin.f32 %v560, 4.0
    %v625 = vmin.f32 %v561, 4.0
    %v626 = vmin.f32 %v562, 4.0
    %v627 = vmin.f32 %v563, 4.0
    %v628 = vmin.f32 %v564, 4.0
    %v629 = vmin.f32 %v565, 4.0
    %v630 = vmin.f32 %v566, 4.0
    %v631 = vmin.f32 %v567, 4.0
    %v632 = vmin.f32 %v568, 4.0
    %v633 = vmin.f32 %v569, 4.0
    %v634 = vmin.f32 %v570, 4.0
    %v635 = vmin.f32 %v571, 4.0
    %v636 = vmin.f32 %v572, 4.0
    %v637 = vmin.f32 %v573, 4.0
    %v638 = vmin.f32 %v574, 4.0
    %v639 = vmin.f32 %v575, 4.0
    %v640 = vmin.f32 %v576, 4.0
    %v641 = vmin.f32 %v577, 4.0
    %v642 = vmin.f32 %v578, 4.0
    %v643 = vmin.f32 %v579, 4.0
    %v644 = vmin.f32 %v580, 4.0
    %v645 = vmul.f32 %v581, %v581
    %v646 = vmul.f32 %v582, %v582
    %v647 = vmul.f32 %v583, %v583
    %v648 = vmul.f32 %v584, %v584
    %v649 = vmul.f32 %v585, %v585
    %v650 = vmul.f32 %v586, %v586
    %v651 = vmul.f32 %v587, %v587
    %v652 = vmul.f32 %v588, %v588
    %v653 = vmul.f32 %v589, %v589
    %v654 = vmul.f32 %v590, %v590
    %v655 = vmul.f32 %v591, %v591
    %v656 = vmul.f32 %v592, %v592
    %v657 = vmul.f32 %v593, %v593
    %v658 = vmul.f32 %v594, %v594
    %v659 = vmul.f32 %v595, %v595
    %v660 = vmul.f32 %v596, %v596
    %v661 = vmul.f32 %v597, %v597
    %v662 = vmul.f32 %v598, %v598
    %v663 = vmul.f32 %v599, %v599
    %v664 = vmul.f32 %v600, %v600
    %v665 = vmul.f32 %v601, %v601
    %v666 = vmul.f32 %v602, %v602
    %v667 = vmul.f32 %v603, %v603
    %v668 = vmul.f32 %v604, %v604
    %v669 = vmul.f32 %v605, %v605
    %v670 = vmul.f32 %v606, %v606
    %v671 = vmul.f32 %v607, %v607
    %v672 = vmul.f32 %v608, %v608
    %v673 = vmul.f32 %v609, %v609
    %v674 = vmul.f32 %v610, %v610
    %v675 = vmul.f32 %v611, %v611
    %v676 = vmul.f32 %v612, %v612
    %v677 = vmul.f32 %v613, %v613
    %v678 = vmul.f32 %v614, %v614
    %v679 = vmul.f32 %v615, %v615
    %v680 = vmul.f32 %v616, %v616
    %v681 = vmul.f32 %v617, %v617
    %v682 = vmul.f32 %v618, %v618
    %v683 = vmul.f32 %v619, %v619
    %v684 = vmul.f32 %v620, %v620
    %v685 = vmul.f32 %v621, %v621
    %v686 = vmul.f32 %v622, %v622
    %v687 = vmul.f32 %v623, %v623
    %v688 = vmul.f32 %v624, %v624
    %v689 = vmul.f32 %v625, %v625
    %v690 = vmul.f32 %v626, %v626
    %v691 = vmul.f32 %v627, %v627
    %v692 = vmul.f32 %v628, %v628
    %v693 = vmul.f32 %v629, %v629
    %v694 = vmul.f32 %v630, %v630
    %v695 = vmul.f32 %v631, %v631
    %v696 = vmul.f32 %v632, %v632
    %v697 = vmul.f32 %v633, %v633
    %v698 = vmul.f32 %v634, %v634
    %v699 = vmul.f32 %v635, %v635
    %v700 = vmul.f32 %v636, %v636
    %v701 = vmul.f32 %v637, %v637
    %v702 = vmul.f32 %v638, %v638
    %v703 = vmul.f32 %v639, %v639
    %v704 = vmul.f32 %v640, %v640
    %v705 = vmul.f32 %v641, %v641
    %v706 = vmul.f32 %v642, %v642
    %v707 = vmul.f32 %v643, %v643
    %v708 = vmul.f32 %v644, %v644
    %v709 = vmul.f32 %v645, -2.7261424e-10
    %v710 = vmul.f32 %v646, -2.7261424e-10
    %v711 = vmul.f32 %v647, -2.7261424e-10
    %v712 = vmul.f32 %v648, -2.7261424e-10
    %v713 = vmul.f32 %v649, -2.7261424e-10
    %v714 = vmul.f32 %v650, -2.7261424e-10
    %v715 = vmul.f32 %v651, -2.7261424e-10
    %v716 = vmul.f32 %v652, -2.7261424e-10
    %v717 = vmul.f32 %v653, -2.7261424e-10
    %v718 = vmul.f32 %v654, -2.7261424e-10
    %v719 = vmul.f32 %v655, -2.7261424e-10
    %v720 = vmul.f32 %v656, -2.7261424e-10
    %v721 = vmul.f32 %v657, -2.7261424e-10
    %v722 = vmul.f32 %v658, -2.7261424e-10
    %v723 = vmul.f32 %v659, -2.7261424e-10
    %v724 = vmul.f32 %v660, -2.7261424e-10
    %v725 = vmul.f32 %v661, -2.7261424e-10
    %v726 = vmul.f32 %v662, -2.7261424e-10
    %v727 = vmul.f32 %v663, -2.7261424e-10
    %v728 = vmul.f32 %v664, -2.7261424e-10
    %v729 = vmul.f32 %v665, -2.7261424e-10
    %v730 = vmul.f32 %v666, -2.7261424e-10
    %v731 = vmul.f32 %v667, -2.7261424e-10
    %v732 = vmul.f32 %v668, -2.7261424e-10
    %v733 = vmul.f32 %v669, -2.7261424e-10
    %v734 = vmul.f32 %v670, -2.7261424e-10
    %v735 = vmul.f32 %v671, -2.7261424e-10
    %v736 = vmul.f32 %v672, -2.7261424e-10
    %v737 = vmul.f32 %v673, -2.7261424e-10
    %v738 = vmul.f32 %v674, -2.7261424e-10
    %v739 = vmul.f32 %v675, -2.7261424e-10
    %v740 = vmul.f32 %v676, -2.7261424e-10
    %v741 = vmul.f32 %v677, -2.7261424e-10
    %v742 = vmul.f32 %v678, -2.7261424e-10
    %v743 = vmul.f32 %v679, -2.7261424e-10
    %v744 = vmul.f32 %v680, -2.7261424e-10
    %v745 = vmul.f32 %v681, -2.7261424e-10
    %v746 = vmul.f32 %v682, -2.7261424e-10
    %v747 = vmul.f32 %v683, -2.7261424e-10
    %v748 = vmul.f32 %v684, -2.7261424e-10
    %v749 = vmul.f32 %v685, -2.7261424e-10
    %v750 = vmul.f32 %v686, -2.7261424e-10
    %v751 = vmul.f32 %v687, -2.7261424e-10
    %v752 = vmul.f32 %v688, -2.7261424e-10
    %v753 = vmul.f32 %v689, -2.7261424e-10
    %v754 = vmul.f32 %v690, -2.7261424e-10
    %v755 = vmul.f32 %v691, -2.7261424e-10
    %v756 = vmul.f32 %v692, -2.7261424e-10
    %v757 = vmul.f32 %v693, -2.7261424e-10
    %v758 = vmul.f32 %v694, -2.7261424e-10
    %v759 = vmul.f32 %v695, -2.7261424e-10
    %v760 = vmul.f32 %v696, -2.7261424e-10
    %v761 = vmul.f32 %v697, -2.7261424e-10
    %v762 = vmul.f32 %v698, -2.7261424e-10
    %v763 = vmul.f32 %v699, -2.7261424e-10
    %v764 = vmul.f32 %v700, -2.7261424e-10
    %v765 = vmul.f32 %v701, -2.7261424e-10
    %v766 = vmul.f32 %v702, -2.7261424e-10
    %v767 = vmul.f32 %v703, -2.7261424e-10
    %v768 = vmul.f32 %v704, -2.7261424e-10
    %v769 = vmul.f32 %v705, -2.7261424e-10
    %v770 = vmul.f32 %v706, -2.7261424e-10
    %v771 = vmul.f32 %v707, -2.7261424e-10
    %v772 = vmul.f32 %v708, -2.7261424e-10
    %v773 = vadd.f32 %v709, 2.7706815e-08
    %v774 = vadd.f32 %v710, 2.7706815e-08
    %v775 = vadd.f32 %v711, 2.7706815e-08
    %v776 = vadd.f32 %v712, 2.7706815e-08
    %v777 = vadd.f32 %v713, 2.7706815e-08
    %v778 = vadd.f32 %v714, 2.7706815e-08
    %v779 = vadd.f32 %v715, 2.7706815e-08
    %v780 = vadd.f32 %v716, 2.7706815e-08
    %v781 = vadd.f32 %v717, 2.7706815e-08
    %v782 = vadd.f32 %v718, 2.7706815e-08
    %v783 = vadd.f32 %v719, 2.7706815e-08
    %v784 = vadd.f32 %v720, 2.7706815e-08
    %v785 = vadd.f32 %v721, 2.7706815e-08
    %v786 = vadd.f32 %v722, 2.7706815e-08
    %v787 = vadd.f32 %v723, 2.7706815e-08
    %v788 = vadd.f32 %v724, 2.7706815e-08
    %v789 = vadd.f32 %v725, 2.7706815e-08
    %v790 = vadd.f32 %v726, 2.7706815e-08
    %v791 = vadd.f32 %v727, 2.7706815e-08
    %v792 = vadd.f32 %v728, 2.7706815e-08
    %v793 = vadd.f32 %v729, 2.7706815e-08
    %v794 = vadd.f32 %v730, 2.7706815e-08
    %v795 = vadd.f32 %v731, 2.7706815e-08
    %v796 = vadd.f32 %v732, 2.7706815e-08
    %v797 = vadd.f32 %v733, 2.7706815e-08
    %v798 = vadd.f32 %v734, 2.7706815e-08
    %v799 = vadd.f32 %v735, 2.7706815e-08
    %v800 = vadd.f32 %v736, 2.7706815e-08
    %v801 = vadd.f32 %v737, 2.7706815e-08
    %v802 = vadd.f32 %v738, 2.7706815e-08
    %v803 = vadd.f32 %v739, 2.7706815e-08
    %v804 = vadd.f32 %v740, 2.7706815e-08
    %v805 = vadd.f32 %v741, 2.7706815e-08
    %v806 = vadd.f32 %v742, 2.7706815e-08
    %v807 = vadd.f32 %v743, 2.7706815e-08
    %v808 = vadd.f32 %v744, 2.7706815e-08
    %v809 = vadd.f32 %v745, 2.7706815e-08
    %v810 = vadd.f32 %v746, 2.7706815e-08
    %v811 = vadd.f32 %v747, 2.7706815e-08
    %v812 = vadd.f32 %v748, 2.7706815e-08
    %v813 = vadd.f32 %v749, 2.7706815e-08
    %v814 = vadd.f32 %v750, 2.7706815e-08
    %v815 = vadd.f32 %v751, 2.7706815e-08
    %v816 = vadd.f32 %v752, 2.7706815e-08
    %v817 = vadd.f32 %v753, 2.7706815e-08
    %v818 = vadd.f32 %v754, 2.7706815e-08
    %v819 = vadd.f32 %v755, 2.7706815e-08
    %v820 = vadd.f32 %v756, 2.7706815e-08
    %v821 = vadd.f32 %v757, 2.7706815e-08
    %v822 = vadd.f32 %v758, 2.7706815e-08
    %v823 = vadd.f32 %v759, 2.7706815e-08
    %v824 = vadd.f32 %v760, 2.7706815e-08
    %v825 = vadd.f32 %v761, 2.7706815e-08
    %v826 = vadd.f32 %v762, 2.7706815e-08
    %v827 = vadd.f32 %v763, 2.7706815e-08
    %v828 = vadd.f32 %v764, 2.7706815e-08
    %v829 = vadd.f32 %v765, 2.7706815e-08
    %v830 = vadd.f32 %v766, 2.7706815e-08
    %v831 = vadd.f32 %v767, 2.7706815e-08
    %v832 = vadd.f32 %v768, 2.7706815e-08
    %v833 = vadd.f32 %v769, 2.7706815e-08
    %v834 = vadd.f32 %v770, 2.7706815e-08
    %v835 = vadd.f32 %v771, 2.7706815e-08
    %v836 = vadd.f32 %v772, 2.7706815e-08
    %v837 = vmul.f32 %v773, %v645
    %v838 = vmul.f32 %v774, %v646
    %v839 = vmul.f32 %v775, %v647
    %v840 = vmul.f32 %v776, %v648
    %v841 = vmul.f32 %v777, %v649
    %v842 = vmul.f32 %v778, %v650
    %v843 = vmul.f32 %v779, %v651
    %v844 = vmul.f32 %v780, %v652
    %v845 = vmul.f32 %v781, %v653
    %v846 = vmul.f32 %v782, %v654
    %v847 = vmul.f32 %v783, %v655
    %v848 = vmul.f32 %v784, %v656
    %v849 = vmul.f32 %v785, %v657
    %v850 = vmul.f32 %v786, %v658
    %v851 = vmul.f32 %v787, %v659
    %v852 = vmul.f32 %v788, %v660
    %v853 = vmul.f32 %v789, %v661
    %v854 = vmul.f32 %v790, %v662
    %v855 = vmul.f32 %v791, %v663
    %v856 = vmul.f32 %v792, %v664
    %v857 = vmul.f32 %v793, %v665
    %v858 = vmul.f32 %v794, %v666
    %v859 = vmul.f32 %v795, %v667
    %v860 = vmul.f32 %v796, %v668
    %v861 = vmul.f32 %v797, %v669
    %v862 = vmul.f32 %v798, %v670
    %v863 = vmul.f32 %v799, %v671
    %v864 = vmul.f32 %v800, %v672
    %v865 = vmul.f32 %v801, %v673
    %v866 = vmul.f32 %v802, %v674
    %v867 = vmul.f32 %v803, %v675
    %v868 = vmul.f32 %v804, %v676
    %v869 = vmul.f32 %v805, %v677
    %v870 = vmul.f32 %v806, %v678
    %v871 = vmul.f32 %v807, %v679
    %v872 = vmul.f32 %v808, %v680
    %v873 = vmul.f32 %v809, %v681
    %v874 = vmul.f32 %v810, %v682
    %v875 = vmul.f32 %v811, %v683
    %v876 = vmul.f32 %v812, %v684
    %v877 = vmul.f32 %v813, %v685
    %v878 = vmul.f32 %v814, %v686
    %v879 = vmul.f32 %v815, %v687
    %v880 = vmul.f32 %v816, %v688
    %v881 = vmul.f32 %v817, %v689
    %v882 = vmul.f32 %v818, %v690
    %v883 = vmul.f32 %v819, %v691
    %v884 = vmul.f32 %v820, %v692
    %v885 = vmul.f32 %v821, %v693
    %v886 = vmul.f32 %v822, %v694
    %v887 = vmul.f32 %v823, %v695
    %v888 = vmul.f32 %v824, %v696
    %v889 = vmul.f32 %v825, %v697
    %v890 = vmul.f32 %v826, %v698
    %v891 = vmul.f32 %v827, %v699
    %v892 = vmul.f32 %v828, %v700
    %v893 = vmul.f32 %v829, %v701
    %v894 = vmul.f32 %v830, %v702
    %v895 = vmul.f32 %v831, %v703
    %v896 = vmul.f32 %v832, %v704
    %v897 = vmul.f32 %v833, %v705
    %v898 = vmul.f32 %v834, %v706
    %v899 = vmul.f32 %v835, %v707
    %v900 = vmul.f32 %v836, %v708
    %v901 = vadd.f32 %v837, -2.101024e-06
    %v902 = vadd.f32 %v838, -2.101024e-06
    %v903 = vadd.f32 %v839, -2.101024e-06
    %v904 = vadd.f32 %v840, -2.101024e-06
    %v905 = vadd.f32 %v841, -2.101024e-06
    %v906 = vadd.f32 %v842, -2.101024e-06
    %v907 = vadd.f32 %v843, -2.101024e-06
    %v908 = vadd.f32 %v844, -2.101024e-06
    %v909 = vadd.f32 %v845, -2.101024e-06
    %v910 = vadd.f32 %v846, -2.101024e-06
    %v911 = vadd.f32 %v847, -2.101024e-06
    %v912 = vadd.f32 %v848, -2.101024e-06
    %v913 = vadd.f32 %v849, -2.101024e-06
    %v914 = vadd.f32 %v850, -2.101024e-06
    %v915 = vadd.f32 %v851, -2.101024e-06
    %v916 = vadd.f32 %v852, -2.101024e-06
    %v917 = vadd.f32 %v853, -2.101024e-06
    %v918 = vadd.f32 %v854, -2.101024e-06
    %v919 = vadd.f32 %v855, -2.101024e-06
    %v920 = vadd.f32 %v856, -2.101024e-06
    %v921 = vadd.f32 %v857, -2.101024e-06
    %v922 = vadd.f32 %v858, -2.101024e-06
    %v923 = vadd.f32 %v859, -2.101024e-06
    %v924 = vadd.f32 %v860, -2.101024e-06
    %v925 = vadd.f32 %v861, -2.101024e-06
    %v926 = vadd.f32 %v862, -2.101024e-06
    %v927 = vadd.f32 %v863, -2.101024e-06
    %v928 = vadd.f32 %v864, -2.101024e-06
    %v929 = vadd.f32 %v865, -2.101024e-06
    %v930 = vadd.f32 %v866, -2.101024e-06
    %v931 = vadd.f32 %v867, -2.101024e-06
    %v932 = vadd.f32 %v868, -2.101024e-06
    %v933 = vadd.f32 %v869, -2.101024e-06
    %v934 = vadd.f32 %v870, -2.101024e-06
    %v935 = vadd.f32 %v871, -2.101024e-06
    %v936 = vadd.f32 %v872, -2.101024e-06
    %v937 = vadd.f32 %v873, -2.101024e-06
    %v938 = vadd.f32 %v874, -2.101024e-06
    %v939 = vadd.f32 %v875, -2.101024e-06
    %v940 = vadd.f32 %v876, -2.101024e-06
    %v941 = vadd.f32 %v877, -2.101024e-06
    %v942 = vadd.f32 %v878, -2.101024e-06
    %v943 = vadd.f32 %v879, -2.101024e-06
    %v944 = vadd.f32 %v880, -2.101024e-06
    %v945 = vadd.f32 %v881, -2.101024e-06
    %v946 = vadd.f32 %v882, -2.101024e-06
    %v947 = vadd.f32 %v883, -2.101024e-06
    %v948 = vadd.f32 %v884, -2.101024e-06
    %v949 = vadd.f32 %v885, -2.101024e-06
    %v950 = vadd.f32 %v886, -2.101024e-06
    %v951 = vadd.f32 %v887, -2.101024e-06
    %v952 = vadd.f32 %v888, -2.101024e-06
    %v953 = vadd.f32 %v889, -2.101024e-06
    %v954 = vadd.f32 %v890, -2.101024e-06
    %v955 = vadd.f32 %v891, -2.101024e-06
    %v956 = vadd.f32 %v892, -2.101024e-06
    %v957 = vadd.f32 %v893, -2.101024e-06
    %v958 = vadd.f32 %v894, -2.101024e-06
    %v959 = vadd.f32 %v895, -2.101024e-06
    %v960 = vadd.f32 %v896, -2.101024e-06
    %v961 = vadd.f32 %v897, -2.101024e-06
    %v962 = vadd.f32 %v898, -2.101024e-06
    %v963 = vadd.f32 %v899, -2.101024e-06
    %v964 = vadd.f32 %v900, -2.101024e-06
    %v965 = vmul.f32 %v901, %v645
    %v966 = vmul.f32 %v902, %v646
    %v967 = vmul.f32 %v903, %v647
    %v968 = vmul.f32 %v904, %v648
    %v969 = vmul.f32 %v905, %v649
    %v970 = vmul.f32 %v906, %v650
    %v971 = vmul.f32 %v907, %v651
    %v972 = vmul.f32 %v908, %v652
    %v973 = vmul.f32 %v909, %v653
    %v974 = vmul.f32 %v910, %v654
    %v975 = vmul.f32 %v911, %v655
    %v976 = vmul.f32 %v912, %v656
    %v977 = vmul.f32 %v913, %v657
    %v978 = vmul.f32 %v914, %v658
    %v979 = vmul.f32 %v915, %v659
    %v980 = vmul.f32 %v916, %v660
    %v981 = vmul.f32 %v917, %v661
    %v982 = vmul.f32 %v918, %v662
    %v983 = vmul.f32 %v919, %v663
    %v984 = vmul.f32 %v920, %v664
    %v985 = vmul.f32 %v921, %v665
    %v986 = vmul.f32 %v922, %v666
    %v987 = vmul.f32 %v923, %v667
    %v988 = vmul.f32 %v924, %v668
    %v989 = vmul.f32 %v925, %v669
    %v990 = vmul.f32 %v926, %v670
    %v991 = vmul.f32 %v927, %v671
    %v992 = vmul.f32 %v928, %v672
    %v993 = vmul.f32 %v929, %v673
    %v994 = vmul.f32 %v930, %v674
    %v995 = vmul.f32 %v931, %v675
    %v996 = vmul.f32 %v932, %v676
    %v997 = vmul.f32 %v933, %v677
    %v998 = vmul.f32 %v934, %v678
    %v999 = vmul.f32 %v935, %v679
    %v1000 = vmul.f32 %v936, %v680
    %v1001 = vmul.f32 %v937, %v681
    %v1002 = vmul.f32 %v938, %v682
    %v1003 = vmul.f32 %v939, %v683
    %v1004 = vmul.f32 %v940, %v684
    %v1005 = vmul.f32 %v941, %v685
    %v1006 = vmul.f32 %v942, %v686
    %v1007 = vmul.f32 %v943, %v687
    %v1008 = vmul.f32 %v944, %v688
    %v1009 = vmul.f32 %v945, %v689
    %v1010 = vmul.f32 %v946, %v690
    %v1011 = vmul.f32 %v947, %v691
    %v1012 = vmul.f32 %v948, %v692
    %v1013 = vmul.f32 %v949, %v693
    %v1014 = vmul.f32 %v950, %v694
    %v1015 = vmul.f32 %v951, %v695
    %v1016 = vmul.f32 %v952, %v696
    %v1017 = vmul.f32 %v953, %v697
    %v1018 = vmul.f32 %v954, %v698
    %v1019 = vmul.f32 %v955, %v699
    %v1020 = vmul.f32 %v956, %v700
    %v1021 = vmul.f32 %v957, %v701
    %v1022 = vmul.f32 %v958, %v702
    %v1023 = vmul.f32 %v959, %v703
    %v1024 = vmul.f32 %v960, %v704
    %v1025 = vmul.f32 %v961, %v705
    %v1026 = vmul.f32 %v962, %v706
    %v1027 = vmul.f32 %v963, %v707
    %v1028 = vmul.f32 %v964, %v708
    %v1029 = vadd.f32 %v965, -5.6925062e-05
    %v1030 = vadd.f32 %v966, -5.6925062e-05
    %v1031 = vadd.f32 %v967, -5.6925062e-05
    %v1032 = vadd.f32 %v968, -5.6925062e-05
    %v1033 = vadd.f32 %v969, -5.6925062e-05
    %v1034 = vadd.f32 %v970, -5.6925062e-05
    %v1035 = vadd.f32 %v971, -5.6925062e-05
    %v1036 = vadd.f32 %v972, -5.6925062e-05
    %v1037 = vadd.f32 %v973, -5.6925062e-05
    %v1038 = vadd.f32 %v974, -5.6925062e-05
    %v1039 = vadd.f32 %v975, -5.6925062e-05
    %v1040 = vadd.f32 %v976, -5.6925062e-05
    %v1041 = vadd.f32 %v977, -5.6925062e-05
    %v1042 = vadd.f32 %v978, -5.6925062e-05
    %v1043 = vadd.f32 %v979, -5.6925062e-05
    %v1044 = vadd.f32 %v980, -5.6925062e-05
    %v1045 = vadd.f32 %v981, -5.6925062e-05
    %v1046 = vadd.f32 %v982, -5.6925062e-05
    %v1047 = vadd.f32 %v983, -5.6925062e-05
    %v1048 = vadd.f32 %v984, -5.6925062e-05
    %v1049 = vadd.f32 %v985, -5.6925062e-05
    %v1050 = vadd.f32 %v986, -5.6925062e-05
    %v1051 = vadd.f32 %v987, -5.6925062e-05
    %v1052 = vadd.f32 %v988, -5.6925062e-05
    %v1053 = vadd.f32 %v989, -5.6925062e-05
    %v1054 = vadd.f32 %v990, -5.6925062e-05
    %v1055 = vadd.f32 %v991, -5.6925062e-05
    %v1056 = vadd.f32 %v992, -5.6925062e-05
    %v1057 = vadd.f32 %v993, -5.6925062e-05
    %v1058 = vadd.f32 %v994, -5.6925062e-05
    %v1059 = vadd.f32 %v995, -5.6925062e-05
    %v1060 = vadd.f32 %v996, -5.6925062e-05
    %v1061 = vadd.f32 %v997, -5.6925062e-05
    %v1062 = vadd.f32 %v998, -5.6925062e-05
    %v1063 = vadd.f32 %v999, -5.6925062e-05
    %v1064 = vadd.f32 %v1000, -5.6925062e-05
    %v1065 = vadd.f32 %v1001, -5.6925062e-05
    %v1066 = vadd.f32 %v1002, -5.6925062e-05
    %v1067 = vadd.f32 %v1003, -5.6925062e-05
    %v1068 = vadd.f32 %v1004, -5.6925062e-05
    %v1069 = vadd.f32 %v1005, -5.6925062e-05
    %v1070 = vadd.f32 %v1006, -5.6925062e-05
    %v1071 = vadd.f32 %v1007, -5.6925062e-05
    %v1072 = vadd.f32 %v1008, -5.6925062e-05
    %v1073 = vadd.f32 %v1009, -5.6925062e-05
    %v1074 = vadd.f32 %v1010, -5.6925062e-05
    %v1075 = vadd.f32 %v1011, -5.6925062e-05
    %v1076 = vadd.f32 %v1012, -5.6925062e-05
    %v1077 = vadd.f32 %v1013, -5.6925062e-05
    %v1078 = vadd.f32 %v1014, -5.6925062e-05
    %v1079 = vadd.f32 %v1015, -5.6925062e-05
    %v1080 = vadd.f32 %v1016, -5.6925062e-05
    %v1081 = vadd.f32 %v1017, -5.6925062e-05
    %v1082 = vadd.f32 %v1018, -5.6925062e-05
    %v1083 = vadd.f32 %v1019, -5.6925062e-05
    %v1084 = vadd.f32 %v1020, -5.6925062e-05
    %v1085 = vadd.f32 %v1021, -5.6925062e-05
    %v1086 = vadd.f32 %v1022, -5.6925062e-05
    %v1087 = vadd.f32 %v1023, -5.6925062e-05
    %v1088 = vadd.f32 %v1024, -5.6925062e-05
    %v1089 = vadd.f32 %v1025, -5.6925062e-05
    %v1090 = vadd.f32 %v1026, -5.6925062e-05
    %v1091 = vadd.f32 %v1027, -5.6925062e-05
    %v1092 = vadd.f32 %v1028, -5.6925062e-05
    %v1093 = vmul.f32 %v1029, %v645
    %v1094 = vmul.f32 %v1030, %v646
    %v1095 = vmul.f32 %v1031, %v647
    %v1096 = vmul.f32 %v1032, %v648
    %v1097 = vmul.f32 %v1033, %v649
    %v1098 = vmul.f32 %v1034, %v650
    %v1099 = vmul.f32 %v1035, %v651
    %v1100 = vmul.f32 %v1036, %v652
    %v1101 = vmul.f32 %v1037, %v653
    %v1102 = vmul.f32 %v1038, %v654
    %v1103 = vmul.f32 %v1039, %v655
    %v1104 = vmul.f32 %v1040, %v656
    %v1105 = vmul.f32 %v1041, %v657
    %v1106 = vmul.f32 %v1042, %v658
    %v1107 = vmul.f32 %v1043, %v659
    %v1108 = vmul.f32 %v1044, %v660
    %v1109 = vmul.f32 %v1045, %v661
    %v1110 = vmul.f32 %v1046, %v662
    %v1111 = vmul.f32 %v1047, %v663
    %v1112 = vmul.f32 %v1048, %v664
    %v1113 = vmul.f32 %v1049, %v665
    %v1114 = vmul.f32 %v1050, %v666
    %v1115 = vmul.f32 %v1051, %v667
    %v1116 = vmul.f32 %v1052, %v668
    %v1117 = vmul.f32 %v1053, %v669
    %v1118 = vmul.f32 %v1054, %v670
    %v1119 = vmul.f32 %v1055, %v671
    %v1120 = vmul.f32 %v1056, %v672
    %v1121 = vmul.f32 %v1057, %v673
    %v1122 = vmul.f32 %v1058, %v674
    %v1123 = vmul.f32 %v1059, %v675
    %v1124 = vmul.f32 %v1060, %v676
    %v1125 = vmul.f32 %v1061, %v677
    %v1126 = vmul.f32 %v1062, %v678
    %v1127 = vmul.f32 %v1063, %v679
    %v1128 = vmul.f32 %v1064, %v680
    %v1129 = vmul.f32 %v1065, %v681
    %v1130 = vmul.f32 %v1066, %v682
    %v1131 = vmul.f32 %v1067, %v683
    %v1132 = vmul.f32 %v1068, %v684
    %v1133 = vmul.f32 %v1069, %v685
    %v1134 = vmul.f32 %v1070, %v686
    %v1135 = vmul.f32 %v1071, %v687
    %v1136 = vmul.f32 %v1072, %v688
    %v1137 = vmul.f32 %v1073, %v689
    %v1138 = vmul.f32 %v1074, %v690
    %v1139 = vmul.f32 %v1075, %v691
    %v1140 = vmul.f32 %v1076, %v692
    %v1141 = vmul.f32 %v1077, %v693
    %v1142 = vmul.f32 %v1078, %v694
    %v1143 = vmul.f32 %v1079, %v695
    %v1144 = vmul.f32 %v1080, %v696
    %v1145 = vmul.f32 %v1081, %v697
    %v1146 = vmul.f32 %v1082, %v698
    %v1147 = vmul.f32 %v1083, %v699
    %v1148 = vmul.f32 %v1084, %v700
    %v1149 = vmul.f32 %v1085, %v701
    %v1150 = vmul.f32 %v1086, %v702
    %v1151 = vmul.f32 %v1087, %v703
    %v1152 = vmul.f32 %v1088, %v704
    %v1153 = vmul.f32 %v1089, %v705
    %v1154 = vmul.f32 %v1090, %v706
    %v1155 = vmul.f32 %v1091, %v707
    %v1156 = vmul.f32 %v1092, %v708
    %v1157 = vadd.f32 %v1093, -0.00073499064
    %v1158 = vadd.f32 %v1094, -0.00073499064
    %v1159 = vadd.f32 %v1095, -0.00073499064
    %v1160 = vadd.f32 %v1096, -0.00073499064
    %v1161 = vadd.f32 %v1097, -0.00073499064
    %v1162 = vadd.f32 %v1098, -0.00073499064
    %v1163 = vadd.f32 %v1099, -0.00073499064
    %v1164 = vadd.f32 %v1100, -0.00073499064
    %v1165 = vadd.f32 %v1101, -0.00073499064
    %v1166 = vadd.f32 %v1102, -0.00073499064
    %v1167 = vadd.f32 %v1103, -0.00073499064
    %v1168 = vadd.f32 %v1104, -0.00073499064
    %v1169 = vadd.f32 %v1105, -0.00073499064
    %v1170 = vadd.f32 %v1106, -0.00073499064
    %v1171 = vadd.f32 %v1107, -0.00073499064
    %v1172 = vadd.f32 %v1108, -0.00073499064
    %v1173 = vadd.f32 %v1109, -0.00073499064
    %v1174 = vadd.f32 %v1110, -0.00073499064
    %v1175 = vadd.f32 %v1111, -0.00073499064
    %v1176 = vadd.f32 %v1112, -0.00073499064
    %v1177 = vadd.f32 %v1113, -0.00073499064
    %v1178 = vadd.f32 %v1114, -0.00073499064
    %v1179 = vadd.f32 %v1115, -0.00073499064
    %v1180 = vadd.f32 %v1116, -0.00073499064
    %v1181 = vadd.f32 %v1117, -0.00073499064
    %v1182 = vadd.f32 %v1118, -0.00073499064
    %v1183 = vadd.f32 %v1119, -0.00073499064
    %v1184 = vadd.f32 %v1120, -0.00073499064
    %v1185 = vadd.f32 %v1121, -0.00073499064
    %v1186 = vadd.f32 %v1122, -0.00073499064
    %v1187 = vadd.f32 %v1123, -0.00073499064
    %v1188 = vadd.f32 %v1124, -0.00073499064
    %v1189 = vadd.f32 %v1125, -0.00073499064
    %v1190 = vadd.f32 %v1126, -0.00073499064
    %v1191 = vadd.f32 %v1127, -0.00073499064
    %v1192 = vadd.f32 %v1128, -0.00073499064
    %v1193 = vadd.f32 %v1129, -0.00073499064
    %v1194 = vadd.f32 %v1130, -0.00073499064
    %v1195 = vadd.f32 %v1131, -0.00073499064
    %v1196 = vadd.f32 %v1132, -0.00073499064
    %v1197 = vadd.f32 %v1133, -0.00073499064
    %v1198 = vadd.f32 %v1134, -0.00073499064
    %v1199 = vadd.f32 %v1135, -0.00073499064
    %v1200 = vadd.f32 %v1136, -0.00073499064
    %v1201 = vadd.f32 %v1137, -0.00073499064
    %v1202 = vadd.f32 %v1138, -0.00073499064
    %v1203 = vadd.f32 %v1139, -0.00073499064
    %v1204 = vadd.f32 %v1140, -0.00073499064
    %v1205 = vadd.f32 %v1141, -0.00073499064
    %v1206 = vadd.f32 %v1142, -0.00073499064
    %v1207 = vadd.f32 %v1143, -0.00073499064
    %v1208 = vadd.f32 %v1144, -0.00073499064
    %v1209 = vadd.f32 %v1145, -0.00073499064
    %v1210 = vadd.f32 %v1146, -0.00073499064
    %v1211 = vadd.f32 %v1147, -0.00073499064
    %v1212 = vadd.f32 %v1148, -0.00073499064
    %v1213 = vadd.f32 %v1149, -0.00073499064
    %v1214 = vadd.f32 %v1150, -0.00073499064
    %v1215 = vadd.f32 %v1151, -0.00073499064
    %v1216 = vadd.f32 %v1152, -0.00073499064
    %v1217 = vadd.f32 %v1153, -0.00073499064
    %v1218 = vadd.f32 %v1154, -0.00073499064
    %v1219 = vadd.f32 %v1155, -0.00073499064
    %v1220 = vadd.f32 %v1156, -0.00073499064
    %v1221 = vmul.f32 %v1157, %v645
    %v1222 = vmul.f32 %v1158, %v646
    %v1223 = vmul.f32 %v1159, %v647
    %v1224 = vmul.f32 %v1160, %v648
    %v1225 = vmul.f32 %v1161, %v649
    %v1226 = vmul.f32 %v1162, %v650
    %v1227 = vmul.f32 %v1163, %v651
    %v1228 = vmul.f32 %v1164, %v652
    %v1229 = vmul.f32 %v1165, %v653
    %v1230 = vmul.f32 %v1166, %v654
    %v1231 = vmul.f32 %v1167, %v655
    %v1232 = vmul.f32 %v1168, %v656
    %v1233 = vmul.f32 %v1169, %v657
    %v1234 = vmul.f32 %v1170, %v658
    %v1235 = vmul.f32 %v1171, %v659
    %v1236 = vmul.f32 %v1172, %v660
    %v1237 = vmul.f32 %v1173, %v661
    %v1238 = vmul.f32 %v1174, %v662
    %v1239 = vmul.f32 %v1175, %v663
    %v1240 = vmul.f32 %v1176, %v664
    %v1241 = vmul.f32 %v1177, %v665
    %v1242 = vmul.f32 %v1178, %v666
    %v1243 = vmul.f32 %v1179, %v667
    %v1244 = vmul.f32 %v1180, %v668
    %v1245 = vmul.f32 %v1181, %v669
    %v1246 = vmul.f32 %v1182, %v670
    %v1247 = vmul.f32 %v1183, %v671
    %v1248 = vmul.f32 %v1184, %v672
    %v1249 = vmul.f32 %v1185, %v673
    %v1250 = vmul.f32 %v1186, %v674
    %v1251 = vmul.f32 %v1187, %v675
    %v1252 = vmul.f32 %v1188, %v676
    %v1253 = vmul.f32 %v1189, %v677
    %v1254 = vmul.f32 %v1190, %v678
    %v1255 = vmul.f32 %v1191, %v679
    %v1256 = vmul.f32 %v1192, %v680
    %v1257 = vmul.f32 %v1193, %v681
    %v1258 = vmul.f32 %v1194, %v682
    %v1259 = vmul.f32 %v1195, %v683
    %v1260 = vmul.f32 %v1196, %v684
    %v1261 = vmul.f32 %v1197, %v685
    %v1262 = vmul.f32 %v1198, %v686
    %v1263 = vmul.f32 %v1199, %v687
    %v1264 = vmul.f32 %v1200, %v688
    %v1265 = vmul.f32 %v1201, %v689
    %v1266 = vmul.f32 %v1202, %v690
    %v1267 = vmul.f32 %v1203, %v691
    %v1268 = vmul.f32 %v1204, %v692
    %v1269 = vmul.f32 %v1205, %v693
    %v1270 = vmul.f32 %v1206, %v694
    %v1271 = vmul.f32 %v1207, %v695
    %v1272 = vmul.f32 %v1208, %v696
    %v1273 = vmul.f32 %v1209, %v697
    %v1274 = vmul.f32 %v1210, %v698
    %v1275 = vmul.f32 %v1211, %v699
    %v1276 = vmul.f32 %v1212, %v700
    %v1277 = vmul.f32 %v1213, %v701
    %v1278 = vmul.f32 %v1214, %v702
    %v1279 = vmul.f32 %v1215, %v703
    %v1280 = vmul.f32 %v1216, %v704
    %v1281 = vmul.f32 %v1217, %v705
    %v1282 = vmul.f32 %v1218, %v706
    %v1283 = vmul.f32 %v1219, %v707
    %v1284 = vmul.f32 %v1220, %v708
    %v1285 = vadd.f32 %v1221, -0.029545998
    %v1286 = vadd.f32 %v1222, -0.029545998
    %v1287 = vadd.f32 %v1223, -0.029545998
    %v1288 = vadd.f32 %v1224, -0.029545998
    %v1289 = vadd.f32 %v1225, -0.029545998
    %v1290 = vadd.f32 %v1226, -0.029545998
    %v1291 = vadd.f32 %v1227, -0.029545998
    %v1292 = vadd.f32 %v1228, -0.029545998
    %v1293 = vadd.f32 %v1229, -0.029545998
    %v1294 = vadd.f32 %v1230, -0.029545998
    %v1295 = vadd.f32 %v1231, -0.029545998
    %v1296 = vadd.f32 %v1232, -0.029545998
    %v1297 = vadd.f32 %v1233, -0.029545998
    %v1298 = vadd.f32 %v1234, -0.029545998
    %v1299 = vadd.f32 %v1235, -0.029545998
    %v1300 = vadd.f32 %v1236, -0.029545998
    %v1301 = vadd.f32 %v1237, -0.029545998
    %v1302 = vadd.f32 %v1238, -0.029545998
    %v1303 = vadd.f32 %v1239, -0.029545998
    %v1304 = vadd.f32 %v1240, -0.029545998
    %v1305 = vadd.f32 %v1241, -0.029545998
    %v1306 = vadd.f32 %v1242, -0.029545998
    %v1307 = vadd.f32 %v1243, -0.029545998
    %v1308 = vadd.f32 %v1244, -0.029545998
    %v1309 = vadd.f32 %v1245, -0.029545998
    %v1310 = vadd.f32 %v1246, -0.029545998
    %v1311 = vadd.f32 %v1247, -0.029545998
    %v1312 = vadd.f32 %v1248, -0.029545998
    %v1313 = vadd.f32 %v1249, -0.029545998
    %v1314 = vadd.f32 %v1250, -0.029545998
    %v1315 = vadd.f32 %v1251, -0.029545998
    %v1316 = vadd.f32 %v1252, -0.029545998
    %v1317 = vadd.f32 %v1253, -0.029545998
    %v1318 = vadd.f32 %v1254, -0.029545998
    %v1319 = vadd.f32 %v1255, -0.029545998
    %v1320 = vadd.f32 %v1256, -0.029545998
    %v1321 = vadd.f32 %v1257, -0.029545998
    %v1322 = vadd.f32 %v1258, -0.029545998
    %v1323 = vadd.f32 %v1259, -0.029545998
    %v1324 = vadd.f32 %v1260, -0.029545998
    %v1325 = vadd.f32 %v1261, -0.029545998
    %v1326 = vadd.f32 %v1262, -0.029545998
    %v1327 = vadd.f32 %v1263, -0.029545998
    %v1328 = vadd.f32 %v1264, -0.029545998
    %v1329 = vadd.f32 %v1265, -0.029545998
    %v1330 = vadd.f32 %v1266, -0.029545998
    %v1331 = vadd.f32 %v1267, -0.029545998
    %v1332 = vadd.f32 %v1268, -0.029545998
    %v1333 = vadd.f32 %v1269, -0.029545998
    %v1334 = vadd.f32 %v1270, -0.029545998
    %v1335 = vadd.f32 %v1271, -0.029545998
    %v1336 = vadd.f32 %v1272, -0.029545998
    %v1337 = vadd.f32 %v1273, -0.029545998
    %v1338 = vadd.f32 %v1274, -0.029545998
    %v1339 = vadd.f32 %v1275, -0.029545998
    %v1340 = vadd.f32 %v1276, -0.029545998
    %v1341 = vadd.f32 %v1277, -0.029545998
    %v1342 = vadd.f32 %v1278, -0.029545998
    %v1343 = vadd.f32 %v1279, -0.029545998
    %v1344 = vadd.f32 %v1280, -0.029545998
    %v1345 = vadd.f32 %v1281, -0.029545998
    %v1346 = vadd.f32 %v1282, -0.029545998
    %v1347 = vadd.f32 %v1283, -0.029545998
    %v1348 = vadd.f32 %v1284, -0.029545998
    %v1349 = vmul.f32 %v1285, %v645
    %v1350 = vmul.f32 %v1286, %v646
    %v1351 = vmul.f32 %v1287, %v647
    %v1352 = vmul.f32 %v1288, %v648
    %v1353 = vmul.f32 %v1289, %v649
    %v1354 = vmul.f32 %v1290, %v650
    %v1355 = vmul.f32 %v1291, %v651
    %v1356 = vmul.f32 %v1292, %v652
    %v1357 = vmul.f32 %v1293, %v653
    %v1358 = vmul.f32 %v1294, %v654
    %v1359 = vmul.f32 %v1295, %v655
    %v1360 = vmul.f32 %v1296, %v656
    %v1361 = vmul.f32 %v1297, %v657
    %v1362 = vmul.f32 %v1298, %v658
    %v1363 = vmul.f32 %v1299, %v659
    %v1364 = vmul.f32 %v1300, %v660
    %v1365 = vmul.f32 %v1301, %v661
    %v1366 = vmul.f32 %v1302, %v662
    %v1367 = vmul.f32 %v1303, %v663
    %v1368 = vmul.f32 %v1304, %v664
    %v1369 = vmul.f32 %v1305, %v665
    %v1370 = vmul.f32 %v1306, %v666
    %v1371 = vmul.f32 %v1307, %v667
    %v1372 = vmul.f32 %v1308, %v668
    %v1373 = vmul.f32 %v1309, %v669
    %v1374 = vmul.f32 %v1310, %v670
    %v1375 = vmul.f32 %v1311, %v671
    %v1376 = vmul.f32 %v1312, %v672
    %v1377 = vmul.f32 %v1313, %v673
    %v1378 = vmul.f32 %v1314, %v674
    %v1379 = vmul.f32 %v1315, %v675
    %v1380 = vmul.f32 %v1316, %v676
    %v1381 = vmul.f32 %v1317, %v677
    %v1382 = vmul.f32 %v1318, %v678
    %v1383 = vmul.f32 %v1319, %v679
    %v1384 = vmul.f32 %v1320, %v680
    %v1385 = vmul.f32 %v1321, %v681
    %v1386 = vmul.f32 %v1322, %v682
    %v1387 = vmul.f32 %v1323, %v683
    %v1388 = vmul.f32 %v1324, %v684
    %v1389 = vmul.f32 %v1325, %v685
    %v1390 = vmul.f32 %v1326, %v686
    %v1391 = vmul.f32 %v1327, %v687
    %v1392 = vmul.f32 %v1328, %v688
    %v1393 = vmul.f32 %v1329, %v689
    %v1394 = vmul.f32 %v1330, %v690
    %v1395 = vmul.f32 %v1331, %v691
    %v1396 = vmul.f32 %v1332, %v692
    %v1397 = vmul.f32 %v1333, %v693
    %v1398 = vmul.f32 %v1334, %v694
    %v1399 = vmul.f32 %v1335, %v695
    %v1400 = vmul.f32 %v1336, %v696
    %v1401 = vmul.f32 %v1337, %v697
    %v1402 = vmul.f32 %v1338, %v698
    %v1403 = vmul.f32 %v1339, %v699
    %v1404 = vmul.f32 %v1340, %v700
    %v1405 = vmul.f32 %v1341, %v701
    %v1406 = vmul.f32 %v1342, %v702
    %v1407 = vmul.f32 %v1343, %v703
    %v1408 = vmul.f32 %v1344, %v704
    %v1409 = vmul.f32 %v1345, %v705
    %v1410 = vmul.f32 %v1346, %v706
    %v1411 = vmul.f32 %v1347, %v707
    %v1412 = vmul.f32 %v1348, %v708
    %v1413 = vadd.f32 %v1349, -0.016096033
    %v1414 = vadd.f32 %v1350, -0.016096033
    %v1415 = vadd.f32 %v1351, -0.016096033
    %v1416 = vadd.f32 %v1352, -0.016096033
    %v1417 = vadd.f32 %v1353, -0.016096033
    %v1418 = vadd.f32 %v1354, -0.016096033
    %v1419 = vadd.f32 %v1355, -0.016096033
    %v1420 = vadd.f32 %v1356, -0.016096033
    %v1421 = vadd.f32 %v1357, -0.016096033
    %v1422 = vadd.f32 %v1358, -0.016096033
    %v1423 = vadd.f32 %v1359, -0.016096033
    %v1424 = vadd.f32 %v1360, -0.016096033
    %v1425 = vadd.f32 %v1361, -0.016096033
    %v1426 = vadd.f32 %v1362, -0.016096033
    %v1427 = vadd.f32 %v1363, -0.016096033
    %v1428 = vadd.f32 %v1364, -0.016096033
    %v1429 = vadd.f32 %v1365, -0.016096033
    %v1430 = vadd.f32 %v1366, -0.016096033
    %v1431 = vadd.f32 %v1367, -0.016096033
    %v1432 = vadd.f32 %v1368, -0.016096033
    %v1433 = vadd.f32 %v1369, -0.016096033
    %v1434 = vadd.f32 %v1370, -0.016096033
    %v1435 = vadd.f32 %v1371, -0.016096033
    %v1436 = vadd.f32 %v1372, -0.016096033
    %v1437 = vadd.f32 %v1373, -0.016096033
    %v1438 = vadd.f32 %v1374, -0.016096033
    %v1439 = vadd.f32 %v1375, -0.016096033
    %v1440 = vadd.f32 %v1376, -0.016096033
    %v1441 = vadd.f32 %v1377, -0.016096033
    %v1442 = vadd.f32 %v1378, -0.016096033
    %v1443 = vadd.f32 %v1379, -0.016096033
    %v1444 = vadd.f32 %v1380, -0.016096033
    %v1445 = vadd.f32 %v1381, -0.016096033
    %v1446 = vadd.f32 %v1382, -0.016096033
    %v1447 = vadd.f32 %v1383, -0.016096033
    %v1448 = vadd.f32 %v1384, -0.016096033
    %v1449 = vadd.f32 %v1385, -0.016096033
    %v1450 = vadd.f32 %v1386, -0.016096033
    %v1451 = vadd.f32 %v1387, -0.016096033
    %v1452 = vadd.f32 %v1388, -0.016096033
    %v1453 = vadd.f32 %v1389, -0.016096033
    %v1454 = vadd.f32 %v1390, -0.016096033
    %v1455 = vadd.f32 %v1391, -0.016096033
    %v1456 = vadd.f32 %v1392, -0.016096033
    %v1457 = vadd.f32 %v1393, -0.016096033
    %v1458 = vadd.f32 %v1394, -0.016096033
    %v1459 = vadd.f32 %v1395, -0.016096033
    %v1460 = vadd.f32 %v1396, -0.016096033
    %v1461 = vadd.f32 %v1397, -0.016096033
    %v1462 = vadd.f32 %v1398, -0.016096033
    %v1463 = vadd.f32 %v1399, -0.016096033
    %v1464 = vadd.f32 %v1400, -0.016096033
    %v1465 = vadd.f32 %v1401, -0.016096033
    %v1466 = vadd.f32 %v1402, -0.016096033
    %v1467 = vadd.f32 %v1403, -0.016096033
    %v1468 = vadd.f32 %v1404, -0.016096033
    %v1469 = vadd.f32 %v1405, -0.016096033
    %v1470 = vadd.f32 %v1406, -0.016096033
    %v1471 = vadd.f32 %v1407, -0.016096033
    %v1472 = vadd.f32 %v1408, -0.016096033
    %v1473 = vadd.f32 %v1409, -0.016096033
    %v1474 = vadd.f32 %v1410, -0.016096033
    %v1475 = vadd.f32 %v1411, -0.016096033
    %v1476 = vadd.f32 %v1412, -0.016096033
    %v1477 = vmul.f32 %v1413, %v581
    %v1478 = vmul.f32 %v1414, %v582
    %v1479 = vmul.f32 %v1415, %v583
    %v1480 = vmul.f32 %v1416, %v584
    %v1481 = vmul.f32 %v1417, %v585
    %v1482 = vmul.f32 %v1418, %v586
    %v1483 = vmul.f32 %v1419, %v587
    %v1484 = vmul.f32 %v1420, %v588
    %v1485 = vmul.f32 %v1421, %v589
    %v1486 = vmul.f32 %v1422, %v590
    %v1487 = vmul.f32 %v1423, %v591
    %v1488 = vmul.f32 %v1424, %v592
    %v1489 = vmul.f32 %v1425, %v593
    %v1490 = vmul.f32 %v1426, %v594
    %v1491 = vmul.f32 %v1427, %v595
    %v1492 = vmul.f32 %v1428, %v596
    %v1493 = vmul.f32 %v1429, %v597
    %v1494 = vmul.f32 %v1430, %v598
    %v1495 = vmul.f32 %v1431, %v599
    %v1496 = vmul.f32 %v1432, %v600
    %v1497 = vmul.f32 %v1433, %v601
    %v1498 = vmul.f32 %v1434, %v602
    %v1499 = vmul.f32 %v1435, %v603
    %v1500 = vmul.f32 %v1436, %v604
    %v1501 = vmul.f32 %v1437, %v605
    %v1502 = vmul.f32 %v1438, %v606
    %v1503 = vmul.f32 %v1439, %v607
    %v1504 = vmul.f32 %v1440, %v608
    %v1505 = vmul.f32 %v1441, %v609
    %v1506 = vmul.f32 %v1442, %v610
    %v1507 = vmul.f32 %v1443, %v611
    %v1508 = vmul.f32 %v1444, %v612
    %v1509 = vmul.f32 %v1445, %v613
    %v1510 = vmul.f32 %v1446, %v614
    %v1511 = vmul.f32 %v1447, %v615
    %v1512 = vmul.f32 %v1448, %v616
    %v1513 = vmul.f32 %v1449, %v617
    %v1514 = vmul.f32 %v1450, %v618
    %v1515 = vmul.f32 %v1451, %v619
    %v1516 = vmul.f32 %v1452, %v620
    %v1517 = vmul.f32 %v1453, %v621
    %v1518 = vmul.f32 %v1454, %v622
    %v1519 = vmul.f32 %v1455, %v623
    %v1520 = vmul.f32 %v1456, %v624
    %v1521 = vmul.f32 %v1457, %v625
    %v1522 = vmul.f32 %v1458, %v626
    %v1523 = vmul.f32 %v1459, %v627
    %v1524 = vmul.f32 %v1460, %v628
    %v1525 = vmul.f32 %v1461, %v629
    %v1526 = vmul.f32 %v1462, %v630
    %v1527 = vmul.f32 %v1463, %v631
    %v1528 = vmul.f32 %v1464, %v632
    %v1529 = vmul.f32 %v1465, %v633
    %v1530 = vmul.f32 %v1466, %v634
    %v1531 = vmul.f32 %v1467, %v635
    %v1532 = vmul.f32 %v1468, %v636
    %v1533 = vmul.f32 %v1469, %v637
    %v1534 = vmul.f32 %v1470, %v638
    %v1535 = vmul.f32 %v1471, %v639
    %v1536 = vmul.f32 %v1472, %v640
    %v1537 = vmul.f32 %v1473, %v641
    %v1538 = vmul.f32 %v1474, %v642
    %v1539 = vmul.f32 %v1475, %v643
    %v1540 = vmul.f32 %v1476, %v644
    %v1541 = vmul.f32 %v645, -1.45660715e-05
    %v1542 = vmul.f32 %v646, -1.45660715e-05
    %v1543 = vmul.f32 %v647, -1.45660715e-05
    %v1544 = vmul.f32 %v648, -1.45660715e-05
    %v1545 = vmul.f32 %v649, -1.45660715e-05
    %v1546 = vmul.f32 %v650, -1.45660715e-05
    %v1547 = vmul.f32 %v651, -1.45660715e-05
    %v1548 = vmul.f32 %v652, -1.45660715e-05
    %v1549 = vmul.f32 %v653, -1.45660715e-05
    %v1550 = vmul.f32 %v654, -1.45660715e-05
    %v1551 = vmul.f32 %v655, -1.45660715e-05
    %v1552 = vmul.f32 %v656, -1.45660715e-05
    %v1553 = vmul.f32 %v657, -1.45660715e-05
    %v1554 = vmul.f32 %v658, -1.45660715e-05
    %v1555 = vmul.f32 %v659, -1.45660715e-05
    %v1556 = vmul.f32 %v660, -1.45660715e-05
    %v1557 = vmul.f32 %v661, -1.45660715e-05
    %v1558 = vmul.f32 %v662, -1.45660715e-05
    %v1559 = vmul.f32 %v663, -1.45660715e-05
    %v1560 = vmul.f32 %v664, -1.45660715e-05
    %v1561 = vmul.f32 %v665, -1.45660715e-05
    %v1562 = vmul.f32 %v666, -1.45660715e-05
    %v1563 = vmul.f32 %v667, -1.45660715e-05
    %v1564 = vmul.f32 %v668, -1.45660715e-05
    %v1565 = vmul.f32 %v669, -1.45660715e-05
    %v1566 = vmul.f32 %v670, -1.45660715e-05
    %v1567 = vmul.f32 %v671, -1.45660715e-05
    %v1568 = vmul.f32 %v672, -1.45660715e-05
    %v1569 = vmul.f32 %v673, -1.45660715e-05
    %v1570 = vmul.f32 %v674, -1.45660715e-05
    %v1571 = vmul.f32 %v675, -1.45660715e-05
    %v1572 = vmul.f32 %v676, -1.45660715e-05
    %v1573 = vmul.f32 %v677, -1.45660715e-05
    %v1574 = vmul.f32 %v678, -1.45660715e-05
    %v1575 = vmul.f32 %v679, -1.45660715e-05
    %v1576 = vmul.f32 %v680, -1.45660715e-05
    %v1577 = vmul.f32 %v681, -1.45660715e-05
    %v1578 = vmul.f32 %v682, -1.45660715e-05
    %v1579 = vmul.f32 %v683, -1.45660715e-05
    %v1580 = vmul.f32 %v684, -1.45660715e-05
    %v1581 = vmul.f32 %v685, -1.45660715e-05
    %v1582 = vmul.f32 %v686, -1.45660715e-05
    %v1583 = vmul.f32 %v687, -1.45660715e-05
    %v1584 = vmul.f32 %v688, -1.45660715e-05
    %v1585 = vmul.f32 %v689, -1.45660715e-05
    %v1586 = vmul.f32 %v690, -1.45660715e-05
    %v1587 = vmul.f32 %v691, -1.45660715e-05
    %v1588 = vmul.f32 %v692, -1.45660715e-05
    %v1589 = vmul.f32 %v693, -1.45660715e-05
    %v1590 = vmul.f32 %v694, -1.45660715e-05
    %v1591 = vmul.f32 %v695, -1.45660715e-05
    %v1592 = vmul.f32 %v696, -1.45660715e-05
    %v1593 = vmul.f32 %v697, -1.45660715e-05
    %v1594 = vmul.f32 %v698, -1.45660715e-05
    %v1595 = vmul.f32 %v699, -1.45660715e-05
    %v1596 = vmul.f32 %v700, -1.45660715e-05
    %v1597 = vmul.f32 %v701, -1.45660715e-05
    %v1598 = vmul.f32 %v702, -1.45660715e-05
    %v1599 = vmul.f32 %v703, -1.45660715e-05
    %v1600 = vmul.f32 %v704, -1.45660715e-05
    %v1601 = vmul.f32 %v705, -1.45660715e-05
    %v1602 = vmul.f32 %v706, -1.45660715e-05
    %v1603 = vmul.f32 %v707, -1.45660715e-05
    %v1604 = vmul.f32 %v708, -1.45660715e-05
    %v1605 = vadd.f32 %v1541, -0.00021337405
    %v1606 = vadd.f32 %v1542, -0.00021337405
    %v1607 = vadd.f32 %v1543, -0.00021337405
    %v1608 = vadd.f32 %v1544, -0.00021337405
    %v1609 = vadd.f32 %v1545, -0.00021337405
    %v1610 = vadd.f32 %v1546, -0.00021337405
    %v1611 = vadd.f32 %v1547, -0.00021337405
    %v1612 = vadd.f32 %v1548, -0.00021337405
    %v1613 = vadd.f32 %v1549, -0.00021337405
    %v1614 = vadd.f32 %v1550, -0.00021337405
    %v1615 = vadd.f32 %v1551, -0.00021337405
    %v1616 = vadd.f32 %v1552, -0.00021337405
    %v1617 = vadd.f32 %v1553, -0.00021337405
    %v1618 = vadd.f32 %v1554, -0.00021337405
    %v1619 = vadd.f32 %v1555, -0.00021337405
    %v1620 = vadd.f32 %v1556, -0.00021337405
    %v1621 = vadd.f32 %v1557, -0.00021337405
    %v1622 = vadd.f32 %v1558, -0.00021337405
    %v1623 = vadd.f32 %v1559, -0.00021337405
    %v1624 = vadd.f32 %v1560, -0.00021337405
    %v1625 = vadd.f32 %v1561, -0.00021337405
    %v1626 = vadd.f32 %v1562, -0.00021337405
    %v1627 = vadd.f32 %v1563, -0.00021337405
    %v1628 = vadd.f32 %v1564, -0.00021337405
    %v1629 = vadd.f32 %v1565, -0.00021337405
    %v1630 = vadd.f32 %v1566, -0.00021337405
    %v1631 = vadd.f32 %v1567, -0.00021337405
    %v1632 = vadd.f32 %v1568, -0.00021337405
    %v1633 = vadd.f32 %v1569, -0.00021337405
    %v1634 = vadd.f32 %v1570, -0.00021337405
    %v1635 = vadd.f32 %v1571, -0.00021337405
    %v1636 = vadd.f32 %v1572, -0.00021337405
    %v1637 = vadd.f32 %v1573, -0.00021337405
    %v1638 = vadd.f32 %v1574, -0.00021337405
    %v1639 = vadd.f32 %v1575, -0.00021337405
    %v1640 = vadd.f32 %v1576, -0.00021337405
    %v1641 = vadd.f32 %v1577, -0.00021337405
    %v1642 = vadd.f32 %v1578, -0.00021337405
    %v1643 = vadd.f32 %v1579, -0.00021337405
    %v1644 = vadd.f32 %v1580, -0.00021337405
    %v1645 = vadd.f32 %v1581, -0.00021337405
    %v1646 = vadd.f32 %v1582, -0.00021337405
    %v1647 = vadd.f32 %v1583, -0.00021337405
    %v1648 = vadd.f32 %v1584, -0.00021337405
    %v1649 = vadd.f32 %v1585, -0.00021337405
    %v1650 = vadd.f32 %v1586, -0.00021337405
    %v1651 = vadd.f32 %v1587, -0.00021337405
    %v1652 = vadd.f32 %v1588, -0.00021337405
    %v1653 = vadd.f32 %v1589, -0.00021337405
    %v1654 = vadd.f32 %v1590, -0.00021337405
    %v1655 = vadd.f32 %v1591, -0.00021337405
    %v1656 = vadd.f32 %v1592, -0.00021337405
    %v1657 = vadd.f32 %v1593, -0.00021337405
    %v1658 = vadd.f32 %v1594, -0.00021337405
    %v1659 = vadd.f32 %v1595, -0.00021337405
    %v1660 = vadd.f32 %v1596, -0.00021337405
    %v1661 = vadd.f32 %v1597, -0.00021337405
    %v1662 = vadd.f32 %v1598, -0.00021337405
    %v1663 = vadd.f32 %v1599, -0.00021337405
    %v1664 = vadd.f32 %v1600, -0.00021337405
    %v1665 = vadd.f32 %v1601, -0.00021337405
    %v1666 = vadd.f32 %v1602, -0.00021337405
    %v1667 = vadd.f32 %v1603, -0.00021337405
    %v1668 = vadd.f32 %v1604, -0.00021337405
    %v1669 = vmul.f32 %v1605, %v645
    %v1670 = vmul.f32 %v1606, %v646
    %v1671 = vmul.f32 %v1607, %v647
    %v1672 = vmul.f32 %v1608, %v648
    %v1673 = vmul.f32 %v1609, %v649
    %v1674 = vmul.f32 %v1610, %v650
    %v1675 = vmul.f32 %v1611, %v651
    %v1676 = vmul.f32 %v1612, %v652
    %v1677 = vmul.f32 %v1613, %v653
    %v1678 = vmul.f32 %v1614, %v654
    %v1679 = vmul.f32 %v1615, %v655
    %v1680 = vmul.f32 %v1616, %v656
    %v1681 = vmul.f32 %v1617, %v657
    %v1682 = vmul.f32 %v1618, %v658
    %v1683 = vmul.f32 %v1619, %v659
    %v1684 = vmul.f32 %v1620, %v660
    %v1685 = vmul.f32 %v1621, %v661
    %v1686 = vmul.f32 %v1622, %v662
    %v1687 = vmul.f32 %v1623, %v663
    %v1688 = vmul.f32 %v1624, %v664
    %v1689 = vmul.f32 %v1625, %v665
    %v1690 = vmul.f32 %v1626, %v666
    %v1691 = vmul.f32 %v1627, %v667
    %v1692 = vmul.f32 %v1628, %v668
    %v1693 = vmul.f32 %v1629, %v669
    %v1694 = vmul.f32 %v1630, %v670
    %v1695 = vmul.f32 %v1631, %v671
    %v1696 = vmul.f32 %v1632, %v672
    %v1697 = vmul.f32 %v1633, %v673
    %v1698 = vmul.f32 %v1634, %v674
    %v1699 = vmul.f32 %v1635, %v675
    %v1700 = vmul.f32 %v1636, %v676
    %v1701 = vmul.f32 %v1637, %v677
    %v1702 = vmul.f32 %v1638, %v678
    %v1703 = vmul.f32 %v1639, %v679
    %v1704 = vmul.f32 %v1640, %v680
    %v1705 = vmul.f32 %v1641, %v681
    %v1706 = vmul.f32 %v1642, %v682
    %v1707 = vmul.f32 %v1643, %v683
    %v1708 = vmul.f32 %v1644, %v684
    %v1709 = vmul.f32 %v1645, %v685
    %v1710 = vmul.f32 %v1646, %v686
    %v1711 = vmul.f32 %v1647, %v687
    %v1712 = vmul.f32 %v1648, %v688
    %v1713 = vmul.f32 %v1649, %v689
    %v1714 = vmul.f32 %v1650, %v690
    %v1715 = vmul.f32 %v1651, %v691
    %v1716 = vmul.f32 %v1652, %v692
    %v1717 = vmul.f32 %v1653, %v693
    %v1718 = vmul.f32 %v1654, %v694
    %v1719 = vmul.f32 %v1655, %v695
    %v1720 = vmul.f32 %v1656, %v696
    %v1721 = vmul.f32 %v1657, %v697
    %v1722 = vmul.f32 %v1658, %v698
    %v1723 = vmul.f32 %v1659, %v699
    %v1724 = vmul.f32 %v1660, %v700
    %v1725 = vmul.f32 %v1661, %v701
    %v1726 = vmul.f32 %v1662, %v702
    %v1727 = vmul.f32 %v1663, %v703
    %v1728 = vmul.f32 %v1664, %v704
    %v1729 = vmul.f32 %v1665, %v705
    %v1730 = vmul.f32 %v1666, %v706
    %v1731 = vmul.f32 %v1667, %v707
    %v1732 = vmul.f32 %v1668, %v708
    %v1733 = vadd.f32 %v1669, -0.001682827
    %v1734 = vadd.f32 %v1670, -0.001682827
    %v1735 = vadd.f32 %v1671, -0.001682827
    %v1736 = vadd.f32 %v1672, -0.001682827
    %v1737 = vadd.f32 %v1673, -0.001682827
    %v1738 = vadd.f32 %v1674, -0.001682827
    %v1739 = vadd.f32 %v1675, -0.001682827
    %v1740 = vadd.f32 %v1676, -0.001682827
    %v1741 = vadd.f32 %v1677, -0.001682827
    %v1742 = vadd.f32 %v1678, -0.001682827
    %v1743 = vadd.f32 %v1679, -0.001682827
    %v1744 = vadd.f32 %v1680, -0.001682827
    %v1745 = vadd.f32 %v1681, -0.001682827
    %v1746 = vadd.f32 %v1682, -0.001682827
    %v1747 = vadd.f32 %v1683, -0.001682827
    %v1748 = vadd.f32 %v1684, -0.001682827
    %v1749 = vadd.f32 %v1685, -0.001682827
    %v1750 = vadd.f32 %v1686, -0.001682827
    %v1751 = vadd.f32 %v1687, -0.001682827
    %v1752 = vadd.f32 %v1688, -0.001682827
    %v1753 = vadd.f32 %v1689, -0.001682827
    %v1754 = vadd.f32 %v1690, -0.001682827
    %v1755 = vadd.f32 %v1691, -0.001682827
    %v1756 = vadd.f32 %v1692, -0.001682827
    %v1757 = vadd.f32 %v1693, -0.001682827
    %v1758 = vadd.f32 %v1694, -0.001682827
    %v1759 = vadd.f32 %v1695, -0.001682827
    %v1760 = vadd.f32 %v1696, -0.001682827
    %v1761 = vadd.f32 %v1697, -0.001682827
    %v1762 = vadd.f32 %v1698, -0.001682827
    %v1763 = vadd.f32 %v1699, -0.001682827
    %v1764 = vadd.f32 %v1700, -0.001682827
    %v1765 = vadd.f32 %v1701, -0.001682827
    %v1766 = vadd.f32 %v1702, -0.001682827
    %v1767 = vadd.f32 %v1703, -0.001682827
    %v1768 = vadd.f32 %v1704, -0.001682827
    %v1769 = vadd.f32 %v1705, -0.001682827
    %v1770 = vadd.f32 %v1706, -0.001682827
    %v1771 = vadd.f32 %v1707, -0.001682827
    %v1772 = vadd.f32 %v1708, -0.001682827
    %v1773 = vadd.f32 %v1709, -0.001682827
    %v1774 = vadd.f32 %v1710, -0.001682827
    %v1775 = vadd.f32 %v1711, -0.001682827
    %v1776 = vadd.f32 %v1712, -0.001682827
    %v1777 = vadd.f32 %v1713, -0.001682827
    %v1778 = vadd.f32 %v1714, -0.001682827
    %v1779 = vadd.f32 %v1715, -0.001682827
    %v1780 = vadd.f32 %v1716, -0.001682827
    %v1781 = vadd.f32 %v1717, -0.001682827
    %v1782 = vadd.f32 %v1718, -0.001682827
    %v1783 = vadd.f32 %v1719, -0.001682827
    %v1784 = vadd.f32 %v1720, -0.001682827
    %v1785 = vadd.f32 %v1721, -0.001682827
    %v1786 = vadd.f32 %v1722, -0.001682827
    %v1787 = vadd.f32 %v1723, -0.001682827
    %v1788 = vadd.f32 %v1724, -0.001682827
    %v1789 = vadd.f32 %v1725, -0.001682827
    %v1790 = vadd.f32 %v1726, -0.001682827
    %v1791 = vadd.f32 %v1727, -0.001682827
    %v1792 = vadd.f32 %v1728, -0.001682827
    %v1793 = vadd.f32 %v1729, -0.001682827
    %v1794 = vadd.f32 %v1730, -0.001682827
    %v1795 = vadd.f32 %v1731, -0.001682827
    %v1796 = vadd.f32 %v1732, -0.001682827
    %v1797 = vmul.f32 %v1733, %v645
    %v1798 = vmul.f32 %v1734, %v646
    %v1799 = vmul.f32 %v1735, %v647
    %v1800 = vmul.f32 %v1736, %v648
    %v1801 = vmul.f32 %v1737, %v649
    %v1802 = vmul.f32 %v1738, %v650
    %v1803 = vmul.f32 %v1739, %v651
    %v1804 = vmul.f32 %v1740, %v652
    %v1805 = vmul.f32 %v1741, %v653
    %v1806 = vmul.f32 %v1742, %v654
    %v1807 = vmul.f32 %v1743, %v655
    %v1808 = vmul.f32 %v1744, %v656
    %v1809 = vmul.f32 %v1745, %v657
    %v1810 = vmul.f32 %v1746, %v658
    %v1811 = vmul.f32 %v1747, %v659
    %v1812 = vmul.f32 %v1748, %v660
    %v1813 = vmul.f32 %v1749, %v661
    %v1814 = vmul.f32 %v1750, %v662
    %v1815 = vmul.f32 %v1751, %v663
    %v1816 = vmul.f32 %v1752, %v664
    %v1817 = vmul.f32 %v1753, %v665
    %v1818 = vmul.f32 %v1754, %v666
    %v1819 = vmul.f32 %v1755, %v667
    %v1820 = vmul.f32 %v1756, %v668
    %v1821 = vmul.f32 %v1757, %v669
    %v1822 = vmul.f32 %v1758, %v670
    %v1823 = vmul.f32 %v1759, %v671
    %v1824 = vmul.f32 %v1760, %v672
    %v1825 = vmul.f32 %v1761, %v673
    %v1826 = vmul.f32 %v1762, %v674
    %v1827 = vmul.f32 %v1763, %v675
    %v1828 = vmul.f32 %v1764, %v676
    %v1829 = vmul.f32 %v1765, %v677
    %v1830 = vmul.f32 %v1766, %v678
    %v1831 = vmul.f32 %v1767, %v679
    %v1832 = vmul.f32 %v1768, %v680
    %v1833 = vmul.f32 %v1769, %v681
    %v1834 = vmul.f32 %v1770, %v682
    %v1835 = vmul.f32 %v1771, %v683
    %v1836 = vmul.f32 %v1772, %v684
    %v1837 = vmul.f32 %v1773, %v685
    %v1838 = vmul.f32 %v1774, %v686
    %v1839 = vmul.f32 %v1775, %v687
    %v1840 = vmul.f32 %v1776, %v688
    %v1841 = vmul.f32 %v1777, %v689
    %v1842 = vmul.f32 %v1778, %v690
    %v1843 = vmul.f32 %v1779, %v691
    %v1844 = vmul.f32 %v1780, %v692
    %v1845 = vmul.f32 %v1781, %v693
    %v1846 = vmul.f32 %v1782, %v694
    %v1847 = vmul.f32 %v1783, %v695
    %v1848 = vmul.f32 %v1784, %v696
    %v1849 = vmul.f32 %v1785, %v697
    %v1850 = vmul.f32 %v1786, %v698
    %v1851 = vmul.f32 %v1787, %v699
    %v1852 = vmul.f32 %v1788, %v700
    %v1853 = vmul.f32 %v1789, %v701
    %v1854 = vmul.f32 %v1790, %v702
    %v1855 = vmul.f32 %v1791, %v703
    %v1856 = vmul.f32 %v1792, %v704
    %v1857 = vmul.f32 %v1793, %v705
    %v1858 = vmul.f32 %v1794, %v706
    %v1859 = vmul.f32 %v1795, %v707
    %v1860 = vmul.f32 %v1796, %v708
    %v1861 = vadd.f32 %v1797, -0.0073733293
    %v1862 = vadd.f32 %v1798, -0.0073733293
    %v1863 = vadd.f32 %v1799, -0.0073733293
    %v1864 = vadd.f32 %v1800, -0.0073733293
    %v1865 = vadd.f32 %v1801, -0.0073733293
    %v1866 = vadd.f32 %v1802, -0.0073733293
    %v1867 = vadd.f32 %v1803, -0.0073733293
    %v1868 = vadd.f32 %v1804, -0.0073733293
    %v1869 = vadd.f32 %v1805, -0.0073733293
    %v1870 = vadd.f32 %v1806, -0.0073733293
    %v1871 = vadd.f32 %v1807, -0.0073733293
    %v1872 = vadd.f32 %v1808, -0.0073733293
    %v1873 = vadd.f32 %v1809, -0.0073733293
    %v1874 = vadd.f32 %v1810, -0.0073733293
    %v1875 = vadd.f32 %v1811, -0.0073733293
    %v1876 = vadd.f32 %v1812, -0.0073733293
    %v1877 = vadd.f32 %v1813, -0.0073733293
    %v1878 = vadd.f32 %v1814, -0.0073733293
    %v1879 = vadd.f32 %v1815, -0.0073733293
    %v1880 = vadd.f32 %v1816, -0.0073733293
    %v1881 = vadd.f32 %v1817, -0.0073733293
    %v1882 = vadd.f32 %v1818, -0.0073733293
    %v1883 = vadd.f32 %v1819, -0.0073733293
    %v1884 = vadd.f32 %v1820, -0.0073733293
    %v1885 = vadd.f32 %v1821, -0.0073733293
    %v1886 = vadd.f32 %v1822, -0.0073733293
    %v1887 = vadd.f32 %v1823, -0.0073733293
    %v1888 = vadd.f32 %v1824, -0.0073733293
    %v1889 = vadd.f32 %v1825, -0.0073733293
    %v1890 = vadd.f32 %v1826, -0.0073733293
    %v1891 = vadd.f32 %v1827, -0.0073733293
    %v1892 = vadd.f32 %v1828, -0.0073733293
    %v1893 = vadd.f32 %v1829, -0.0073733293
    %v1894 = vadd.f32 %v1830, -0.0073733293
    %v1895 = vadd.f32 %v1831, -0.0073733293
    %v1896 = vadd.f32 %v1832, -0.0073733293
    %v1897 = vadd.f32 %v1833, -0.0073733293
    %v1898 = vadd.f32 %v1834, -0.0073733293
    %v1899 = vadd.f32 %v1835, -0.0073733293
    %v1900 = vadd.f32 %v1836, -0.0073733293
    %v1901 = vadd.f32 %v1837, -0.0073733293
    %v1902 = vadd.f32 %v1838, -0.0073733293
    %v1903 = vadd.f32 %v1839, -0.0073733293
    %v1904 = vadd.f32 %v1840, -0.0073733293
    %v1905 = vadd.f32 %v1841, -0.0073733293
    %v1906 = vadd.f32 %v1842, -0.0073733293
    %v1907 = vadd.f32 %v1843, -0.0073733293
    %v1908 = vadd.f32 %v1844, -0.0073733293
    %v1909 = vadd.f32 %v1845, -0.0073733293
    %v1910 = vadd.f32 %v1846, -0.0073733293
    %v1911 = vadd.f32 %v1847, -0.0073733293
    %v1912 = vadd.f32 %v1848, -0.0073733293
    %v1913 = vadd.f32 %v1849, -0.0073733293
    %v1914 = vadd.f32 %v1850, -0.0073733293
    %v1915 = vadd.f32 %v1851, -0.0073733293
    %v1916 = vadd.f32 %v1852, -0.0073733293
    %v1917 = vadd.f32 %v1853, -0.0073733293
    %v1918 = vadd.f32 %v1854, -0.0073733293
    %v1919 = vadd.f32 %v1855, -0.0073733293
    %v1920 = vadd.f32 %v1856, -0.0073733293
    %v1921 = vadd.f32 %v1857, -0.0073733293
    %v1922 = vadd.f32 %v1858, -0.0073733293
    %v1923 = vadd.f32 %v1859, -0.0073733293
    %v1924 = vadd.f32 %v1860, -0.0073733293
    %v1925 = vmul.f32 %v1861, %v645
    %v1926 = vmul.f32 %v1862, %v646
    %v1927 = vmul.f32 %v1863, %v647
    %v1928 = vmul.f32 %v1864, %v648
    %v1929 = vmul.f32 %v1865, %v649
    %v1930 = vmul.f32 %v1866, %v650
    %v1931 = vmul.f32 %v1867, %v651
    %v1932 = vmul.f32 %v1868, %v652
    %v1933 = vmul.f32 %v1869, %v653
    %v1934 = vmul.f32 %v1870, %v654
    %v1935 = vmul.f32 %v1871, %v655
    %v1936 = vmul.f32 %v1872, %v656
    %v1937 = vmul.f32 %v1873, %v657
    %v1938 = vmul.f32 %v1874, %v658
    %v1939 = vmul.f32 %v1875, %v659
    %v1940 = vmul.f32 %v1876, %v660
    %v1941 = vmul.f32 %v1877, %v661
    %v1942 = vmul.f32 %v1878, %v662
    %v1943 = vmul.f32 %v1879, %v663
    %v1944 = vmul.f32 %v1880, %v664
    %v1945 = vmul.f32 %v1881, %v665
    %v1946 = vmul.f32 %v1882, %v666
    %v1947 = vmul.f32 %v1883, %v667
    %v1948 = vmul.f32 %v1884, %v668
    %v1949 = vmul.f32 %v1885, %v669
    %v1950 = vmul.f32 %v1886, %v670
    %v1951 = vmul.f32 %v1887, %v671
    %v1952 = vmul.f32 %v1888, %v672
    %v1953 = vmul.f32 %v1889, %v673
    %v1954 = vmul.f32 %v1890, %v674
    %v1955 = vmul.f32 %v1891, %v675
    %v1956 = vmul.f32 %v1892, %v676
    %v1957 = vmul.f32 %v1893, %v677
    %v1958 = vmul.f32 %v1894, %v678
    %v1959 = vmul.f32 %v1895, %v679
    %v1960 = vmul.f32 %v1896, %v680
    %v1961 = vmul.f32 %v1897, %v681
    %v1962 = vmul.f32 %v1898, %v682
    %v1963 = vmul.f32 %v1899, %v683
    %v1964 = vmul.f32 %v1900, %v684
    %v1965 = vmul.f32 %v1901, %v685
    %v1966 = vmul.f32 %v1902, %v686
    %v1967 = vmul.f32 %v1903, %v687
    %v1968 = vmul.f32 %v1904, %v688
    %v1969 = vmul.f32 %v1905, %v689
    %v1970 = vmul.f32 %v1906, %v690
    %v1971 = vmul.f32 %v1907, %v691
    %v1972 = vmul.f32 %v1908, %v692
    %v1973 = vmul.f32 %v1909, %v693
    %v1974 = vmul.f32 %v1910, %v694
    %v1975 = vmul.f32 %v1911, %v695
    %v1976 = vmul.f32 %v1912, %v696
    %v1977 = vmul.f32 %v1913, %v697
    %v1978 = vmul.f32 %v1914, %v698
    %v1979 = vmul.f32 %v1915, %v699
    %v1980 = vmul.f32 %v1916, %v700
    %v1981 = vmul.f32 %v1917, %v701
    %v1982 = vmul.f32 %v1918, %v702
    %v1983 = vmul.f32 %v1919, %v703
    %v1984 = vmul.f32 %v1920, %v704
    %v1985 = vmul.f32 %v1921, %v705
    %v1986 = vmul.f32 %v1922, %v706
    %v1987 = vmul.f32 %v1923, %v707
    %v1988 = vmul.f32 %v1924, %v708
    %v1989 = vadd.f32 %v1925, -0.014264739
    %v1990 = vadd.f32 %v1926, -0.014264739
    %v1991 = vadd.f32 %v1927, -0.014264739
    %v1992 = vadd.f32 %v1928, -0.014264739
    %v1993 = vadd.f32 %v1929, -0.014264739
    %v1994 = vadd.f32 %v1930, -0.014264739
    %v1995 = vadd.f32 %v1931, -0.014264739
    %v1996 = vadd.f32 %v1932, -0.014264739
    %v1997 = vadd.f32 %v1933, -0.014264739
    %v1998 = vadd.f32 %v1934, -0.014264739
    %v1999 = vadd.f32 %v1935, -0.014264739
    %v2000 = vadd.f32 %v1936, -0.014264739
    %v2001 = vadd.f32 %v1937, -0.014264739
    %v2002 = vadd.f32 %v1938, -0.014264739
    %v2003 = vadd.f32 %v1939, -0.014264739
    %v2004 = vadd.f32 %v1940, -0.014264739
    %v2005 = vadd.f32 %v1941, -0.014264739
    %v2006 = vadd.f32 %v1942, -0.014264739
    %v2007 = vadd.f32 %v1943, -0.014264739
    %v2008 = vadd.f32 %v1944, -0.014264739
    %v2009 = vadd.f32 %v1945, -0.014264739
    %v2010 = vadd.f32 %v1946, -0.014264739
    %v2011 = vadd.f32 %v1947, -0.014264739
    %v2012 = vadd.f32 %v1948, -0.014264739
    %v2013 = vadd.f32 %v1949, -0.014264739
    %v2014 = vadd.f32 %v1950, -0.014264739
    %v2015 = vadd.f32 %v1951, -0.014264739
    %v2016 = vadd.f32 %v1952, -0.014264739
    %v2017 = vadd.f32 %v1953, -0.014264739
    %v2018 = vadd.f32 %v1954, -0.014264739
    %v2019 = vadd.f32 %v1955, -0.014264739
    %v2020 = vadd.f32 %v1956, -0.014264739
    %v2021 = vadd.f32 %v1957, -0.014264739
    %v2022 = vadd.f32 %v1958, -0.014264739
    %v2023 = vadd.f32 %v1959, -0.014264739
    %v2024 = vadd.f32 %v1960, -0.014264739
    %v2025 = vadd.f32 %v1961, -0.014264739
    %v2026 = vadd.f32 %v1962, -0.014264739
    %v2027 = vadd.f32 %v1963, -0.014264739
    %v2028 = vadd.f32 %v1964, -0.014264739
    %v2029 = vadd.f32 %v1965, -0.014264739
    %v2030 = vadd.f32 %v1966, -0.014264739
    %v2031 = vadd.f32 %v1967, -0.014264739
    %v2032 = vadd.f32 %v1968, -0.014264739
    %v2033 = vadd.f32 %v1969, -0.014264739
    %v2034 = vadd.f32 %v1970, -0.014264739
    %v2035 = vadd.f32 %v1971, -0.014264739
    %v2036 = vadd.f32 %v1972, -0.014264739
    %v2037 = vadd.f32 %v1973, -0.014264739
    %v2038 = vadd.f32 %v1974, -0.014264739
    %v2039 = vadd.f32 %v1975, -0.014264739
    %v2040 = vadd.f32 %v1976, -0.014264739
    %v2041 = vadd.f32 %v1977, -0.014264739
    %v2042 = vadd.f32 %v1978, -0.014264739
    %v2043 = vadd.f32 %v1979, -0.014264739
    %v2044 = vadd.f32 %v1980, -0.014264739
    %v2045 = vadd.f32 %v1981, -0.014264739
    %v2046 = vadd.f32 %v1982, -0.014264739
    %v2047 = vadd.f32 %v1983, -0.014264739
    %v2048 = vadd.f32 %v1984, -0.014264739
    %v2049 = vadd.f32 %v1985, -0.014264739
    %v2050 = vadd.f32 %v1986, -0.014264739
    %v2051 = vadd.f32 %v1987, -0.014264739
    %v2052 = vadd.f32 %v1988, -0.014264739
    %v2053 = vrcp.pop %v1989
    %v2054 = vrcp.pop %v1990
    %v2055 = vrcp.pop %v1991
    %v2056 = vrcp.pop %v1992
    %v2057 = vrcp.pop %v1993
    %v2058 = vrcp.pop %v1994
    %v2059 = vrcp.pop %v1995
    %v2060 = vrcp.pop %v1996
    %v2061 = vrcp.pop %v1997
    %v2062 = vrcp.pop %v1998
    %v2063 = vrcp.pop %v1999
    %v2064 = vrcp.pop %v2000
    %v2065 = vrcp.pop %v2001
    %v2066 = vrcp.pop %v2002
    %v2067 = vrcp.pop %v2003
    %v2068 = vrcp.pop %v2004
    %v2069 = vrcp.pop %v2005
    %v2070 = vrcp.pop %v2006
    %v2071 = vrcp.pop %v2007
    %v2072 = vrcp.pop %v2008
    %v2073 = vrcp.pop %v2009
    %v2074 = vrcp.pop %v2010
    %v2075 = vrcp.pop %v2011
    %v2076 = vrcp.pop %v2012
    %v2077 = vrcp.pop %v2013
    %v2078 = vrcp.pop %v2014
    %v2079 = vrcp.pop %v2015
    %v2080 = vrcp.pop %v2016
    %v2081 = vrcp.pop %v2017
    %v2082 = vrcp.pop %v2018
    %v2083 = vrcp.pop %v2019
    %v2084 = vrcp.pop %v2020
    %v2085 = vrcp.pop %v2021
    %v2086 = vrcp.pop %v2022
    %v2087 = vrcp.pop %v2023
    %v2088 = vrcp.pop %v2024
    %v2089 = vrcp.pop %v2025
    %v2090 = vrcp.pop %v2026
    %v2091 = vrcp.pop %v2027
    %v2092 = vrcp.pop %v2028
    %v2093 = vrcp.pop %v2029
    %v2094 = vrcp.pop %v2030
    %v2095 = vrcp.pop %v2031
    %v2096 = vrcp.pop %v2032
    %v2097 = vrcp.pop %v2033
    %v2098 = vrcp.pop %v2034
    %v2099 = vrcp.pop %v2035
    %v2100 = vrcp.pop %v2036
    %v2101 = vrcp.pop %v2037
    %v2102 = vrcp.pop %v2038
    %v2103 = vrcp.pop %v2039
    %v2104 = vrcp.pop %v2040
    %v2105 = vrcp.pop %v2041
    %v2106 = vrcp.pop %v2042
    %v2107 = vrcp.pop %v2043
    %v2108 = vrcp.pop %v2044
    %v2109 = vrcp.pop %v2045
    %v2110 = vrcp.pop %v2046
    %v2111 = vrcp.pop %v2047
    %v2112 = vrcp.pop %v2048
    %v2113 = vrcp.pop %v2049
    %v2114 = vrcp.pop %v2050
    %v2115 = vrcp.pop %v2051
    %v2116 = vrcp.pop %v2052
    %v2117 = vmul.f32 %v1989, %v2053
    %v2118 = vmul.f32 %v1990, %v2054
    %v2119 = vmul.f32 %v1991, %v2055
    %v2120 = vmul.f32 %v1992, %v2056
    %v2121 = vmul.f32 %v1993, %v2057
    %v2122 = vmul.f32 %v1994, %v2058
    %v2123 = vmul.f32 %v1995, %v2059
    %v2124 = vmul.f32 %v1996, %v2060
    %v2125 = vmul.f32 %v1997, %v2061
    %v2126 = vmul.f32 %v1998, %v2062
    %v2127 = vmul.f32 %v1999, %v2063
    %v2128 = vmul.f32 %v2000, %v2064
    %v2129 = vmul.f32 %v2001, %v2065
    %v2130 = vmul.f32 %v2002, %v2066
    %v2131 = vmul.f32 %v2003, %v2067
    %v2132 = vmul.f32 %v2004, %v2068
    %v2133 = vmul.f32 %v2005, %v2069
    %v2134 = vmul.f32 %v2006, %v2070
    %v2135 = vmul.f32 %v2007, %v2071
    %v2136 = vmul.f32 %v2008, %v2072
    %v2137 = vmul.f32 %v2009, %v2073
    %v2138 = vmul.f32 %v2010, %v2074
    %v2139 = vmul.f32 %v2011, %v2075
    %v2140 = vmul.f32 %v2012, %v2076
    %v2141 = vmul.f32 %v2013, %v2077
    %v2142 = vmul.f32 %v2014, %v2078
    %v2143 = vmul.f32 %v2015, %v2079
    %v2144 = vmul.f32 %v2016, %v2080
    %v2145 = vmul.f32 %v2017, %v2081
    %v2146 = vmul.f32 %v2018, %v2082
    %v2147 = vmul.f32 %v2019, %v2083
    %v2148 = vmul.f32 %v2020, %v2084
    %v2149 = vmul.f32 %v2021, %v2085
    %v2150 = vmul.f32 %v2022, %v2086
    %v2151 = vmul.f32 %v2023, %v2087
    %v2152 = vmul.f32 %v2024, %v2088
    %v2153 = vmul.f32 %v2025, %v2089
    %v2154 = vmul.f32 %v2026, %v2090
    %v2155 = vmul.f32 %v2027, %v2091
    %v2156 = vmul.f32 %v2028, %v2092
    %v2157 = vmul.f32 %v2029, %v2093
    %v2158 = vmul.f32 %v2030, %v2094
    %v2159 = vmul.f32 %v2031, %v2095
    %v2160 = vmul.f32 %v2032, %v2096
    %v2161 = vmul.f32 %v2033, %v2097
    %v2162 = vmul.f32 %v2034, %v2098
    %v2163 = vmul.f32 %v2035, %v2099
    %v2164 = vmul.f32 %v2036, %v2100
    %v2165 = vmul.f32 %v2037, %v2101
    %v2166 = vmul.f32 %v2038, %v2102
    %v2167 = vmul.f32 %v2039, %v2103
    %v2168 = vmul.f32 %v2040, %v2104
    %v2169 = vmul.f32 %v2041, %v2105
    %v2170 = vmul.f32 %v2042, %v2106
    %v2171 = vmul.f32 %v2043, %v2107
    %v2172 = vmul.f32 %v2044, %v2108
    %v2173 = vmul.f32 %v2045, %v2109
    %v2174 = vmul.f32 %v2046, %v2110
    %v2175 = vmul.f32 %v2047, %v2111
    %v2176 = vmul.f32 %v2048, %v2112
    %v2177 = vmul.f32 %v2049, %v2113
    %v2178 = vmul.f32 %v2050, %v2114
    %v2179 = vmul.f32 %v2051, %v2115
    %v2180 = vmul.f32 %v2052, %v2116
    %v2181 = vsub.f32 2.0, %v2117
    %v2182 = vsub.f32 2.0, %v2118
    %v2183 = vsub.f32 2.0, %v2119
    %v2184 = vsub.f32 2.0, %v2120
    %v2185 = vsub.f32 2.0, %v2121
    %v2186 = vsub.f32 2.0, %v2122
    %v2187 = vsub.f32 2.0, %v2123
    %v2188 = vsub.f32 2.0, %v2124
    %v2189 = vsub.f32 2.0, %v2125
    %v2190 = vsub.f32 2.0, %v2126
    %v2191 = vsub.f32 2.0, %v2127
    %v2192 = vsub.f32 2.0, %v2128
    %v2193 = vsub.f32 2.0, %v2129
    %v2194 = vsub.f32 2.0, %v2130
    %v2195 = vsub.f32 2.0, %v2131
    %v2196 = vsub.f32 2.0, %v2132
    %v2197 = vsub.f32 2.0, %v2133
    %v2198 = vsub.f32 2.0, %v2134
    %v2199 = vsub.f32 2.0, %v2135
    %v2200 = vsub.f32 2.0, %v2136
    %v2201 = vsub.f32 2.0, %v2137
    %v2202 = vsub.f32 2.0, %v2138
    %v2203 = vsub.f32 2.0, %v2139
    %v2204 = vsub.f32 2.0, %v2140
    %v2205 = vsub.f32 2.0, %v2141
    %v2206 = vsub.f32 2.0, %v2142
    %v2207 = vsub.f32 2.0, %v2143
    %v2208 = vsub.f32 2.0, %v2144
    %v2209 = vsub.f32 2.0, %v2145
    %v2210 = vsub.f32 2.0, %v2146
    %v2211 = vsub.f32 2.0, %v2147
    %v2212 = vsub.f32 2.0, %v2148
    %v2213 = vsub.f32 2.0, %v2149
    %v2214 = vsub.f32 2.0, %v2150
    %v2215 = vsub.f32 2.0, %v2151
    %v2216 = vsub.f32 2.0, %v2152
    %v2217 = vsub.f32 2.0, %v2153
    %v2218 = vsub.f32 2.0, %v2154
    %v2219 = vsub.f32 2.0, %v2155
    %v2220 = vsub.f32 2.0, %v2156
    %v2221 = vsub.f32 2.0, %v2157
    %v2222 = vsub.f32 2.0, %v2158
    %v2223 = vsub.f32 2.0, %v2159
    %v2224 = vsub.f32 2.0, %v2160
    %v2225 = vsub.f32 2.0, %v2161
    %v2226 = vsub.f32 2.0, %v2162
    %v2227 = vsub.f32 2.0, %v2163
    %v2228 = vsub.f32 2.0, %v2164
    %v2229 = vsub.f32 2.0, %v2165
    %v2230 = vsub.f32 2.0, %v2166
    %v2231 = vsub.f32 2.0, %v2167
    %v2232 = vsub.f32 2.0, %v2168
    %v2233 = vsub.f32 2.0, %v2169
    %v2234 = vsub.f32 2.0, %v2170
    %v2235 = vsub.f32 2.0, %v2171
    %v2236 = vsub.f32 2.0, %v2172
    %v2237 = vsub.f32 2.0, %v2173
    %v2238 = vsub.f32 2.0, %v2174
    %v2239 = vsub.f32 2.0, %v2175
    %v2240 = vsub.f32 2.0, %v2176
    %v2241 = vsub.f32 2.0, %v2177
    %v2242 = vsub.f32 2.0, %v2178
    %v2243 = vsub.f32 2.0, %v2179
    %v2244 = vsub.f32 2.0, %v2180
    %v2245 = vmul.f32 %v2053, %v2181
    %v2246 = vmul.f32 %v2054, %v2182
    %v2247 = vmul.f32 %v2055, %v2183
    %v2248 = vmul.f32 %v2056, %v2184
    %v2249 = vmul.f32 %v2057, %v2185
    %v2250 = vmul.f32 %v2058, %v2186
    %v2251 = vmul.f32 %v2059, %v2187
    %v2252 = vmul.f32 %v2060, %v2188
    %v2253 = vmul.f32 %v2061, %v2189
    %v2254 = vmul.f32 %v2062, %v2190
    %v2255 = vmul.f32 %v2063, %v2191
    %v2256 = vmul.f32 %v2064, %v2192
    %v2257 = vmul.f32 %v2065, %v2193
    %v2258 = vmul.f32 %v2066, %v2194
    %v2259 = vmul.f32 %v2067, %v2195
    %v2260 = vmul.f32 %v2068, %v2196
    %v2261 = vmul.f32 %v2069, %v2197
    %v2262 = vmul.f32 %v2070, %v2198
    %v2263 = vmul.f32 %v2071, %v2199
    %v2264 = vmul.f32 %v2072, %v2200
    %v2265 = vmul.f32 %v2073, %v2201
    %v2266 = vmul.f32 %v2074, %v2202
    %v2267 = vmul.f32 %v2075, %v2203
    %v2268 = vmul.f32 %v2076, %v2204
    %v2269 = vmul.f32 %v2077, %v2205
    %v2270 = vmul.f32 %v2078, %v2206
    %v2271 = vmul.f32 %v2079, %v2207
    %v2272 = vmul.f32 %v2080, %v2208
    %v2273 = vmul.f32 %v2081, %v2209
    %v2274 = vmul.f32 %v2082, %v2210
    %v2275 = vmul.f32 %v2083, %v2211
    %v2276 = vmul.f32 %v2084, %v2212
    %v2277 = vmul.f32 %v2085, %v2213
    %v2278 = vmul.f32 %v2086, %v2214
    %v2279 = vmul.f32 %v2087, %v2215
    %v2280 = vmul.f32 %v2088, %v2216
    %v2281 = vmul.f32 %v2089, %v2217
    %v2282 = vmul.f32 %v2090, %v2218
    %v2283 = vmul.f32 %v2091, %v2219
    %v2284 = vmul.f32 %v2092, %v2220
    %v2285 = vmul.f32 %v2093, %v2221
    %v2286 = vmul.f32 %v2094, %v2222
    %v2287 = vmul.f32 %v2095, %v2223
    %v2288 = vmul.f32 %v2096, %v2224
    %v2289 = vmul.f32 %v2097, %v2225
    %v2290 = vmul.f32 %v2098, %v2226
    %v2291 = vmul.f32 %v2099, %v2227
    %v2292 = vmul.f32 %v2100, %v2228
    %v2293 = vmul.f32 %v2101, %v2229
    %v2294 = vmul.f32 %v2102, %v2230
    %v2295 = vmul.f32 %v2103, %v2231
    %v2296 = vmul.f32 %v2104, %v2232
    %v2297 = vmul.f32 %v2105, %v2233
    %v2298 = vmul.f32 %v2106, %v2234
    %v2299 = vmul.f32 %v2107, %v2235
    %v2300 = vmul.f32 %v2108, %v2236
    %v2301 = vmul.f32 %v2109, %v2237
    %v2302 = vmul.f32 %v2110, %v2238
    %v2303 = vmul.f32 %v2111, %v2239
    %v2304 = vmul.f32 %v2112, %v2240
    %v2305 = vmul.f32 %v2113, %v2241
    %v2306 = vmul.f32 %v2114, %v2242
    %v2307 = vmul.f32 %v2115, %v2243
    %v2308 = vmul.f32 %v2116, %v2244
    %v2309 = vmul.f32 %v1477, %v2245
    %v2310 = vmul.f32 %v1478, %v2246
    %v2311 = vmul.f32 %v1479, %v2247
    %v2312 = vmul.f32 %v1480, %v2248
    %v2313 = vmul.f32 %v1481, %v2249
    %v2314 = vmul.f32 %v1482, %v2250
    %v2315 = vmul.f32 %v1483, %v2251
    %v2316 = vmul.f32 %v1484, %v2252
    %v2317 = vmul.f32 %v1485, %v2253
    %v2318 = vmul.f32 %v1486, %v2254
    %v2319 = vmul.f32 %v1487, %v2255
    %v2320 = vmul.f32 %v1488, %v2256
    %v2321 = vmul.f32 %v1489, %v2257
    %v2322 = vmul.f32 %v1490, %v2258
    %v2323 = vmul.f32 %v1491, %v2259
    %v2324 = vmul.f32 %v1492, %v2260
    %v2325 = vmul.f32 %v1493, %v2261
    %v2326 = vmul.f32 %v1494, %v2262
    %v2327 = vmul.f32 %v1495, %v2263
    %v2328 = vmul.f32 %v1496, %v2264
    %v2329 = vmul.f32 %v1497, %v2265
    %v2330 = vmul.f32 %v1498, %v2266
    %v2331 = vmul.f32 %v1499, %v2267
    %v2332 = vmul.f32 %v1500, %v2268
    %v2333 = vmul.f32 %v1501, %v2269
    %v2334 = vmul.f32 %v1502, %v2270
    %v2335 = vmul.f32 %v1503, %v2271
    %v2336 = vmul.f32 %v1504, %v2272
    %v2337 = vmul.f32 %v1505, %v2273
    %v2338 = vmul.f32 %v1506, %v2274
    %v2339 = vmul.f32 %v1507, %v2275
    %v2340 = vmul.f32 %v1508, %v2276
    %v2341 = vmul.f32 %v1509, %v2277
    %v2342 = vmul.f32 %v1510, %v2278
    %v2343 = vmul.f32 %v1511, %v2279
    %v2344 = vmul.f32 %v1512, %v2280
    %v2345 = vmul.f32 %v1513, %v2281
    %v2346 = vmul.f32 %v1514, %v2282
    %v2347 = vmul.f32 %v1515, %v2283
    %v2348 = vmul.f32 %v1516, %v2284
    %v2349 = vmul.f32 %v1517, %v2285
    %v2350 = vmul.f32 %v1518, %v2286
    %v2351 = vmul.f32 %v1519, %v2287
    %v2352 = vmul.f32 %v1520, %v2288
    %v2353 = vmul.f32 %v1521, %v2289
    %v2354 = vmul.f32 %v1522, %v2290
    %v2355 = vmul.f32 %v1523, %v2291
    %v2356 = vmul.f32 %v1524, %v2292
    %v2357 = vmul.f32 %v1525, %v2293
    %v2358 = vmul.f32 %v1526, %v2294
    %v2359 = vmul.f32 %v1527, %v2295
    %v2360 = vmul.f32 %v1528, %v2296
    %v2361 = vmul.f32 %v1529, %v2297
    %v2362 = vmul.f32 %v1530, %v2298
    %v2363 = vmul.f32 %v1531, %v2299
    %v2364 = vmul.f32 %v1532, %v2300
    %v2365 = vmul.f32 %v1533, %v2301
    %v2366 = vmul.f32 %v1534, %v2302
    %v2367 = vmul.f32 %v1535, %v2303
    %v2368 = vmul.f32 %v1536, %v2304
    %v2369 = vmul.f32 %v1537, %v2305
    %v2370 = vmul.f32 %v1538, %v2306
    %v2371 = vmul.f32 %v1539, %v2307
    %v2372 = vmul.f32 %v1540, %v2308
    %v2373 = vmul.f32 %v211, 0.5
    %v2374 = vmul.f32 %v276, 0.5
    %v2375 = vmul.f32 %v341, 0.5
    %v2376 = vmul.f32 %v406, 0.5
    %v2377 = vmul.f32 %v214, 0.5
    %v2378 = vmul.f32 %v279, 0.5
    %v2379 = vmul.f32 %v344, 0.5
    %v2380 = vmul.f32 %v409, 0.5
    %v2381 = vmul.f32 %v217, 0.5
    %v2382 = vmul.f32 %v282, 0.5
    %v2383 = vmul.f32 %v347, 0.5
    %v2384 = vmul.f32 %v412, 0.5
    %v2385 = vmul.f32 %v220, 0.5
    %v2386 = vmul.f32 %v285, 0.5
    %v2387 = vmul.f32 %v350, 0.5
    %v2388 = vmul.f32 %v415, 0.5
    %v2389 = vmul.f32 %v223, 0.5
    %v2390 = vmul.f32 %v288, 0.5
    %v2391 = vmul.f32 %v353, 0.5
    %v2392 = vmul.f32 %v418, 0.5
    %v2393 = vmul.f32 %v226, 0.5
    %v2394 = vmul.f32 %v291, 0.5
    %v2395 = vmul.f32 %v356, 0.5
    %v2396 = vmul.f32 %v421, 0.5
    %v2397 = vmul.f32 %v229, 0.5
    %v2398 = vmul.f32 %v294, 0.5
    %v2399 = vmul.f32 %v359, 0.5
    %v2400 = vmul.f32 %v424, 0.5
    %v2401 = vmul.f32 %v232, 0.5
    %v2402 = vmul.f32 %v297, 0.5
    %v2403 = vmul.f32 %v362, 0.5
    %v2404 = vmul.f32 %v427, 0.5
    %v2405 = vmul.f32 %v235, 0.5
    %v2406 = vmul.f32 %v300, 0.5
    %v2407 = vmul.f32 %v365, 0.5
    %v2408 = vmul.f32 %v430, 0.5
    %v2409 = vmul.f32 %v238, 0.5
    %v2410 = vmul.f32 %v303, 0.5
    %v2411 = vmul.f32 %v368, 0.5
    %v2412 = vmul.f32 %v433, 0.5
    %v2413 = vmul.f32 %v241, 0.5
    %v2414 = vmul.f32 %v306, 0.5
    %v2415 = vmul.f32 %v371, 0.5
    %v2416 = vmul.f32 %v436, 0.5
    %v2417 = vmul.f32 %v244, 0.5
    %v2418 = vmul.f32 %v309, 0.5
    %v2419 = vmul.f32 %v374, 0.5
    %v2420 = vmul.f32 %v439, 0.5
    %v2421 = vmul.f32 %v247, 0.5
    %v2422 = vmul.f32 %v312, 0.5
    %v2423 = vmul.f32 %v377, 0.5
    %v2424 = vmul.f32 %v442, 0.5
    %v2425 = vmul.f32 %v250, 0.5
    %v2426 = vmul.f32 %v315, 0.5
    %v2427 = vmul.f32 %v380, 0.5
    %v2428 = vmul.f32 %v445, 0.5
    %v2429 = vmul.f32 %v253, 0.5
    %v2430 = vmul.f32 %v318, 0.5
    %v2431 = vmul.f32 %v383, 0.5
    %v2432 = vmul.f32 %v448, 0.5
    %v2433 = vmul.f32 %v256, 0.5
    %v2434 = vmul.f32 %v321, 0.5
    %v2435 = vmul.f32 %v386, 0.5
    %v2436 = vmul.f32 %v451, 0.5
    %v2437 = vadd.f32 %v2309, 1.0
    %v2438 = vadd.f32 %v2310, 1.0
    %v2439 = vadd.f32 %v2311, 1.0
    %v2440 = vadd.f32 %v2312, 1.0
    %v2441 = vadd.f32 %v2313, 1.0
    %v2442 = vadd.f32 %v2314, 1.0
    %v2443 = vadd.f32 %v2315, 1.0
    %v2444 = vadd.f32 %v2316, 1.0
    %v2445 = vadd.f32 %v2317, 1.0
    %v2446 = vadd.f32 %v2318, 1.0
    %v2447 = vadd.f32 %v2319, 1.0
    %v2448 = vadd.f32 %v2320, 1.0
    %v2449 = vadd.f32 %v2321, 1.0
    %v2450 = vadd.f32 %v2322, 1.0
    %v2451 = vadd.f32 %v2323, 1.0
    %v2452 = vadd.f32 %v2324, 1.0
    %v2453 = vadd.f32 %v2325, 1.0
    %v2454 = vadd.f32 %v2326, 1.0
    %v2455 = vadd.f32 %v2327, 1.0
    %v2456 = vadd.f32 %v2328, 1.0
    %v2457 = vadd.f32 %v2329, 1.0
    %v2458 = vadd.f32 %v2330, 1.0
    %v2459 = vadd.f32 %v2331, 1.0
    %v2460 = vadd.f32 %v2332, 1.0
    %v2461 = vadd.f32 %v2333, 1.0
    %v2462 = vadd.f32 %v2334, 1.0
    %v2463 = vadd.f32 %v2335, 1.0
    %v2464 = vadd.f32 %v2336, 1.0
    %v2465 = vadd.f32 %v2337, 1.0
    %v2466 = vadd.f32 %v2338, 1.0
    %v2467 = vadd.f32 %v2339, 1.0
    %v2468 = vadd.f32 %v2340, 1.0
    %v2469 = vadd.f32 %v2341, 1.0
    %v2470 = vadd.f32 %v2342, 1.0
    %v2471 = vadd.f32 %v2343, 1.0
    %v2472 = vadd.f32 %v2344, 1.0
    %v2473 = vadd.f32 %v2345, 1.0
    %v2474 = vadd.f32 %v2346, 1.0
    %v2475 = vadd.f32 %v2347, 1.0
    %v2476 = vadd.f32 %v2348, 1.0
    %v2477 = vadd.f32 %v2349, 1.0
    %v2478 = vadd.f32 %v2350, 1.0
    %v2479 = vadd.f32 %v2351, 1.0
    %v2480 = vadd.f32 %v2352, 1.0
    %v2481 = vadd.f32 %v2353, 1.0
    %v2482 = vadd.f32 %v2354, 1.0
    %v2483 = vadd.f32 %v2355, 1.0
    %v2484 = vadd.f32 %v2356, 1.0
    %v2485 = vadd.f32 %v2357, 1.0
    %v2486 = vadd.f32 %v2358, 1.0
    %v2487 = vadd.f32 %v2359, 1.0
    %v2488 = vadd.f32 %v2360, 1.0
    %v2489 = vadd.f32 %v2361, 1.0
    %v2490 = vadd.f32 %v2362, 1.0
    %v2491 = vadd.f32 %v2363, 1.0
    %v2492 = vadd.f32 %v2364, 1.0
    %v2493 = vadd.f32 %v2365, 1.0
    %v2494 = vadd.f32 %v2366, 1.0
    %v2495 = vadd.f32 %v2367, 1.0
    %v2496 = vadd.f32 %v2368, 1.0
    %v2497 = vadd.f32 %v2369, 1.0
    %v2498 = vadd.f32 %v2370, 1.0
    %v2499 = vadd.f32 %v2371, 1.0
    %v2500 = vadd.f32 %v2372, 1.0
    %v2501 = vmul.f32 %v2373, %v2437
    %v2502 = vmul.f32 %v2374, %v2438
    %v2503 = vmul.f32 %v2375, %v2439
    %v2504 = vmul.f32 %v2376, %v2440
    %v2505 = vmul.f32 %v2377, %v2441
    %v2506 = vmul.f32 %v2378, %v2442
    %v2507 = vmul.f32 %v2379, %v2443
    %v2508 = vmul.f32 %v2380, %v2444
    %v2509 = vmul.f32 %v2381, %v2445
    %v2510 = vmul.f32 %v2382, %v2446
    %v2511 = vmul.f32 %v2383, %v2447
    %v2512 = vmul.f32 %v2384, %v2448
    %v2513 = vmul.f32 %v2385, %v2449
    %v2514 = vmul.f32 %v2386, %v2450
    %v2515 = vmul.f32 %v2387, %v2451
    %v2516 = vmul.f32 %v2388, %v2452
    %v2517 = vmul.f32 %v2389, %v2453
    %v2518 = vmul.f32 %v2390, %v2454
    %v2519 = vmul.f32 %v2391, %v2455
    %v2520 = vmul.f32 %v2392, %v2456
    %v2521 = vmul.f32 %v2393, %v2457
    %v2522 = vmul.f32 %v2394, %v2458
    %v2523 = vmul.f32 %v2395, %v2459
    %v2524 = vmul.f32 %v2396, %v2460
    %v2525 = vmul.f32 %v2397, %v2461
    %v2526 = vmul.f32 %v2398, %v2462
    %v2527 = vmul.f32 %v2399, %v2463
    %v2528 = vmul.f32 %v2400, %v2464
    %v2529 = vmul.f32 %v2401, %v2465
    %v2530 = vmul.f32 %v2402, %v2466
    %v2531 = vmul.f32 %v2403, %v2467
    %v2532 = vmul.f32 %v2404, %v2468
    %v2533 = vmul.f32 %v2405, %v2469
    %v2534 = vmul.f32 %v2406, %v2470
    %v2535 = vmul.f32 %v2407, %v2471
    %v2536 = vmul.f32 %v2408, %v2472
    %v2537 = vmul.f32 %v2409, %v2473
    %v2538 = vmul.f32 %v2410, %v2474
    %v2539 = vmul.f32 %v2411, %v2475
    %v2540 = vmul.f32 %v2412, %v2476
    %v2541 = vmul.f32 %v2413, %v2477
    %v2542 = vmul.f32 %v2414, %v2478
    %v2543 = vmul.f32 %v2415, %v2479
    %v2544 = vmul.f32 %v2416, %v2480
    %v2545 = vmul.f32 %v2417, %v2481
    %v2546 = vmul.f32 %v2418, %v2482
    %v2547 = vmul.f32 %v2419, %v2483
    %v2548 = vmul.f32 %v2420, %v2484
    %v2549 = vmul.f32 %v2421, %v2485
    %v2550 = vmul.f32 %v2422, %v2486
    %v2551 = vmul.f32 %v2423, %v2487
    %v2552 = vmul.f32 %v2424, %v2488
    %v2553 = vmul.f32 %v2425, %v2489
    %v2554 = vmul.f32 %v2426, %v2490
    %v2555 = vmul.f32 %v2427, %v2491
    %v2556 = vmul.f32 %v2428, %v2492
    %v2557 = vmul.f32 %v2429, %v2493
    %v2558 = vmul.f32 %v2430, %v2494
    %v2559 = vmul.f32 %v2431, %v2495
    %v2560 = vmul.f32 %v2432, %v2496
    %v2561 = vmul.f32 %v2433, %v2497
    %v2562 = vmul.f32 %v2434, %v2498
    %v2563 = vmul.f32 %v2435, %v2499
    %v2564 = vmul.f32 %v2436, %v2500
    %v2565 = vld [vmem:[#allocation8] sm:$0xff]
    %v2566 = vld [vmem:[#allocation8 + $0x8] sm:$0xff]
    %v2567 = vld [vmem:[#allocation8 + $0x10] sm:$0xff]
    %v2568 = vld [vmem:[#allocation8 + $0x18] sm:$0xff]
    %v2569 = vld [vmem:[#allocation8 + $0x20] sm:$0xff]
    %v2570 = vld [vmem:[#allocation8 + $0x28] sm:$0xff]
    %v2571 = vld [vmem:[#allocation8 + $0x30] sm:$0xff]
    %v2572 = vld [vmem:[#allocation8 + $0x38] sm:$0xff]
    %v2573 = vld [vmem:[#allocation8 + $0x40] sm:$0xff]
    %v2574 = vld [vmem:[#allocation8 + $0x48] sm:$0xff]
    %v2575 = vld [vmem:[#allocation8 + $0x50] sm:$0xff]
    %v2576 = vld [vmem:[#allocation8 + $0x58] sm:$0xff]
    %v2577 = vld [vmem:[#allocation8 + $0x60] sm:$0xff]
    %v2578 = vld [vmem:[#allocation8 + $0x68] sm:$0xff]
    %v2579 = vld [vmem:[#allocation8 + $0x70] sm:$0xff]
    %v2580 = vld [vmem:[#allocation8 + $0x78] sm:$0xff]
    %v2581 = vld [vmem:[#allocation8 + $0x80] sm:$0xff]
    %v2582 = vld [vmem:[#allocation8 + $0x88] sm:$0xff]
    %v2583 = vld [vmem:[#allocation8 + $0x90] sm:$0xff]
    %v2584 = vld [vmem:[#allocation8 + $0x98] sm:$0xff]
    %v2585 = vld [vmem:[#allocation8 + $0xa0] sm:$0xff]
    %v2586 = vld [vmem:[#allocation8 + $0xa8] sm:$0xff]
    %v2587 = vld [vmem:[#allocation8 + $0xb0] sm:$0xff]
    %v2588 = vld [vmem:[#allocation8 + $0xb8] sm:$0xff]
    %v2589 = vld [vmem:[#allocation8 + $0xc0] sm:$0xff]
    %v2590 = vld [vmem:[#allocation8 + $0xc8] sm:$0xff]
    %v2591 = vld [vmem:[#allocation8 + $0xd0] sm:$0xff]
    %v2592 = vld [vmem:[#allocation8 + $0xd8] sm:$0xff]
    %v2593 = vld [vmem:[#allocation8 + $0xe0] sm:$0xff]
    %v2594 = vld [vmem:[#allocation8 + $0xe8] sm:$0xff]
    %v2595 = vld [vmem:[#allocation8 + $0xf0] sm:$0xff]
    %v2596 = vld [vmem:[#allocation8 + $0xf8] sm:$0xff]
    %v2597 = vld [vmem:[#allocation8 + $0x100] sm:$0xff]
    %v2598 = vld [vmem:[#allocation8 + $0x108] sm:$0xff]
    %v2599 = vld [vmem:[#allocation8 + $0x110] sm:$0xff]
    %v2600 = vld [vmem:[#allocation8 + $0x118] sm:$0xff]
    %v2601 = vld [vmem:[#allocation8 + $0x120] sm:$0xff]
    %v2602 = vld [vmem:[#allocation8 + $0x128] sm:$0xff]
    %v2603 = vld [vmem:[#allocation8 + $0x130] sm:$0xff]
    %v2604 = vld [vmem:[#allocation8 + $0x138] sm:$0xff]
    %v2605 = vld [vmem:[#allocation8 + $0x140] sm:$0xff]
    %v2606 = vld [vmem:[#allocation8 + $0x148] sm:$0xff]
    %v2607 = vld [vmem:[#allocation8 + $0x150] sm:$0xff]
    %v2608 = vld [vmem:[#allocation8 + $0x158] sm:$0xff]
    %v2609 = vld [vmem:[#allocation8 + $0x160] sm:$0xff]
    %v2610 = vld [vmem:[#allocation8 + $0x168] sm:$0xff]
    %v2611 = vld [vmem:[#allocation8 + $0x170] sm:$0xff]
    %v2612 = vld [vmem:[#allocation8 + $0x178] sm:$0xff]
    %v2613 = vld [vmem:[#allocation8 + $0x180] sm:$0xff]
    %v2614 = vld [vmem:[#allocation8 + $0x188] sm:$0xff]
    %v2615 = vld [vmem:[#allocation8 + $0x190] sm:$0xff]
    %v2616 = vld [vmem:[#allocation8 + $0x198] sm:$0xff]
    %v2617 = vld [vmem:[#allocation8 + $0x1a0] sm:$0xff]
    %v2618 = vld [vmem:[#allocation8 + $0x1a8] sm:$0xff]
    %v2619 = vld [vmem:[#allocation8 + $0x1b0] sm:$0xff]
    %v2620 = vld [vmem:[#allocation8 + $0x1b8] sm:$0xff]
    %v2621 = vld [vmem:[#allocation8 + $0x1c0] sm:$0xff]
    %v2622 = vld [vmem:[#allocation8 + $0x1c8] sm:$0xff]
    %v2623 = vld [vmem:[#allocation8 + $0x1d0] sm:$0xff]
    %v2624 = vld [vmem:[#allocation8 + $0x1d8] sm:$0xff]
    %v2625 = vld [vmem:[#allocation8 + $0x1e0] sm:$0xff]
    %v2626 = vld [vmem:[#allocation8 + $0x1e8] sm:$0xff]
    %v2627 = vld [vmem:[#allocation8 + $0x1f0] sm:$0xff]
    %v2628 = vld [vmem:[#allocation8 + $0x1f8] sm:$0xff]
    %v2629 = vld [vmem:[#allocation8 + $0x200] sm:$0xff]
    %v2630 = vld [vmem:[#allocation8 + $0x208] sm:$0xff]
    %v2631 = vld [vmem:[#allocation8 + $0x210] sm:$0xff]
    %v2632 = vld [vmem:[#allocation8 + $0x218] sm:$0xff]
    %v2633 = vld [vmem:[#allocation8 + $0x220] sm:$0xff]
    %v2634 = vld [vmem:[#allocation8 + $0x228] sm:$0xff]
    %v2635 = vld [vmem:[#allocation8 + $0x230] sm:$0xff]
    %v2636 = vld [vmem:[#allocation8 + $0x238] sm:$0xff]
    %v2637 = vld [vmem:[#allocation8 + $0x240] sm:$0xff]
    %v2638 = vld [vmem:[#allocation8 + $0x248] sm:$0xff]
    %v2639 = vld [vmem:[#allocation8 + $0x250] sm:$0xff]
    %v2640 = vld [vmem:[#allocation8 + $0x258] sm:$0xff]
    %v2641 = vld [vmem:[#allocation8 + $0x260] sm:$0xff]
    %v2642 = vld [vmem:[#allocation8 + $0x268] sm:$0xff]
    %v2643 = vld [vmem:[#allocation8 + $0x270] sm:$0xff]
    %v2644 = vld [vmem:[#allocation8 + $0x278] sm:$0xff]
    %v2645 = vld [vmem:[#allocation8 + $0x280] sm:$0xff]
    %v2646 = vld [vmem:[#allocation8 + $0x288] sm:$0xff]
    %v2647 = vld [vmem:[#allocation8 + $0x290] sm:$0xff]
    %v2648 = vld [vmem:[#allocation8 + $0x298] sm:$0xff]
    %v2649 = vld [vmem:[#allocation8 + $0x2a0] sm:$0xff]
    %v2650 = vld [vmem:[#allocation8 + $0x2a8] sm:$0xff]
    %v2651 = vld [vmem:[#allocation8 + $0x2b0] sm:$0xff]
    %v2652 = vld [vmem:[#allocation8 + $0x2b8] sm:$0xff]
    %v2653 = vld [vmem:[#allocation8 + $0x2c0] sm:$0xff]
    %v2654 = vld [vmem:[#allocation8 + $0x2c8] sm:$0xff]
    %v2655 = vld [vmem:[#allocation8 + $0x2d0] sm:$0xff]
    %v2656 = vld [vmem:[#allocation8 + $0x2d8] sm:$0xff]
    %v2657 = vld [vmem:[#allocation8 + $0x2e0] sm:$0xff]
    %v2658 = vld [vmem:[#allocation8 + $0x2e8] sm:$0xff]
    %v2659 = vld [vmem:[#allocation8 + $0x2f0] sm:$0xff]
    %v2660 = vld [vmem:[#allocation8 + $0x2f8] sm:$0xff]
    %v2661 = vld [vmem:[#allocation8 + $0x300] sm:$0xff]
    %v2662 = vld [vmem:[#allocation8 + $0x308] sm:$0xff]
    %v2663 = vld [vmem:[#allocation8 + $0x310] sm:$0xff]
    %v2664 = vld [vmem:[#allocation8 + $0x318] sm:$0xff]
    %v2665 = vld [vmem:[#allocation8 + $0x320] sm:$0xff]
    %v2666 = vld [vmem:[#allocation8 + $0x328] sm:$0xff]
    %v2667 = vld [vmem:[#allocation8 + $0x330] sm:$0xff]
    %v2668 = vld [vmem:[#allocation8 + $0x338] sm:$0xff]
    %v2669 = vld [vmem:[#allocation8 + $0x340] sm:$0xff]
    %v2670 = vld [vmem:[#allocation8 + $0x348] sm:$0xff]
    %v2671 = vld [vmem:[#allocation8 + $0x350] sm:$0xff]
    %v2672 = vld [vmem:[#allocation8 + $0x358] sm:$0xff]
    %v2673 = vld [vmem:[#allocation8 + $0x360] sm:$0xff]
    %v2674 = vld [vmem:[#allocation8 + $0x368] sm:$0xff]
    %v2675 = vld [vmem:[#allocation8 + $0x370] sm:$0xff]
    %v2676 = vld [vmem:[#allocation8 + $0x378] sm:$0xff]
    %v2677 = vld [vmem:[#allocation8 + $0x380] sm:$0xff]
    %v2678 = vld [vmem:[#allocation8 + $0x388] sm:$0xff]
    %v2679 = vld [vmem:[#allocation8 + $0x390] sm:$0xff]
    %v2680 = vld [vmem:[#allocation8 + $0x398] sm:$0xff]
    %v2681 = vld [vmem:[#allocation8 + $0x3a0] sm:$0xff]
    %v2682 = vld [vmem:[#allocation8 + $0x3a8] sm:$0xff]
    %v2683 = vld [vmem:[#allocation8 + $0x3b0] sm:$0xff]
    %v2684 = vld [vmem:[#allocation8 + $0x3b8] sm:$0xff]
    %v2685 = vld [vmem:[#allocation8 + $0x3c0] sm:$0xff]
    %v2686 = vld [vmem:[#allocation8 + $0x3c8] sm:$0xff]
    %v2687 = vld [vmem:[#allocation8 + $0x3d0] sm:$0xff]
    %v2688 = vld [vmem:[#allocation8 + $0x3d8] sm:$0xff]
    %v2689 = vld [vmem:[#allocation8 + $0x3e0] sm:$0xff]
    %v2690 = vld [vmem:[#allocation8 + $0x3e8] sm:$0xff]
    %v2691 = vld [vmem:[#allocation8 + $0x3f0] sm:$0xff]
    %v2692 = vld [vmem:[#allocation8 + $0x3f8] sm:$0xff]
    %v2693 = vld [vmem:[%s4] sm:$0x3]
    %v2695 = vperm.slane %v2693, 0
    %v2696 = vperm.slane %v2693, 1
    %2699 = vmatpush.msra.mxu0 %v2595
    %2700 = vmatpush.msra.mxu0 %v2593
    %2701 = vmatpush.msra.mxu0 %v2591
    %2702 = vmatpush.msra.mxu0 %v2589
    %2703 = vmatpush.msra.mxu0 %v2587
    %2704 = vmatpush.msra.mxu0 %v2585
    %2705 = vmatpush.msra.mxu0 %v2583
    %2706 = vmatpush.msra.mxu0 %v2581
    %2707 = vmatpush.msra.mxu0 %v2579
    %2708 = vmatpush.msra.mxu0 %v2577
    %2709 = vmatpush.msra.mxu0 %v2575
    %2710 = vmatpush.msra.mxu0 %v2573
    %2711 = vmatpush.msra.mxu0 %v2571
    %2712 = vmatpush.msra.mxu0 %v2569
    %2713 = vmatpush.msra.mxu0 %v2567
    %2714 = vmatpush.msra.mxu0 %v2565
    %2715 = vmatmul.f32.gmra.mxu0 %v2501
    %v2716 = vpop.f32.mrf.mxu0
    %v2717 = vadd.f32 %v2695, %v2716
    %2718 = vmatmul.f32.gmra.mxu0 %v2505
    %v2719 = vpop.f32.mrf.mxu0
    %v2720 = vadd.f32 %v2695, %v2719
    %2721 = vmatmul.f32.gmra.mxu0 %v2509
    %v2722 = vpop.f32.mrf.mxu0
    %v2723 = vadd.f32 %v2695, %v2722
    %2724 = vmatmul.f32.gmra.mxu0 %v2513
    %v2725 = vpop.f32.mrf.mxu0
    %v2726 = vadd.f32 %v2695, %v2725
    %2727 = vmatmul.f32.gmra.mxu0 %v2517
    %v2728 = vpop.f32.mrf.mxu0
    %v2729 = vadd.f32 %v2695, %v2728
    %2730 = vmatmul.f32.gmra.mxu0 %v2521
    %v2731 = vpop.f32.mrf.mxu0
    %v2732 = vadd.f32 %v2695, %v2731
    %2733 = vmatmul.f32.gmra.mxu0 %v2525
    %v2734 = vpop.f32.mrf.mxu0
    %v2735 = vadd.f32 %v2695, %v2734
    %2736 = vmatmul.f32.gmra.mxu0 %v2529
    %v2737 = vpop.f32.mrf.mxu0
    %v2738 = vadd.f32 %v2695, %v2737
    %2739 = vmatmul.f32.gmra.mxu0 %v2533
    %v2740 = vpop.f32.mrf.mxu0
    %v2741 = vadd.f32 %v2695, %v2740
    %2742 = vmatmul.f32.gmra.mxu0 %v2537
    %v2743 = vpop.f32.mrf.mxu0
    %v2744 = vadd.f32 %v2695, %v2743
    %2745 = vmatmul.f32.gmra.mxu0 %v2541
    %v2746 = vpop.f32.mrf.mxu0
    %v2747 = vadd.f32 %v2695, %v2746
    %2748 = vmatmul.f32.gmra.mxu0 %v2545
    %v2749 = vpop.f32.mrf.mxu0
    %v2750 = vadd.f32 %v2695, %v2749
    %2751 = vmatmul.f32.gmra.mxu0 %v2549
    %v2752 = vpop.f32.mrf.mxu0
    %v2753 = vadd.f32 %v2695, %v2752
    %2754 = vmatmul.f32.gmra.mxu0 %v2553
    %v2755 = vpop.f32.mrf.mxu0
    %v2756 = vadd.f32 %v2695, %v2755
    %2757 = vmatmul.f32.gmra.mxu0 %v2557
    %v2758 = vpop.f32.mrf.mxu0
    %v2759 = vadd.f32 %v2695, %v2758
    %2760 = vmatmul.f32.gmra.mxu0 %v2561
    %v2761 = vpop.f32.mrf.mxu0
    %v2762 = vadd.f32 %v2695, %v2761
    %2763 = vdwg.mxu0
    %2764 = vmatpush.msra.mxu0 %v2627
    %2765 = vmatpush.msra.mxu0 %v2625
    %2766 = vmatpush.msra.mxu0 %v2623
    %2767 = vmatpush.msra.mxu0 %v2621
    %2768 = vmatpush.msra.mxu0 %v2619
    %2769 = vmatpush.msra.mxu0 %v2617
    %2770 = vmatpush.msra.mxu0 %v2615
    %2771 = vmatpush.msra.mxu0 %v2613
    %2772 = vmatpush.msra.mxu0 %v2611
    %2773 = vmatpush.msra.mxu0 %v2609
    %2774 = vmatpush.msra.mxu0 %v2607
    %2775 = vmatpush.msra.mxu0 %v2605
    %2776 = vmatpush.msra.mxu0 %v2603
    %2777 = vmatpush.msra.mxu0 %v2601
    %2778 = vmatpush.msra.mxu0 %v2599
    %2779 = vmatpush.msra.mxu0 %v2597
    %2780 = vmatmul.f32.gmra.mxu0 %v2502
    %v2781 = vpop.f32.mrf.mxu0
    %v2782 = vadd.f32 %v2717, %v2781
    %2783 = vmatmul.f32.gmra.mxu0 %v2506
    %v2784 = vpop.f32.mrf.mxu0
    %v2785 = vadd.f32 %v2720, %v2784
    %2786 = vmatmul.f32.gmra.mxu0 %v2510
    %v2787 = vpop.f32.mrf.mxu0
    %v2788 = vadd.f32 %v2723, %v2787
    %2789 = vmatmul.f32.gmra.mxu0 %v2514
    %v2790 = vpop.f32.mrf.mxu0
    %v2791 = vadd.f32 %v2726, %v2790
    %2792 = vmatmul.f32.gmra.mxu0 %v2518
    %v2793 = vpop.f32.mrf.mxu0
    %v2794 = vadd.f32 %v2729, %v2793
    %2795 = vmatmul.f32.gmra.mxu0 %v2522
    %v2796 = vpop.f32.mrf.mxu0
    %v2797 = vadd.f32 %v2732, %v2796
    %2798 = vmatmul.f32.gmra.mxu0 %v2526
    %v2799 = vpop.f32.mrf.mxu0
    %v2800 = vadd.f32 %v2735, %v2799
    %2801 = vmatmul.f32.gmra.mxu0 %v2530
    %v2802 = vpop.f32.mrf.mxu0
    %v2803 = vadd.f32 %v2738, %v2802
    %2804 = vmatmul.f32.gmra.mxu0 %v2534
    %v2805 = vpop.f32.mrf.mxu0
    %v2806 = vadd.f32 %v2741, %v2805
    %2807 = vmatmul.f32.gmra.mxu0 %v2538
    %v2808 = vpop.f32.mrf.mxu0
    %v2809 = vadd.f32 %v2744, %v2808
    %2810 = vmatmul.f32.gmra.mxu0 %v2542
    %v2811 = vpop.f32.mrf.mxu0
    %v2812 = vadd.f32 %v2747, %v2811
    %2813 = vmatmul.f32.gmra.mxu0 %v2546
    %v2814 = vpop.f32.mrf.mxu0
    %v2815 = vadd.f32 %v2750, %v2814
    %2816 = vmatmul.f32.gmra.mxu0 %v2550
    %v2817 = vpop.f32.mrf.mxu0
    %v2818 = vadd.f32 %v2753, %v2817
    %2819 = vmatmul.f32.gmra.mxu0 %v2554
    %v2820 = vpop.f32.mrf.mxu0
    %v2821 = vadd.f32 %v2756, %v2820
    %2822 = vmatmul.f32.gmra.mxu0 %v2558
    %v2823 = vpop.f32.mrf.mxu0
    %v2824 = vadd.f32 %v2759, %v2823
    %2825 = vmatmul.f32.gmra.mxu0 %v2562
    %v2826 = vpop.f32.mrf.mxu0
    %v2827 = vadd.f32 %v2762, %v2826
    %2828 = vdwg.mxu0
    %2829 = vmatpush.msra.mxu0 %v2659
    %2830 = vmatpush.msra.mxu0 %v2657
    %2831 = vmatpush.msra.mxu0 %v2655
    %2832 = vmatpush.msra.mxu0 %v2653
    %2833 = vmatpush.msra.mxu0 %v2651
    %2834 = vmatpush.msra.mxu0 %v2649
    %2835 = vmatpush.msra.mxu0 %v2647
    %2836 = vmatpush.msra.mxu0 %v2645
    %2837 = vmatpush.msra.mxu0 %v2643
    %2838 = vmatpush.msra.mxu0 %v2641
    %2839 = vmatpush.msra.mxu0 %v2639
    %2840 = vmatpush.msra.mxu0 %v2637
    %2841 = vmatpush.msra.mxu0 %v2635
    %2842 = vmatpush.msra.mxu0 %v2633
    %2843 = vmatpush.msra.mxu0 %v2631
    %2844 = vmatpush.msra.mxu0 %v2629
    %2845 = vmatmul.f32.gmra.mxu0 %v2503
    %v2846 = vpop.f32.mrf.mxu0
    %v2847 = vadd.f32 %v2782, %v2846
    %2848 = vmatmul.f32.gmra.mxu0 %v2507
    %v2849 = vpop.f32.mrf.mxu0
    %v2850 = vadd.f32 %v2785, %v2849
    %2851 = vmatmul.f32.gmra.mxu0 %v2511
    %v2852 = vpop.f32.mrf.mxu0
    %v2853 = vadd.f32 %v2788, %v2852
    %2854 = vmatmul.f32.gmra.mxu0 %v2515
    %v2855 = vpop.f32.mrf.mxu0
    %v2856 = vadd.f32 %v2791, %v2855
    %2857 = vmatmul.f32.gmra.mxu0 %v2519
    %v2858 = vpop.f32.mrf.mxu0
    %v2859 = vadd.f32 %v2794, %v2858
    %2860 = vmatmul.f32.gmra.mxu0 %v2523
    %v2861 = vpop.f32.mrf.mxu0
    %v2862 = vadd.f32 %v2797, %v2861
    %2863 = vmatmul.f32.gmra.mxu0 %v2527
    %v2864 = vpop.f32.mrf.mxu0
    %v2865 = vadd.f32 %v2800, %v2864
    %2866 = vmatmul.f32.gmra.mxu0 %v2531
    %v2867 = vpop.f32.mrf.mxu0
    %v2868 = vadd.f32 %v2803, %v2867
    %2869 = vmatmul.f32.gmra.mxu0 %v2535
    %v2870 = vpop.f32.mrf.mxu0
    %v2871 = vadd.f32 %v2806, %v2870
    %2872 = vmatmul.f32.gmra.mxu0 %v2539
    %v2873 = vpop.f32.mrf.mxu0
    %v2874 = vadd.f32 %v2809, %v2873
    %2875 = vmatmul.f32.gmra.mxu0 %v2543
    %v2876 = vpop.f32.mrf.mxu0
    %v2877 = vadd.f32 %v2812, %v2876
    %2878 = vmatmul.f32.gmra.mxu0 %v2547
    %v2879 = vpop.f32.mrf.mxu0
    %v2880 = vadd.f32 %v2815, %v2879
    %2881 = vmatmul.f32.gmra.mxu0 %v2551
    %v2882 = vpop.f32.mrf.mxu0
    %v2883 = vadd.f32 %v2818, %v2882
    %2884 = vmatmul.f32.gmra.mxu0 %v2555
    %v2885 = vpop.f32.mrf.mxu0
    %v2886 = vadd.f32 %v2821, %v2885
    %2887 = vmatmul.f32.gmra.mxu0 %v2559
    %v2888 = vpop.f32.mrf.mxu0
    %v2889 = vadd.f32 %v2824, %v2888
    %2890 = vmatmul.f32.gmra.mxu0 %v2563
    %v2891 = vpop.f32.mrf.mxu0
    %v2892 = vadd.f32 %v2827, %v2891
    %2893 = vdwg.mxu0
    %2894 = vmatpush.msra.mxu0 %v2691
    %2895 = vmatpush.msra.mxu0 %v2689
    %2896 = vmatpush.msra.mxu0 %v2687
    %2897 = vmatpush.msra.mxu0 %v2685
    %2898 = vmatpush.msra.mxu0 %v2683
    %2899 = vmatpush.msra.mxu0 %v2681
    %2900 = vmatpush.msra.mxu0 %v2679
    %2901 = vmatpush.msra.mxu0 %v2677
    %2902 = vmatpush.msra.mxu0 %v2675
    %2903 = vmatpush.msra.mxu0 %v2673
    %2904 = vmatpush.msra.mxu0 %v2671
    %2905 = vmatpush.msra.mxu0 %v2669
    %2906 = vmatpush.msra.mxu0 %v2667
    %2907 = vmatpush.msra.mxu0 %v2665
    %2908 = vmatpush.msra.mxu0 %v2663
    %2909 = vmatpush.msra.mxu0 %v2661
    %2910 = vmatmul.f32.gmra.mxu0 %v2504
    %v2911 = vpop.f32.mrf.mxu0
    %v2912 = vadd.f32 %v2847, %v2911
    %2913 = vmatmul.f32.gmra.mxu0 %v2508
    %v2914 = vpop.f32.mrf.mxu0
    %v2915 = vadd.f32 %v2850, %v2914
    %2916 = vmatmul.f32.gmra.mxu0 %v2512
    %v2917 = vpop.f32.mrf.mxu0
    %v2918 = vadd.f32 %v2853, %v2917
    %2919 = vmatmul.f32.gmra.mxu0 %v2516
    %v2920 = vpop.f32.mrf.mxu0
    %v2921 = vadd.f32 %v2856, %v2920
    %2922 = vmatmul.f32.gmra.mxu0 %v2520
    %v2923 = vpop.f32.mrf.mxu0
    %v2924 = vadd.f32 %v2859, %v2923
    %2925 = vmatmul.f32.gmra.mxu0 %v2524
    %v2926 = vpop.f32.mrf.mxu0
    %v2927 = vadd.f32 %v2862, %v2926
    %2928 = vmatmul.f32.gmra.mxu0 %v2528
    %v2929 = vpop.f32.mrf.mxu0
    %v2930 = vadd.f32 %v2865, %v2929
    %2931 = vmatmul.f32.gmra.mxu0 %v2532
    %v2932 = vpop.f32.mrf.mxu0
    %v2933 = vadd.f32 %v2868, %v2932
    %2934 = vmatmul.f32.gmra.mxu0 %v2536
    %v2935 = vpop.f32.mrf.mxu0
    %v2936 = vadd.f32 %v2871, %v2935
    %2937 = vmatmul.f32.gmra.mxu0 %v2540
    %v2938 = vpop.f32.mrf.mxu0
    %v2939 = vadd.f32 %v2874, %v2938
    %2940 = vmatmul.f32.gmra.mxu0 %v2544
    %v2941 = vpop.f32.mrf.mxu0
    %v2942 = vadd.f32 %v2877, %v2941
    %2943 = vmatmul.f32.gmra.mxu0 %v2548
    %v2944 = vpop.f32.mrf.mxu0
    %v2945 = vadd.f32 %v2880, %v2944
    %2946 = vmatmul.f32.gmra.mxu0 %v2552
    %v2947 = vpop.f32.mrf.mxu0
    %v2948 = vadd.f32 %v2883, %v2947
    %2949 = vmatmul.f32.gmra.mxu0 %v2556
    %v2950 = vpop.f32.mrf.mxu0
    %v2951 = vadd.f32 %v2886, %v2950
    %2952 = vmatmul.f32.gmra.mxu0 %v2560
    %v2953 = vpop.f32.mrf.mxu0
    %v2954 = vadd.f32 %v2889, %v2953
    %2955 = vmatmul.f32.gmra.mxu0 %v2564
    %v2956 = vpop.f32.mrf.mxu0
    %v2957 = vadd.f32 %v2892, %v2956
    %2958 = vdwg.mxu0
    %2959 = vmatpush.msra.mxu0 %v2596
    %2960 = vmatpush.msra.mxu0 %v2594
    %2961 = vmatpush.msra.mxu0 %v2592
    %2962 = vmatpush.msra.mxu0 %v2590
    %2963 = vmatpush.msra.mxu0 %v2588
    %2964 = vmatpush.msra.mxu0 %v2586
    %2965 = vmatpush.msra.mxu0 %v2584
    %2966 = vmatpush.msra.mxu0 %v2582
    %2967 = vmatpush.msra.mxu0 %v2580
    %2968 = vmatpush.msra.mxu0 %v2578
    %2969 = vmatpush.msra.mxu0 %v2576
    %2970 = vmatpush.msra.mxu0 %v2574
    %2971 = vmatpush.msra.mxu0 %v2572
    %2972 = vmatpush.msra.mxu0 %v2570
    %2973 = vmatpush.msra.mxu0 %v2568
    %2974 = vmatpush.msra.mxu0 %v2566
    %2975 = vmatmul.f32.gmra.mxu0 %v2501
    %v2976 = vpop.f32.mrf.mxu0
    %v2977 = vadd.f32 %v2696, %v2976
    %2978 = vmatmul.f32.gmra.mxu0 %v2505
    %v2979 = vpop.f32.mrf.mxu0
    %v2980 = vadd.f32 %v2696, %v2979
    %2981 = vmatmul.f32.gmra.mxu0 %v2509
    %v2982 = vpop.f32.mrf.mxu0
    %v2983 = vadd.f32 %v2696, %v2982
    %2984 = vmatmul.f32.gmra.mxu0 %v2513
    %v2985 = vpop.f32.mrf.mxu0
    %v2986 = vadd.f32 %v2696, %v2985
    %2987 = vmatmul.f32.gmra.mxu0 %v2517
    %v2988 = vpop.f32.mrf.mxu0
    %v2989 = vadd.f32 %v2696, %v2988
    %2990 = vmatmul.f32.gmra.mxu0 %v2521
    %v2991 = vpop.f32.mrf.mxu0
    %v2992 = vadd.f32 %v2696, %v2991
    %2993 = vmatmul.f32.gmra.mxu0 %v2525
    %v2994 = vpop.f32.mrf.mxu0
    %v2995 = vadd.f32 %v2696, %v2994
    %2996 = vmatmul.f32.gmra.mxu0 %v2529
    %v2997 = vpop.f32.mrf.mxu0
    %v2998 = vadd.f32 %v2696, %v2997
    %2999 = vmatmul.f32.gmra.mxu0 %v2533
    %v3000 = vpop.f32.mrf.mxu0
    %v3001 = vadd.f32 %v2696, %v3000
    %3002 = vmatmul.f32.gmra.mxu0 %v2537
    %v3003 = vpop.f32.mrf.mxu0
    %v3004 = vadd.f32 %v2696, %v3003
    %3005 = vmatmul.f32.gmra.mxu0 %v2541
    %v3006 = vpop.f32.mrf.mxu0
    %v3007 = vadd.f32 %v2696, %v3006
    %3008 = vmatmul.f32.gmra.mxu0 %v2545
    %v3009 = vpop.f32.mrf.mxu0
    %v3010 = vadd.f32 %v2696, %v3009
    %3011 = vmatmul.f32.gmra.mxu0 %v2549
    %v3012 = vpop.f32.mrf.mxu0
    %v3013 = vadd.f32 %v2696, %v3012
    %3014 = vmatmul.f32.gmra.mxu0 %v2553
    %v3015 = vpop.f32.mrf.mxu0
    %v3016 = vadd.f32 %v2696, %v3015
    %3017 = vmatmul.f32.gmra.mxu0 %v2557
    %v3018 = vpop.f32.mrf.mxu0
    %v3019 = vadd.f32 %v2696, %v3018
    %3020 = vmatmul.f32.gmra.mxu0 %v2561
    %v3021 = vpop.f32.mrf.mxu0
    %v3022 = vadd.f32 %v2696, %v3021
    %3023 = vdwg.mxu0
    %3024 = vmatpush.msra.mxu0 %v2628
    %3025 = vmatpush.msra.mxu0 %v2626
    %3026 = vmatpush.msra.mxu0 %v2624
    %3027 = vmatpush.msra.mxu0 %v2622
    %3028 = vmatpush.msra.mxu0 %v2620
    %3029 = vmatpush.msra.mxu0 %v2618
    %3030 = vmatpush.msra.mxu0 %v2616
    %3031 = vmatpush.msra.mxu0 %v2614
    %3032 = vmatpush.msra.mxu0 %v2612
    %3033 = vmatpush.msra.mxu0 %v2610
    %3034 = vmatpush.msra.mxu0 %v2608
    %3035 = vmatpush.msra.mxu0 %v2606
    %3036 = vmatpush.msra.mxu0 %v2604
    %3037 = vmatpush.msra.mxu0 %v2602
    %3038 = vmatpush.msra.mxu0 %v2600
    %3039 = vmatpush.msra.mxu0 %v2598
    %3040 = vmatmul.f32.gmra.mxu0 %v2502
    %v3041 = vpop.f32.mrf.mxu0
    %v3042 = vadd.f32 %v2977, %v3041
    %3043 = vmatmul.f32.gmra.mxu0 %v2506
    %v3044 = vpop.f32.mrf.mxu0
    %v3045 = vadd.f32 %v2980, %v3044
    %3046 = vmatmul.f32.gmra.mxu0 %v2510
    %v3047 = vpop.f32.mrf.mxu0
    %v3048 = vadd.f32 %v2983, %v3047
    %3049 = vmatmul.f32.gmra.mxu0 %v2514
    %v3050 = vpop.f32.mrf.mxu0
    %v3051 = vadd.f32 %v2986, %v3050
    %3052 = vmatmul.f32.gmra.mxu0 %v2518
    %v3053 = vpop.f32.mrf.mxu0
    %v3054 = vadd.f32 %v2989, %v3053
    %3055 = vmatmul.f32.gmra.mxu0 %v2522
    %v3056 = vpop.f32.mrf.mxu0
    %v3057 = vadd.f32 %v2992, %v3056
    %3058 = vmatmul.f32.gmra.mxu0 %v2526
    %v3059 = vpop.f32.mrf.mxu0
    %v3060 = vadd.f32 %v2995, %v3059
    %3061 = vmatmul.f32.gmra.mxu0 %v2530
    %v3062 = vpop.f32.mrf.mxu0
    %v3063 = vadd.f32 %v2998, %v3062
    %3064 = vmatmul.f32.gmra.mxu0 %v2534
    %v3065 = vpop.f32.mrf.mxu0
    %v3066 = vadd.f32 %v3001, %v3065
    %3067 = vmatmul.f32.gmra.mxu0 %v2538
    %v3068 = vpop.f32.mrf.mxu0
    %v3069 = vadd.f32 %v3004, %v3068
    %3070 = vmatmul.f32.gmra.mxu0 %v2542
    %v3071 = vpop.f32.mrf.mxu0
    %v3072 = vadd.f32 %v3007, %v3071
    %3073 = vmatmul.f32.gmra.mxu0 %v2546
    %v3074 = vpop.f32.mrf.mxu0
    %v3075 = vadd.f32 %v3010, %v3074
    %3076 = vmatmul.f32.gmra.mxu0 %v2550
    %v3077 = vpop.f32.mrf.mxu0
    %v3078 = vadd.f32 %v3013, %v3077
    %3079 = vmatmul.f32.gmra.mxu0 %v2554
    %v3080 = vpop.f32.mrf.mxu0
    %v3081 = vadd.f32 %v3016, %v3080
    %3082 = vmatmul.f32.gmra.mxu0 %v2558
    %v3083 = vpop.f32.mrf.mxu0
    %v3084 = vadd.f32 %v3019, %v3083
    %3085 = vmatmul.f32.gmra.mxu0 %v2562
    %v3086 = vpop.f32.mrf.mxu0
    %v3087 = vadd.f32 %v3022, %v3086
    %3088 = vdwg.mxu0
    %3089 = vmatpush.msra.mxu0 %v2660
    %3090 = vmatpush.msra.mxu0 %v2658
    %3091 = vmatpush.msra.mxu0 %v2656
    %3092 = vmatpush.msra.mxu0 %v2654
    %3093 = vmatpush.msra.mxu0 %v2652
    %3094 = vmatpush.msra.mxu0 %v2650
    %3095 = vmatpush.msra.mxu0 %v2648
    %3096 = vmatpush.msra.mxu0 %v2646
    %3097 = vmatpush.msra.mxu0 %v2644
    %3098 = vmatpush.msra.mxu0 %v2642
    %3099 = vmatpush.msra.mxu0 %v2640
    %3100 = vmatpush.msra.mxu0 %v2638
    %3101 = vmatpush.msra.mxu0 %v2636
    %3102 = vmatpush.msra.mxu0 %v2634
    %3103 = vmatpush.msra.mxu0 %v2632
    %3104 = vmatpush.msra.mxu0 %v2630
    %3105 = vmatmul.f32.gmra.mxu0 %v2503
    %v3106 = vpop.f32.mrf.mxu0
    %v3107 = vadd.f32 %v3042, %v3106
    %3108 = vmatmul.f32.gmra.mxu0 %v2507
    %v3109 = vpop.f32.mrf.mxu0
    %v3110 = vadd.f32 %v3045, %v3109
    %3111 = vmatmul.f32.gmra.mxu0 %v2511
    %v3112 = vpop.f32.mrf.mxu0
    %v3113 = vadd.f32 %v3048, %v3112
    %3114 = vmatmul.f32.gmra.mxu0 %v2515
    %v3115 = vpop.f32.mrf.mxu0
    %v3116 = vadd.f32 %v3051, %v3115
    %3117 = vmatmul.f32.gmra.mxu0 %v2519
    %v3118 = vpop.f32.mrf.mxu0
    %v3119 = vadd.f32 %v3054, %v3118
    %3120 = vmatmul.f32.gmra.mxu0 %v2523
    %v3121 = vpop.f32.mrf.mxu0
    %v3122 = vadd.f32 %v3057, %v3121
    %3123 = vmatmul.f32.gmra.mxu0 %v2527
    %v3124 = vpop.f32.mrf.mxu0
    %v3125 = vadd.f32 %v3060, %v3124
    %3126 = vmatmul.f32.gmra.mxu0 %v2531
    %v3127 = vpop.f32.mrf.mxu0
    %v3128 = vadd.f32 %v3063, %v3127
    %3129 = vmatmul.f32.gmra.mxu0 %v2535
    %v3130 = vpop.f32.mrf.mxu0
    %v3131 = vadd.f32 %v3066, %v3130
    %3132 = vmatmul.f32.gmra.mxu0 %v2539
    %v3133 = vpop.f32.mrf.mxu0
    %v3134 = vadd.f32 %v3069, %v3133
    %3135 = vmatmul.f32.gmra.mxu0 %v2543
    %v3136 = vpop.f32.mrf.mxu0
    %v3137 = vadd.f32 %v3072, %v3136
    %3138 = vmatmul.f32.gmra.mxu0 %v2547
    %v3139 = vpop.f32.mrf.mxu0
    %v3140 = vadd.f32 %v3075, %v3139
    %3141 = vmatmul.f32.gmra.mxu0 %v2551
    %v3142 = vpop.f32.mrf.mxu0
    %v3143 = vadd.f32 %v3078, %v3142
    %3144 = vmatmul.f32.gmra.mxu0 %v2555
    %v3145 = vpop.f32.mrf.mxu0
    %v3146 = vadd.f32 %v3081, %v3145
    %3147 = vmatmul.f32.gmra.mxu0 %v2559
    %v3148 = vpop.f32.mrf.mxu0
    %v3149 = vadd.f32 %v3084, %v3148
    %3150 = vmatmul.f32.gmra.mxu0 %v2563
    %v3151 = vpop.f32.mrf.mxu0
    %v3152 = vadd.f32 %v3087, %v3151
    %3153 = vdwg.mxu0
    %3154 = vmatpush.msra.mxu0 %v2692
    %3155 = vmatpush.msra.mxu0 %v2690
    %3156 = vmatpush.msra.mxu0 %v2688
    %3157 = vmatpush.msra.mxu0 %v2686
    %3158 = vmatpush.msra.mxu0 %v2684
    %3159 = vmatpush.msra.mxu0 %v2682
    %3160 = vmatpush.msra.mxu0 %v2680
    %3161 = vmatpush.msra.mxu0 %v2678
    %3162 = vmatpush.msra.mxu0 %v2676
    %3163 = vmatpush.msra.mxu0 %v2674
    %3164 = vmatpush.msra.mxu0 %v2672
    %3165 = vmatpush.msra.mxu0 %v2670
    %3166 = vmatpush.msra.mxu0 %v2668
    %3167 = vmatpush.msra.mxu0 %v2666
    %3168 = vmatpush.msra.mxu0 %v2664
    %3169 = vmatpush.msra.mxu0 %v2662
    %3170 = vmatmul.f32.gmra.mxu0 %v2504
    %v3171 = vpop.f32.mrf.mxu0
    %v3172 = vadd.f32 %v3107, %v3171
    %3173 = vmatmul.f32.gmra.mxu0 %v2508
    %v3174 = vpop.f32.mrf.mxu0
    %v3175 = vadd.f32 %v3110, %v3174
    %3176 = vmatmul.f32.gmra.mxu0 %v2512
    %v3177 = vpop.f32.mrf.mxu0
    %v3178 = vadd.f32 %v3113, %v3177
    %3179 = vmatmul.f32.gmra.mxu0 %v2516
    %v3180 = vpop.f32.mrf.mxu0
    %v3181 = vadd.f32 %v3116, %v3180
    %3182 = vmatmul.f32.gmra.mxu0 %v2520
    %v3183 = vpop.f32.mrf.mxu0
    %v3184 = vadd.f32 %v3119, %v3183
    %3185 = vmatmul.f32.gmra.mxu0 %v2524
    %v3186 = vpop.f32.mrf.mxu0
    %v3187 = vadd.f32 %v3122, %v3186
    %3188 = vmatmul.f32.gmra.mxu0 %v2528
    %v3189 = vpop.f32.mrf.mxu0
    %v3190 = vadd.f32 %v3125, %v3189
    %3191 = vmatmul.f32.gmra.mxu0 %v2532
    %v3192 = vpop.f32.mrf.mxu0
    %v3193 = vadd.f32 %v3128, %v3192
    %3194 = vmatmul.f32.gmra.mxu0 %v2536
    %v3195 = vpop.f32.mrf.mxu0
    %v3196 = vadd.f32 %v3131, %v3195
    %3197 = vmatmul.f32.gmra.mxu0 %v2540
    %v3198 = vpop.f32.mrf.mxu0
    %v3199 = vadd.f32 %v3134, %v3198
    %3200 = vmatmul.f32.gmra.mxu0 %v2544
    %v3201 = vpop.f32.mrf.mxu0
    %v3202 = vadd.f32 %v3137, %v3201
    %3203 = vmatmul.f32.gmra.mxu0 %v2548
    %v3204 = vpop.f32.mrf.mxu0
    %v3205 = vadd.f32 %v3140, %v3204
    %3206 = vmatmul.f32.gmra.mxu0 %v2552
    %v3207 = vpop.f32.mrf.mxu0
    %v3208 = vadd.f32 %v3143, %v3207
    %3209 = vmatmul.f32.gmra.mxu0 %v2556
    %v3210 = vpop.f32.mrf.mxu0
    %v3211 = vadd.f32 %v3146, %v3210
    %3212 = vmatmul.f32.gmra.mxu0 %v2560
    %v3213 = vpop.f32.mrf.mxu0
    %v3214 = vadd.f32 %v3149, %v3213
    %3215 = vmatmul.f32.gmra.mxu0 %v2564
    %v3216 = vpop.f32.mrf.mxu0
    %v3217 = vadd.f32 %v3152, %v3216
    %3218 = vdwg.mxu0
    %v3219 = vmul.f32 %v2912, 0.70710677
    %v3220 = vmul.f32 %v3172, 0.70710677
    %v3221 = vmul.f32 %v2915, 0.70710677
    %v3222 = vmul.f32 %v3175, 0.70710677
    %v3223 = vmul.f32 %v2918, 0.70710677
    %v3224 = vmul.f32 %v3178, 0.70710677
    %v3225 = vmul.f32 %v2921, 0.70710677
    %v3226 = vmul.f32 %v3181, 0.70710677
    %v3227 = vmul.f32 %v2924, 0.70710677
    %v3228 = vmul.f32 %v3184, 0.70710677
    %v3229 = vmul.f32 %v2927, 0.70710677
    %v3230 = vmul.f32 %v3187, 0.70710677
    %v3231 = vmul.f32 %v2930, 0.70710677
    %v3232 = vmul.f32 %v3190, 0.70710677
    %v3233 = vmul.f32 %v2933, 0.70710677
    %v3234 = vmul.f32 %v3193, 0.70710677
    %v3235 = vmul.f32 %v2936, 0.70710677
    %v3236 = vmul.f32 %v3196, 0.70710677
    %v3237 = vmul.f32 %v2939, 0.70710677
    %v3238 = vmul.f32 %v3199, 0.70710677
    %v3239 = vmul.f32 %v2942, 0.70710677
    %v3240 = vmul.f32 %v3202, 0.70710677
    %v3241 = vmul.f32 %v2945, 0.70710677
    %v3242 = vmul.f32 %v3205, 0.70710677
    %v3243 = vmul.f32 %v2948, 0.70710677
    %v3244 = vmul.f32 %v3208, 0.70710677
    %v3245 = vmul.f32 %v2951, 0.70710677
    %v3246 = vmul.f32 %v3211, 0.70710677
    %v3247 = vmul.f32 %v2954, 0.70710677
    %v3248 = vmul.f32 %v3214, 0.70710677
    %v3249 = vmul.f32 %v2957, 0.70710677
    %v3250 = vmul.f32 %v3217, 0.70710677
    %v3251 = vmax.f32 %v3219, -4.0
    %v3252 = vmax.f32 %v3220, -4.0
    %v3253 = vmax.f32 %v3221, -4.0
    %v3254 = vmax.f32 %v3222, -4.0
    %v3255 = vmax.f32 %v3223, -4.0
    %v3256 = vmax.f32 %v3224, -4.0
    %v3257 = vmax.f32 %v3225, -4.0
    %v3258 = vmax.f32 %v3226, -4.0
    %v3259 = vmax.f32 %v3227, -4.0
    %v3260 = vmax.f32 %v3228, -4.0
    %v3261 = vmax.f32 %v3229, -4.0
    %v3262 = vmax.f32 %v3230, -4.0
    %v3263 = vmax.f32 %v3231, -4.0
    %v3264 = vmax.f32 %v3232, -4.0
    %v3265 = vmax.f32 %v3233, -4.0
    %v3266 = vmax.f32 %v3234, -4.0
    %v3267 = vmax.f32 %v3235, -4.0
    %v3268 = vmax.f32 %v3236, -4.0
    %v3269 = vmax.f32 %v3237, -4.0
    %v3270 = vmax.f32 %v3238, -4.0
    %v3271 = vmax.f32 %v3239, -4.0
    %v3272 = vmax.f32 %v3240, -4.0
    %v3273 = vmax.f32 %v3241, -4.0
    %v3274 = vmax.f32 %v3242, -4.0
    %v3275 = vmax.f32 %v3243, -4.0
    %v3276 = vmax.f32 %v3244, -4.0
    %v3277 = vmax.f32 %v3245, -4.0
    %v3278 = vmax.f32 %v3246, -4.0
    %v3279 = vmax.f32 %v3247, -4.0
    %v3280 = vmax.f32 %v3248, -4.0
    %v3281 = vmax.f32 %v3249, -4.0
    %v3282 = vmax.f32 %v3250, -4.0
    %v3283 = vmin.f32 %v3251, 4.0
    %v3284 = vmin.f32 %v3252, 4.0
    %v3285 = vmin.f32 %v3253, 4.0
    %v3286 = vmin.f32 %v3254, 4.0
    %v3287 = vmin.f32 %v3255, 4.0
    %v3288 = vmin.f32 %v3256, 4.0
    %v3289 = vmin.f32 %v3257, 4.0
    %v3290 = vmin.f32 %v3258, 4.0
    %v3291 = vmin.f32 %v3259, 4.0
    %v3292 = vmin.f32 %v3260, 4.0
    %v3293 = vmin.f32 %v3261, 4.0
    %v3294 = vmin.f32 %v3262, 4.0
    %v3295 = vmin.f32 %v3263, 4.0
    %v3296 = vmin.f32 %v3264, 4.0
    %v3297 = vmin.f32 %v3265, 4.0
    %v3298 = vmin.f32 %v3266, 4.0
    %v3299 = vmin.f32 %v3267, 4.0
    %v3300 = vmin.f32 %v3268, 4.0
    %v3301 = vmin.f32 %v3269, 4.0
    %v3302 = vmin.f32 %v3270, 4.0
    %v3303 = vmin.f32 %v3271, 4.0
    %v3304 = vmin.f32 %v3272, 4.0
    %v3305 = vmin.f32 %v3273, 4.0
    %v3306 = vmin.f32 %v3274, 4.0
    %v3307 = vmin.f32 %v3275, 4.0
    %v3308 = vmin.f32 %v3276, 4.0
    %v3309 = vmin.f32 %v3277, 4.0
    %v3310 = vmin.f32 %v3278, 4.0
    %v3311 = vmin.f32 %v3279, 4.0
    %v3312 = vmin.f32 %v3280, 4.0
    %v3313 = vmin.f32 %v3281, 4.0
    %v3314 = vmin.f32 %v3282, 4.0
    %v3315 = vmul.f32 %v3283, %v3283
    %v3316 = vmul.f32 %v3284, %v3284
    %v3317 = vmul.f32 %v3285, %v3285
    %v3318 = vmul.f32 %v3286, %v3286
    %v3319 = vmul.f32 %v3287, %v3287
    %v3320 = vmul.f32 %v3288, %v3288
    %v3321 = vmul.f32 %v3289, %v3289
    %v3322 = vmul.f32 %v3290, %v3290
    %v3323 = vmul.f32 %v3291, %v3291
    %v3324 = vmul.f32 %v3292, %v3292
    %v3325 = vmul.f32 %v3293, %v3293
    %v3326 = vmul.f32 %v3294, %v3294
    %v3327 = vmul.f32 %v3295, %v3295
    %v3328 = vmul.f32 %v3296, %v3296
    %v3329 = vmul.f32 %v3297, %v3297
    %v3330 = vmul.f32 %v3298, %v3298
    %v3331 = vmul.f32 %v3299, %v3299
    %v3332 = vmul.f32 %v3300, %v3300
    %v3333 = vmul.f32 %v3301, %v3301
    %v3334 = vmul.f32 %v3302, %v3302
    %v3335 = vmul.f32 %v3303, %v3303
    %v3336 = vmul.f32 %v3304, %v3304
    %v3337 = vmul.f32 %v3305, %v3305
    %v3338 = vmul.f32 %v3306, %v3306
    %v3339 = vmul.f32 %v3307, %v3307
    %v3340 = vmul.f32 %v3308, %v3308
    %v3341 = vmul.f32 %v3309, %v3309
    %v3342 = vmul.f32 %v3310, %v3310
    %v3343 = vmul.f32 %v3311, %v3311
    %v3344 = vmul.f32 %v3312, %v3312
    %v3345 = vmul.f32 %v3313, %v3313
    %v3346 = vmul.f32 %v3314, %v3314
    %v3347 = vmul.f32 %v3315, -2.7261424e-10
    %v3348 = vmul.f32 %v3316, -2.7261424e-10
    %v3349 = vmul.f32 %v3317, -2.7261424e-10
    %v3350 = vmul.f32 %v3318, -2.7261424e-10
    %v3351 = vmul.f32 %v3319, -2.7261424e-10
    %v3352 = vmul.f32 %v3320, -2.7261424e-10
    %v3353 = vmul.f32 %v3321, -2.7261424e-10
    %v3354 = vmul.f32 %v3322, -2.7261424e-10
    %v3355 = vmul.f32 %v3323, -2.7261424e-10
    %v3356 = vmul.f32 %v3324, -2.7261424e-10
    %v3357 = vmul.f32 %v3325, -2.7261424e-10
    %v3358 = vmul.f32 %v3326, -2.7261424e-10
    %v3359 = vmul.f32 %v3327, -2.7261424e-10
    %v3360 = vmul.f32 %v3328, -2.7261424e-10
    %v3361 = vmul.f32 %v3329, -2.7261424e-10
    %v3362 = vmul.f32 %v3330, -2.7261424e-10
    %v3363 = vmul.f32 %v3331, -2.7261424e-10
    %v3364 = vmul.f32 %v3332, -2.7261424e-10
    %v3365 = vmul.f32 %v3333, -2.7261424e-10
    %v3366 = vmul.f32 %v3334, -2.7261424e-10
    %v3367 = vmul.f32 %v3335, -2.7261424e-10
    %v3368 = vmul.f32 %v3336, -2.7261424e-10
    %v3369 = vmul.f32 %v3337, -2.7261424e-10
    %v3370 = vmul.f32 %v3338, -2.7261424e-10
    %v3371 = vmul.f32 %v3339, -2.7261424e-10
    %v3372 = vmul.f32 %v3340, -2.7261424e-10
    %v3373 = vmul.f32 %v3341, -2.7261424e-10
    %v3374 = vmul.f32 %v3342, -2.7261424e-10
    %v3375 = vmul.f32 %v3343, -2.7261424e-10
    %v3376 = vmul.f32 %v3344, -2.7261424e-10
    %v3377 = vmul.f32 %v3345, -2.7261424e-10
    %v3378 = vmul.f32 %v3346, -2.7261424e-10
    %v3379 = vadd.f32 %v3347, 2.7706815e-08
    %v3380 = vadd.f32 %v3348, 2.7706815e-08
    %v3381 = vadd.f32 %v3349, 2.7706815e-08
    %v3382 = vadd.f32 %v3350, 2.7706815e-08
    %v3383 = vadd.f32 %v3351, 2.7706815e-08
    %v3384 = vadd.f32 %v3352, 2.7706815e-08
    %v3385 = vadd.f32 %v3353, 2.7706815e-08
    %v3386 = vadd.f32 %v3354, 2.7706815e-08
    %v3387 = vadd.f32 %v3355, 2.7706815e-08
    %v3388 = vadd.f32 %v3356, 2.7706815e-08
    %v3389 = vadd.f32 %v3357, 2.7706815e-08
    %v3390 = vadd.f32 %v3358, 2.7706815e-08
    %v3391 = vadd.f32 %v3359, 2.7706815e-08
    %v3392 = vadd.f32 %v3360, 2.7706815e-08
    %v3393 = vadd.f32 %v3361, 2.7706815e-08
    %v3394 = vadd.f32 %v3362, 2.7706815e-08
    %v3395 = vadd.f32 %v3363, 2.7706815e-08
    %v3396 = vadd.f32 %v3364, 2.7706815e-08
    %v3397 = vadd.f32 %v3365, 2.7706815e-08
    %v3398 = vadd.f32 %v3366, 2.7706815e-08
    %v3399 = vadd.f32 %v3367, 2.7706815e-08
    %v3400 = vadd.f32 %v3368, 2.7706815e-08
    %v3401 = vadd.f32 %v3369, 2.7706815e-08
    %v3402 = vadd.f32 %v3370, 2.7706815e-08
    %v3403 = vadd.f32 %v3371, 2.7706815e-08
    %v3404 = vadd.f32 %v3372, 2.7706815e-08
    %v3405 = vadd.f32 %v3373, 2.7706815e-08
    %v3406 = vadd.f32 %v3374, 2.7706815e-08
    %v3407 = vadd.f32 %v3375, 2.7706815e-08
    %v3408 = vadd.f32 %v3376, 2.7706815e-08
    %v3409 = vadd.f32 %v3377, 2.7706815e-08
    %v3410 = vadd.f32 %v3378, 2.7706815e-08
    %v3411 = vmul.f32 %v3379, %v3315
    %v3412 = vmul.f32 %v3380, %v3316
    %v3413 = vmul.f32 %v3381, %v3317
    %v3414 = vmul.f32 %v3382, %v3318
    %v3415 = vmul.f32 %v3383, %v3319
    %v3416 = vmul.f32 %v3384, %v3320
    %v3417 = vmul.f32 %v3385, %v3321
    %v3418 = vmul.f32 %v3386, %v3322
    %v3419 = vmul.f32 %v3387, %v3323
    %v3420 = vmul.f32 %v3388, %v3324
    %v3421 = vmul.f32 %v3389, %v3325
    %v3422 = vmul.f32 %v3390, %v3326
    %v3423 = vmul.f32 %v3391, %v3327
    %v3424 = vmul.f32 %v3392, %v3328
    %v3425 = vmul.f32 %v3393, %v3329
    %v3426 = vmul.f32 %v3394, %v3330
    %v3427 = vmul.f32 %v3395, %v3331
    %v3428 = vmul.f32 %v3396, %v3332
    %v3429 = vmul.f32 %v3397, %v3333
    %v3430 = vmul.f32 %v3398, %v3334
    %v3431 = vmul.f32 %v3399, %v3335
    %v3432 = vmul.f32 %v3400, %v3336
    %v3433 = vmul.f32 %v3401, %v3337
    %v3434 = vmul.f32 %v3402, %v3338
    %v3435 = vmul.f32 %v3403, %v3339
    %v3436 = vmul.f32 %v3404, %v3340
    %v3437 = vmul.f32 %v3405, %v3341
    %v3438 = vmul.f32 %v3406, %v3342
    %v3439 = vmul.f32 %v3407, %v3343
    %v3440 = vmul.f32 %v3408, %v3344
    %v3441 = vmul.f32 %v3409, %v3345
    %v3442 = vmul.f32 %v3410, %v3346
    %v3443 = vadd.f32 %v3411, -2.101024e-06
    %v3444 = vadd.f32 %v3412, -2.101024e-06
    %v3445 = vadd.f32 %v3413, -2.101024e-06
    %v3446 = vadd.f32 %v3414, -2.101024e-06
    %v3447 = vadd.f32 %v3415, -2.101024e-06
    %v3448 = vadd.f32 %v3416, -2.101024e-06
    %v3449 = vadd.f32 %v3417, -2.101024e-06
    %v3450 = vadd.f32 %v3418, -2.101024e-06
    %v3451 = vadd.f32 %v3419, -2.101024e-06
    %v3452 = vadd.f32 %v3420, -2.101024e-06
    %v3453 = vadd.f32 %v3421, -2.101024e-06
    %v3454 = vadd.f32 %v3422, -2.101024e-06
    %v3455 = vadd.f32 %v3423, -2.101024e-06
    %v3456 = vadd.f32 %v3424, -2.101024e-06
    %v3457 = vadd.f32 %v3425, -2.101024e-06
    %v3458 = vadd.f32 %v3426, -2.101024e-06
    %v3459 = vadd.f32 %v3427, -2.101024e-06
    %v3460 = vadd.f32 %v3428, -2.101024e-06
    %v3461 = vadd.f32 %v3429, -2.101024e-06
    %v3462 = vadd.f32 %v3430, -2.101024e-06
    %v3463 = vadd.f32 %v3431, -2.101024e-06
    %v3464 = vadd.f32 %v3432, -2.101024e-06
    %v3465 = vadd.f32 %v3433, -2.101024e-06
    %v3466 = vadd.f32 %v3434, -2.101024e-06
    %v3467 = vadd.f32 %v3435, -2.101024e-06
    %v3468 = vadd.f32 %v3436, -2.101024e-06
    %v3469 = vadd.f32 %v3437, -2.101024e-06
    %v3470 = vadd.f32 %v3438, -2.101024e-06
    %v3471 = vadd.f32 %v3439, -2.101024e-06
    %v3472 = vadd.f32 %v3440, -2.101024e-06
    %v3473 = vadd.f32 %v3441, -2.101024e-06
    %v3474 = vadd.f32 %v3442, -2.101024e-06
    %v3475 = vmul.f32 %v3443, %v3315
    %v3476 = vmul.f32 %v3444, %v3316
    %v3477 = vmul.f32 %v3445, %v3317
    %v3478 = vmul.f32 %v3446, %v3318
    %v3479 = vmul.f32 %v3447, %v3319
    %v3480 = vmul.f32 %v3448, %v3320
    %v3481 = vmul.f32 %v3449, %v3321
    %v3482 = vmul.f32 %v3450, %v3322
    %v3483 = vmul.f32 %v3451, %v3323
    %v3484 = vmul.f32 %v3452, %v3324
    %v3485 = vmul.f32 %v3453, %v3325
    %v3486 = vmul.f32 %v3454, %v3326
    %v3487 = vmul.f32 %v3455, %v3327
    %v3488 = vmul.f32 %v3456, %v3328
    %v3489 = vmul.f32 %v3457, %v3329
    %v3490 = vmul.f32 %v3458, %v3330
    %v3491 = vmul.f32 %v3459, %v3331
    %v3492 = vmul.f32 %v3460, %v3332
    %v3493 = vmul.f32 %v3461, %v3333
    %v3494 = vmul.f32 %v3462, %v3334
    %v3495 = vmul.f32 %v3463, %v3335
    %v3496 = vmul.f32 %v3464, %v3336
    %v3497 = vmul.f32 %v3465, %v3337
    %v3498 = vmul.f32 %v3466, %v3338
    %v3499 = vmul.f32 %v3467, %v3339
    %v3500 = vmul.f32 %v3468, %v3340
    %v3501 = vmul.f32 %v3469, %v3341
    %v3502 = vmul.f32 %v3470, %v3342
    %v3503 = vmul.f32 %v3471, %v3343
    %v3504 = vmul.f32 %v3472, %v3344
    %v3505 = vmul.f32 %v3473, %v3345
    %v3506 = vmul.f32 %v3474, %v3346
    %v3507 = vadd.f32 %v3475, -5.6925062e-05
    %v3508 = vadd.f32 %v3476, -5.6925062e-05
    %v3509 = vadd.f32 %v3477, -5.6925062e-05
    %v3510 = vadd.f32 %v3478, -5.6925062e-05
    %v3511 = vadd.f32 %v3479, -5.6925062e-05
    %v3512 = vadd.f32 %v3480, -5.6925062e-05
    %v3513 = vadd.f32 %v3481, -5.6925062e-05
    %v3514 = vadd.f32 %v3482, -5.6925062e-05
    %v3515 = vadd.f32 %v3483, -5.6925062e-05
    %v3516 = vadd.f32 %v3484, -5.6925062e-05
    %v3517 = vadd.f32 %v3485, -5.6925062e-05
    %v3518 = vadd.f32 %v3486, -5.6925062e-05
    %v3519 = vadd.f32 %v3487, -5.6925062e-05
    %v3520 = vadd.f32 %v3488, -5.6925062e-05
    %v3521 = vadd.f32 %v3489, -5.6925062e-05
    %v3522 = vadd.f32 %v3490, -5.6925062e-05
    %v3523 = vadd.f32 %v3491, -5.6925062e-05
    %v3524 = vadd.f32 %v3492, -5.6925062e-05
    %v3525 = vadd.f32 %v3493, -5.6925062e-05
    %v3526 = vadd.f32 %v3494, -5.6925062e-05
    %v3527 = vadd.f32 %v3495, -5.6925062e-05
    %v3528 = vadd.f32 %v3496, -5.6925062e-05
    %v3529 = vadd.f32 %v3497, -5.6925062e-05
    %v3530 = vadd.f32 %v3498, -5.6925062e-05
    %v3531 = vadd.f32 %v3499, -5.6925062e-05
    %v3532 = vadd.f32 %v3500, -5.6925062e-05
    %v3533 = vadd.f32 %v3501, -5.6925062e-05
    %v3534 = vadd.f32 %v3502, -5.6925062e-05
    %v3535 = vadd.f32 %v3503, -5.6925062e-05
    %v3536 = vadd.f32 %v3504, -5.6925062e-05
    %v3537 = vadd.f32 %v3505, -5.6925062e-05
    %v3538 = vadd.f32 %v3506, -5.6925062e-05
    %v3539 = vmul.f32 %v3507, %v3315
    %v3540 = vmul.f32 %v3508, %v3316
    %v3541 = vmul.f32 %v3509, %v3317
    %v3542 = vmul.f32 %v3510, %v3318
    %v3543 = vmul.f32 %v3511, %v3319
    %v3544 = vmul.f32 %v3512, %v3320
    %v3545 = vmul.f32 %v3513, %v3321
    %v3546 = vmul.f32 %v3514, %v3322
    %v3547 = vmul.f32 %v3515, %v3323
    %v3548 = vmul.f32 %v3516, %v3324
    %v3549 = vmul.f32 %v3517, %v3325
    %v3550 = vmul.f32 %v3518, %v3326
    %v3551 = vmul.f32 %v3519, %v3327
    %v3552 = vmul.f32 %v3520, %v3328
    %v3553 = vmul.f32 %v3521, %v3329
    %v3554 = vmul.f32 %v3522, %v3330
    %v3555 = vmul.f32 %v3523, %v3331
    %v3556 = vmul.f32 %v3524, %v3332
    %v3557 = vmul.f32 %v3525, %v3333
    %v3558 = vmul.f32 %v3526, %v3334
    %v3559 = vmul.f32 %v3527, %v3335
    %v3560 = vmul.f32 %v3528, %v3336
    %v3561 = vmul.f32 %v3529, %v3337
    %v3562 = vmul.f32 %v3530, %v3338
    %v3563 = vmul.f32 %v3531, %v3339
    %v3564 = vmul.f32 %v3532, %v3340
    %v3565 = vmul.f32 %v3533, %v3341
    %v3566 = vmul.f32 %v3534, %v3342
    %v3567 = vmul.f32 %v3535, %v3343
    %v3568 = vmul.f32 %v3536, %v3344
    %v3569 = vmul.f32 %v3537, %v3345
    %v3570 = vmul.f32 %v3538, %v3346
    %v3571 = vadd.f32 %v3539, -0.00073499064
    %v3572 = vadd.f32 %v3540, -0.00073499064
    %v3573 = vadd.f32 %v3541, -0.00073499064
    %v3574 = vadd.f32 %v3542, -0.00073499064
    %v3575 = vadd.f32 %v3543, -0.00073499064
    %v3576 = vadd.f32 %v3544, -0.00073499064
    %v3577 = vadd.f32 %v3545, -0.00073499064
    %v3578 = vadd.f32 %v3546, -0.00073499064
    %v3579 = vadd.f32 %v3547, -0.00073499064
    %v3580 = vadd.f32 %v3548, -0.00073499064
    %v3581 = vadd.f32 %v3549, -0.00073499064
    %v3582 = vadd.f32 %v3550, -0.00073499064
    %v3583 = vadd.f32 %v3551, -0.00073499064
    %v3584 = vadd.f32 %v3552, -0.00073499064
    %v3585 = vadd.f32 %v3553, -0.00073499064
    %v3586 = vadd.f32 %v3554, -0.00073499064
    %v3587 = vadd.f32 %v3555, -0.00073499064
    %v3588 = vadd.f32 %v3556, -0.00073499064
    %v3589 = vadd.f32 %v3557, -0.00073499064
    %v3590 = vadd.f32 %v3558, -0.00073499064
    %v3591 = vadd.f32 %v3559, -0.00073499064
    %v3592 = vadd.f32 %v3560, -0.00073499064
    %v3593 = vadd.f32 %v3561, -0.00073499064
    %v3594 = vadd.f32 %v3562, -0.00073499064
    %v3595 = vadd.f32 %v3563, -0.00073499064
    %v3596 = vadd.f32 %v3564, -0.00073499064
    %v3597 = vadd.f32 %v3565, -0.00073499064
    %v3598 = vadd.f32 %v3566, -0.00073499064
    %v3599 = vadd.f32 %v3567, -0.00073499064
    %v3600 = vadd.f32 %v3568, -0.00073499064
    %v3601 = vadd.f32 %v3569, -0.00073499064
    %v3602 = vadd.f32 %v3570, -0.00073499064
    %v3603 = vmul.f32 %v3571, %v3315
    %v3604 = vmul.f32 %v3572, %v3316
    %v3605 = vmul.f32 %v3573, %v3317
    %v3606 = vmul.f32 %v3574, %v3318
    %v3607 = vmul.f32 %v3575, %v3319
    %v3608 = vmul.f32 %v3576, %v3320
    %v3609 = vmul.f32 %v3577, %v3321
    %v3610 = vmul.f32 %v3578, %v3322
    %v3611 = vmul.f32 %v3579, %v3323
    %v3612 = vmul.f32 %v3580, %v3324
    %v3613 = vmul.f32 %v3581, %v3325
    %v3614 = vmul.f32 %v3582, %v3326
    %v3615 = vmul.f32 %v3583, %v3327
    %v3616 = vmul.f32 %v3584, %v3328
    %v3617 = vmul.f32 %v3585, %v3329
    %v3618 = vmul.f32 %v3586, %v3330
    %v3619 = vmul.f32 %v3587, %v3331
    %v3620 = vmul.f32 %v3588, %v3332
    %v3621 = vmul.f32 %v3589, %v3333
    %v3622 = vmul.f32 %v3590, %v3334
    %v3623 = vmul.f32 %v3591, %v3335
    %v3624 = vmul.f32 %v3592, %v3336
    %v3625 = vmul.f32 %v3593, %v3337
    %v3626 = vmul.f32 %v3594, %v3338
    %v3627 = vmul.f32 %v3595, %v3339
    %v3628 = vmul.f32 %v3596, %v3340
    %v3629 = vmul.f32 %v3597, %v3341
    %v3630 = vmul.f32 %v3598, %v3342
    %v3631 = vmul.f32 %v3599, %v3343
    %v3632 = vmul.f32 %v3600, %v3344
    %v3633 = vmul.f32 %v3601, %v3345
    %v3634 = vmul.f32 %v3602, %v3346
    %v3635 = vadd.f32 %v3603, -0.029545998
    %v3636 = vadd.f32 %v3604, -0.029545998
    %v3637 = vadd.f32 %v3605, -0.029545998
    %v3638 = vadd.f32 %v3606, -0.029545998
    %v3639 = vadd.f32 %v3607, -0.029545998
    %v3640 = vadd.f32 %v3608, -0.029545998
    %v3641 = vadd.f32 %v3609, -0.029545998
    %v3642 = vadd.f32 %v3610, -0.029545998
    %v3643 = vadd.f32 %v3611, -0.029545998
    %v3644 = vadd.f32 %v3612, -0.029545998
    %v3645 = vadd.f32 %v3613, -0.029545998
    %v3646 = vadd.f32 %v3614, -0.029545998
    %v3647 = vadd.f32 %v3615, -0.029545998
    %v3648 = vadd.f32 %v3616, -0.029545998
    %v3649 = vadd.f32 %v3617, -0.029545998
    %v3650 = vadd.f32 %v3618, -0.029545998
    %v3651 = vadd.f32 %v3619, -0.029545998
    %v3652 = vadd.f32 %v3620, -0.029545998
    %v3653 = vadd.f32 %v3621, -0.029545998
    %v3654 = vadd.f32 %v3622, -0.029545998
    %v3655 = vadd.f32 %v3623, -0.029545998
    %v3656 = vadd.f32 %v3624, -0.029545998
    %v3657 = vadd.f32 %v3625, -0.029545998
    %v3658 = vadd.f32 %v3626, -0.029545998
    %v3659 = vadd.f32 %v3627, -0.029545998
    %v3660 = vadd.f32 %v3628, -0.029545998
    %v3661 = vadd.f32 %v3629, -0.029545998
    %v3662 = vadd.f32 %v3630, -0.029545998
    %v3663 = vadd.f32 %v3631, -0.029545998
    %v3664 = vadd.f32 %v3632, -0.029545998
    %v3665 = vadd.f32 %v3633, -0.029545998
    %v3666 = vadd.f32 %v3634, -0.029545998
    %v3667 = vmul.f32 %v3635, %v3315
    %v3668 = vmul.f32 %v3636, %v3316
    %v3669 = vmul.f32 %v3637, %v3317
    %v3670 = vmul.f32 %v3638, %v3318
    %v3671 = vmul.f32 %v3639, %v3319
    %v3672 = vmul.f32 %v3640, %v3320
    %v3673 = vmul.f32 %v3641, %v3321
    %v3674 = vmul.f32 %v3642, %v3322
    %v3675 = vmul.f32 %v3643, %v3323
    %v3676 = vmul.f32 %v3644, %v3324
    %v3677 = vmul.f32 %v3645, %v3325
    %v3678 = vmul.f32 %v3646, %v3326
    %v3679 = vmul.f32 %v3647, %v3327
    %v3680 = vmul.f32 %v3648, %v3328
    %v3681 = vmul.f32 %v3649, %v3329
    %v3682 = vmul.f32 %v3650, %v3330
    %v3683 = vmul.f32 %v3651, %v3331
    %v3684 = vmul.f32 %v3652, %v3332
    %v3685 = vmul.f32 %v3653, %v3333
    %v3686 = vmul.f32 %v3654, %v3334
    %v3687 = vmul.f32 %v3655, %v3335
    %v3688 = vmul.f32 %v3656, %v3336
    %v3689 = vmul.f32 %v3657, %v3337
    %v3690 = vmul.f32 %v3658, %v3338
    %v3691 = vmul.f32 %v3659, %v3339
    %v3692 = vmul.f32 %v3660, %v3340
    %v3693 = vmul.f32 %v3661, %v3341
    %v3694 = vmul.f32 %v3662, %v3342
    %v3695 = vmul.f32 %v3663, %v3343
    %v3696 = vmul.f32 %v3664, %v3344
    %v3697 = vmul.f32 %v3665, %v3345
    %v3698 = vmul.f32 %v3666, %v3346
    %v3699 = vadd.f32 %v3667, -0.016096033
    %v3700 = vadd.f32 %v3668, -0.016096033
    %v3701 = vadd.f32 %v3669, -0.016096033
    %v3702 = vadd.f32 %v3670, -0.016096033
    %v3703 = vadd.f32 %v3671, -0.016096033
    %v3704 = vadd.f32 %v3672, -0.016096033
    %v3705 = vadd.f32 %v3673, -0.016096033
    %v3706 = vadd.f32 %v3674, -0.016096033
    %v3707 = vadd.f32 %v3675, -0.016096033
    %v3708 = vadd.f32 %v3676, -0.016096033
    %v3709 = vadd.f32 %v3677, -0.016096033
    %v3710 = vadd.f32 %v3678, -0.016096033
    %v3711 = vadd.f32 %v3679, -0.016096033
    %v3712 = vadd.f32 %v3680, -0.016096033
    %v3713 = vadd.f32 %v3681, -0.016096033
    %v3714 = vadd.f32 %v3682, -0.016096033
    %v3715 = vadd.f32 %v3683, -0.016096033
    %v3716 = vadd.f32 %v3684, -0.016096033
    %v3717 = vadd.f32 %v3685, -0.016096033
    %v3718 = vadd.f32 %v3686, -0.016096033
    %v3719 = vadd.f32 %v3687, -0.016096033
    %v3720 = vadd.f32 %v3688, -0.016096033
    %v3721 = vadd.f32 %v3689, -0.016096033
    %v3722 = vadd.f32 %v3690, -0.016096033
    %v3723 = vadd.f32 %v3691, -0.016096033
    %v3724 = vadd.f32 %v3692, -0.016096033
    %v3725 = vadd.f32 %v3693, -0.016096033
    %v3726 = vadd.f32 %v3694, -0.016096033
    %v3727 = vadd.f32 %v3695, -0.016096033
    %v3728 = vadd.f32 %v3696, -0.016096033
    %v3729 = vadd.f32 %v3697, -0.016096033
    %v3730 = vadd.f32 %v3698, -0.016096033
    %v3731 = vmul.f32 %v3699, %v3283
    %v3732 = vmul.f32 %v3700, %v3284
    %v3733 = vmul.f32 %v3701, %v3285
    %v3734 = vmul.f32 %v3702, %v3286
    %v3735 = vmul.f32 %v3703, %v3287
    %v3736 = vmul.f32 %v3704, %v3288
    %v3737 = vmul.f32 %v3705, %v3289
    %v3738 = vmul.f32 %v3706, %v3290
    %v3739 = vmul.f32 %v3707, %v3291
    %v3740 = vmul.f32 %v3708, %v3292
    %v3741 = vmul.f32 %v3709, %v3293
    %v3742 = vmul.f32 %v3710, %v3294
    %v3743 = vmul.f32 %v3711, %v3295
    %v3744 = vmul.f32 %v3712, %v3296
    %v3745 = vmul.f32 %v3713, %v3297
    %v3746 = vmul.f32 %v3714, %v3298
    %v3747 = vmul.f32 %v3715, %v3299
    %v3748 = vmul.f32 %v3716, %v3300
    %v3749 = vmul.f32 %v3717, %v3301
    %v3750 = vmul.f32 %v3718, %v3302
    %v3751 = vmul.f32 %v3719, %v3303
    %v3752 = vmul.f32 %v3720, %v3304
    %v3753 = vmul.f32 %v3721, %v3305
    %v3754 = vmul.f32 %v3722, %v3306
    %v3755 = vmul.f32 %v3723, %v3307
    %v3756 = vmul.f32 %v3724, %v3308
    %v3757 = vmul.f32 %v3725, %v3309
    %v3758 = vmul.f32 %v3726, %v3310
    %v3759 = vmul.f32 %v3727, %v3311
    %v3760 = vmul.f32 %v3728, %v3312
    %v3761 = vmul.f32 %v3729, %v3313
    %v3762 = vmul.f32 %v3730, %v3314
    %v3763 = vmul.f32 %v3315, -1.45660715e-05
    %v3764 = vmul.f32 %v3316, -1.45660715e-05
    %v3765 = vmul.f32 %v3317, -1.45660715e-05
    %v3766 = vmul.f32 %v3318, -1.45660715e-05
    %v3767 = vmul.f32 %v3319, -1.45660715e-05
    %v3768 = vmul.f32 %v3320, -1.45660715e-05
    %v3769 = vmul.f32 %v3321, -1.45660715e-05
    %v3770 = vmul.f32 %v3322, -1.45660715e-05
    %v3771 = vmul.f32 %v3323, -1.45660715e-05
    %v3772 = vmul.f32 %v3324, -1.45660715e-05
    %v3773 = vmul.f32 %v3325, -1.45660715e-05
    %v3774 = vmul.f32 %v3326, -1.45660715e-05
    %v3775 = vmul.f32 %v3327, -1.45660715e-05
    %v3776 = vmul.f32 %v3328, -1.45660715e-05
    %v3777 = vmul.f32 %v3329, -1.45660715e-05
    %v3778 = vmul.f32 %v3330, -1.45660715e-05
    %v3779 = vmul.f32 %v3331, -1.45660715e-05
    %v3780 = vmul.f32 %v3332, -1.45660715e-05
    %v3781 = vmul.f32 %v3333, -1.45660715e-05
    %v3782 = vmul.f32 %v3334, -1.45660715e-05
    %v3783 = vmul.f32 %v3335, -1.45660715e-05
    %v3784 = vmul.f32 %v3336, -1.45660715e-05
    %v3785 = vmul.f32 %v3337, -1.45660715e-05
    %v3786 = vmul.f32 %v3338, -1.45660715e-05
    %v3787 = vmul.f32 %v3339, -1.45660715e-05
    %v3788 = vmul.f32 %v3340, -1.45660715e-05
    %v3789 = vmul.f32 %v3341, -1.45660715e-05
    %v3790 = vmul.f32 %v3342, -1.45660715e-05
    %v3791 = vmul.f32 %v3343, -1.45660715e-05
    %v3792 = vmul.f32 %v3344, -1.45660715e-05
    %v3793 = vmul.f32 %v3345, -1.45660715e-05
    %v3794 = vmul.f32 %v3346, -1.45660715e-05
    %v3795 = vadd.f32 %v3763, -0.00021337405
    %v3796 = vadd.f32 %v3764, -0.00021337405
    %v3797 = vadd.f32 %v3765, -0.00021337405
    %v3798 = vadd.f32 %v3766, -0.00021337405
    %v3799 = vadd.f32 %v3767, -0.00021337405
    %v3800 = vadd.f32 %v3768, -0.00021337405
    %v3801 = vadd.f32 %v3769, -0.00021337405
    %v3802 = vadd.f32 %v3770, -0.00021337405
    %v3803 = vadd.f32 %v3771, -0.00021337405
    %v3804 = vadd.f32 %v3772, -0.00021337405
    %v3805 = vadd.f32 %v3773, -0.00021337405
    %v3806 = vadd.f32 %v3774, -0.00021337405
    %v3807 = vadd.f32 %v3775, -0.00021337405
    %v3808 = vadd.f32 %v3776, -0.00021337405
    %v3809 = vadd.f32 %v3777, -0.00021337405
    %v3810 = vadd.f32 %v3778, -0.00021337405
    %v3811 = vadd.f32 %v3779, -0.00021337405
    %v3812 = vadd.f32 %v3780, -0.00021337405
    %v3813 = vadd.f32 %v3781, -0.00021337405
    %v3814 = vadd.f32 %v3782, -0.00021337405
    %v3815 = vadd.f32 %v3783, -0.00021337405
    %v3816 = vadd.f32 %v3784, -0.00021337405
    %v3817 = vadd.f32 %v3785, -0.00021337405
    %v3818 = vadd.f32 %v3786, -0.00021337405
    %v3819 = vadd.f32 %v3787, -0.00021337405
    %v3820 = vadd.f32 %v3788, -0.00021337405
    %v3821 = vadd.f32 %v3789, -0.00021337405
    %v3822 = vadd.f32 %v3790, -0.00021337405
    %v3823 = vadd.f32 %v3791, -0.00021337405
    %v3824 = vadd.f32 %v3792, -0.00021337405
    %v3825 = vadd.f32 %v3793, -0.00021337405
    %v3826 = vadd.f32 %v3794, -0.00021337405
    %v3827 = vmul.f32 %v3795, %v3315
    %v3828 = vmul.f32 %v3796, %v3316
    %v3829 = vmul.f32 %v3797, %v3317
    %v3830 = vmul.f32 %v3798, %v3318
    %v3831 = vmul.f32 %v3799, %v3319
    %v3832 = vmul.f32 %v3800, %v3320
    %v3833 = vmul.f32 %v3801, %v3321
    %v3834 = vmul.f32 %v3802, %v3322
    %v3835 = vmul.f32 %v3803, %v3323
    %v3836 = vmul.f32 %v3804, %v3324
    %v3837 = vmul.f32 %v3805, %v3325
    %v3838 = vmul.f32 %v3806, %v3326
    %v3839 = vmul.f32 %v3807, %v3327
    %v3840 = vmul.f32 %v3808, %v3328
    %v3841 = vmul.f32 %v3809, %v3329
    %v3842 = vmul.f32 %v3810, %v3330
    %v3843 = vmul.f32 %v3811, %v3331
    %v3844 = vmul.f32 %v3812, %v3332
    %v3845 = vmul.f32 %v3813, %v3333
    %v3846 = vmul.f32 %v3814, %v3334
    %v3847 = vmul.f32 %v3815, %v3335
    %v3848 = vmul.f32 %v3816, %v3336
    %v3849 = vmul.f32 %v3817, %v3337
    %v3850 = vmul.f32 %v3818, %v3338
    %v3851 = vmul.f32 %v3819, %v3339
    %v3852 = vmul.f32 %v3820, %v3340
    %v3853 = vmul.f32 %v3821, %v3341
    %v3854 = vmul.f32 %v3822, %v3342
    %v3855 = vmul.f32 %v3823, %v3343
    %v3856 = vmul.f32 %v3824, %v3344
    %v3857 = vmul.f32 %v3825, %v3345
    %v3858 = vmul.f32 %v3826, %v3346
    %v3859 = vadd.f32 %v3827, -0.001682827
    %v3860 = vadd.f32 %v3828, -0.001682827
    %v3861 = vadd.f32 %v3829, -0.001682827
    %v3862 = vadd.f32 %v3830, -0.001682827
    %v3863 = vadd.f32 %v3831, -0.001682827
    %v3864 = vadd.f32 %v3832, -0.001682827
    %v3865 = vadd.f32 %v3833, -0.001682827
    %v3866 = vadd.f32 %v3834, -0.001682827
    %v3867 = vadd.f32 %v3835, -0.001682827
    %v3868 = vadd.f32 %v3836, -0.001682827
    %v3869 = vadd.f32 %v3837, -0.001682827
    %v3870 = vadd.f32 %v3838, -0.001682827
    %v3871 = vadd.f32 %v3839, -0.001682827
    %v3872 = vadd.f32 %v3840, -0.001682827
    %v3873 = vadd.f32 %v3841, -0.001682827
    %v3874 = vadd.f32 %v3842, -0.001682827
    %v3875 = vadd.f32 %v3843, -0.001682827
    %v3876 = vadd.f32 %v3844, -0.001682827
    %v3877 = vadd.f32 %v3845, -0.001682827
    %v3878 = vadd.f32 %v3846, -0.001682827
    %v3879 = vadd.f32 %v3847, -0.001682827
    %v3880 = vadd.f32 %v3848, -0.001682827
    %v3881 = vadd.f32 %v3849, -0.001682827
    %v3882 = vadd.f32 %v3850, -0.001682827
    %v3883 = vadd.f32 %v3851, -0.001682827
    %v3884 = vadd.f32 %v3852, -0.001682827
    %v3885 = vadd.f32 %v3853, -0.001682827
    %v3886 = vadd.f32 %v3854, -0.001682827
    %v3887 = vadd.f32 %v3855, -0.001682827
    %v3888 = vadd.f32 %v3856, -0.001682827
    %v3889 = vadd.f32 %v3857, -0.001682827
    %v3890 = vadd.f32 %v3858, -0.001682827
    %v3891 = vmul.f32 %v3859, %v3315
    %v3892 = vmul.f32 %v3860, %v3316
    %v3893 = vmul.f32 %v3861, %v3317
    %v3894 = vmul.f32 %v3862, %v3318
    %v3895 = vmul.f32 %v3863, %v3319
    %v3896 = vmul.f32 %v3864, %v3320
    %v3897 = vmul.f32 %v3865, %v3321
    %v3898 = vmul.f32 %v3866, %v3322
    %v3899 = vmul.f32 %v3867, %v3323
    %v3900 = vmul.f32 %v3868, %v3324
    %v3901 = vmul.f32 %v3869, %v3325
    %v3902 = vmul.f32 %v3870, %v3326
    %v3903 = vmul.f32 %v3871, %v3327
    %v3904 = vmul.f32 %v3872, %v3328
    %v3905 = vmul.f32 %v3873, %v3329
    %v3906 = vmul.f32 %v3874, %v3330
    %v3907 = vmul.f32 %v3875, %v3331
    %v3908 = vmul.f32 %v3876, %v3332
    %v3909 = vmul.f32 %v3877, %v3333
    %v3910 = vmul.f32 %v3878, %v3334
    %v3911 = vmul.f32 %v3879, %v3335
    %v3912 = vmul.f32 %v3880, %v3336
    %v3913 = vmul.f32 %v3881, %v3337
    %v3914 = vmul.f32 %v3882, %v3338
    %v3915 = vmul.f32 %v3883, %v3339
    %v3916 = vmul.f32 %v3884, %v3340
    %v3917 = vmul.f32 %v3885, %v3341
    %v3918 = vmul.f32 %v3886, %v3342
    %v3919 = vmul.f32 %v3887, %v3343
    %v3920 = vmul.f32 %v3888, %v3344
    %v3921 = vmul.f32 %v3889, %v3345
    %v3922 = vmul.f32 %v3890, %v3346
    %v3923 = vadd.f32 %v3891, -0.0073733293
    %v3924 = vadd.f32 %v3892, -0.0073733293
    %v3925 = vadd.f32 %v3893, -0.0073733293
    %v3926 = vadd.f32 %v3894, -0.0073733293
    %v3927 = vadd.f32 %v3895, -0.0073733293
    %v3928 = vadd.f32 %v3896, -0.0073733293
    %v3929 = vadd.f32 %v3897, -0.0073733293
    %v3930 = vadd.f32 %v3898, -0.0073733293
    %v3931 = vadd.f32 %v3899, -0.0073733293
    %v3932 = vadd.f32 %v3900, -0.0073733293
    %v3933 = vadd.f32 %v3901, -0.0073733293
    %v3934 = vadd.f32 %v3902, -0.0073733293
    %v3935 = vadd.f32 %v3903, -0.0073733293
    %v3936 = vadd.f32 %v3904, -0.0073733293
    %v3937 = vadd.f32 %v3905, -0.0073733293
    %v3938 = vadd.f32 %v3906, -0.0073733293
    %v3939 = vadd.f32 %v3907, -0.0073733293
    %v3940 = vadd.f32 %v3908, -0.0073733293
    %v3941 = vadd.f32 %v3909, -0.0073733293
    %v3942 = vadd.f32 %v3910, -0.0073733293
    %v3943 = vadd.f32 %v3911, -0.0073733293
    %v3944 = vadd.f32 %v3912, -0.0073733293
    %v3945 = vadd.f32 %v3913, -0.0073733293
    %v3946 = vadd.f32 %v3914, -0.0073733293
    %v3947 = vadd.f32 %v3915, -0.0073733293
    %v3948 = vadd.f32 %v3916, -0.0073733293
    %v3949 = vadd.f32 %v3917, -0.0073733293
    %v3950 = vadd.f32 %v3918, -0.0073733293
    %v3951 = vadd.f32 %v3919, -0.0073733293
    %v3952 = vadd.f32 %v3920, -0.0073733293
    %v3953 = vadd.f32 %v3921, -0.0073733293
    %v3954 = vadd.f32 %v3922, -0.0073733293
    %v3955 = vmul.f32 %v3923, %v3315
    %v3956 = vmul.f32 %v3924, %v3316
    %v3957 = vmul.f32 %v3925, %v3317
    %v3958 = vmul.f32 %v3926, %v3318
    %v3959 = vmul.f32 %v3927, %v3319
    %v3960 = vmul.f32 %v3928, %v3320
    %v3961 = vmul.f32 %v3929, %v3321
    %v3962 = vmul.f32 %v3930, %v3322
    %v3963 = vmul.f32 %v3931, %v3323
    %v3964 = vmul.f32 %v3932, %v3324
    %v3965 = vmul.f32 %v3933, %v3325
    %v3966 = vmul.f32 %v3934, %v3326
    %v3967 = vmul.f32 %v3935, %v3327
    %v3968 = vmul.f32 %v3936, %v3328
    %v3969 = vmul.f32 %v3937, %v3329
    %v3970 = vmul.f32 %v3938, %v3330
    %v3971 = vmul.f32 %v3939, %v3331
    %v3972 = vmul.f32 %v3940, %v3332
    %v3973 = vmul.f32 %v3941, %v3333
    %v3974 = vmul.f32 %v3942, %v3334
    %v3975 = vmul.f32 %v3943, %v3335
    %v3976 = vmul.f32 %v3944, %v3336
    %v3977 = vmul.f32 %v3945, %v3337
    %v3978 = vmul.f32 %v3946, %v3338
    %v3979 = vmul.f32 %v3947, %v3339
    %v3980 = vmul.f32 %v3948, %v3340
    %v3981 = vmul.f32 %v3949, %v3341
    %v3982 = vmul.f32 %v3950, %v3342
    %v3983 = vmul.f32 %v3951, %v3343
    %v3984 = vmul.f32 %v3952, %v3344
    %v3985 = vmul.f32 %v3953, %v3345
    %v3986 = vmul.f32 %v3954, %v3346
    %v3987 = vadd.f32 %v3955, -0.014264739
    %v3988 = vadd.f32 %v3956, -0.014264739
    %v3989 = vadd.f32 %v3957, -0.014264739
    %v3990 = vadd.f32 %v3958, -0.014264739
    %v3991 = vadd.f32 %v3959, -0.014264739
    %v3992 = vadd.f32 %v3960, -0.014264739
    %v3993 = vadd.f32 %v3961, -0.014264739
    %v3994 = vadd.f32 %v3962, -0.014264739
    %v3995 = vadd.f32 %v3963, -0.014264739
    %v3996 = vadd.f32 %v3964, -0.014264739
    %v3997 = vadd.f32 %v3965, -0.014264739
    %v3998 = vadd.f32 %v3966, -0.014264739
    %v3999 = vadd.f32 %v3967, -0.014264739
    %v4000 = vadd.f32 %v3968, -0.014264739
    %v4001 = vadd.f32 %v3969, -0.014264739
    %v4002 = vadd.f32 %v3970, -0.014264739
    %v4003 = vadd.f32 %v3971, -0.014264739
    %v4004 = vadd.f32 %v3972, -0.014264739
    %v4005 = vadd.f32 %v3973, -0.014264739
    %v4006 = vadd.f32 %v3974, -0.014264739
    %v4007 = vadd.f32 %v3975, -0.014264739
    %v4008 = vadd.f32 %v3976, -0.014264739
    %v4009 = vadd.f32 %v3977, -0.014264739
    %v4010 = vadd.f32 %v3978, -0.014264739
    %v4011 = vadd.f32 %v3979, -0.014264739
    %v4012 = vadd.f32 %v3980, -0.014264739
    %v4013 = vadd.f32 %v3981, -0.014264739
    %v4014 = vadd.f32 %v3982, -0.014264739
    %v4015 = vadd.f32 %v3983, -0.014264739
    %v4016 = vadd.f32 %v3984, -0.014264739
    %v4017 = vadd.f32 %v3985, -0.014264739
    %v4018 = vadd.f32 %v3986, -0.014264739
    %v4019 = vrcp.pop %v3987
    %v4020 = vrcp.pop %v3988
    %v4021 = vrcp.pop %v3989
    %v4022 = vrcp.pop %v3990
    %v4023 = vrcp.pop %v3991
    %v4024 = vrcp.pop %v3992
    %v4025 = vrcp.pop %v3993
    %v4026 = vrcp.pop %v3994
    %v4027 = vrcp.pop %v3995
    %v4028 = vrcp.pop %v3996
    %v4029 = vrcp.pop %v3997
    %v4030 = vrcp.pop %v3998
    %v4031 = vrcp.pop %v3999
    %v4032 = vrcp.pop %v4000
    %v4033 = vrcp.pop %v4001
    %v4034 = vrcp.pop %v4002
    %v4035 = vrcp.pop %v4003
    %v4036 = vrcp.pop %v4004
    %v4037 = vrcp.pop %v4005
    %v4038 = vrcp.pop %v4006
    %v4039 = vrcp.pop %v4007
    %v4040 = vrcp.pop %v4008
    %v4041 = vrcp.pop %v4009
    %v4042 = vrcp.pop %v4010
    %v4043 = vrcp.pop %v4011
    %v4044 = vrcp.pop %v4012
    %v4045 = vrcp.pop %v4013
    %v4046 = vrcp.pop %v4014
    %v4047 = vrcp.pop %v4015
    %v4048 = vrcp.pop %v4016
    %v4049 = vrcp.pop %v4017
    %v4050 = vrcp.pop %v4018
    %v4051 = vmul.f32 %v3987, %v4019
    %v4052 = vmul.f32 %v3988, %v4020
    %v4053 = vmul.f32 %v3989, %v4021
    %v4054 = vmul.f32 %v3990, %v4022
    %v4055 = vmul.f32 %v3991, %v4023
    %v4056 = vmul.f32 %v3992, %v4024
    %v4057 = vmul.f32 %v3993, %v4025
    %v4058 = vmul.f32 %v3994, %v4026
    %v4059 = vmul.f32 %v3995, %v4027
    %v4060 = vmul.f32 %v3996, %v4028
    %v4061 = vmul.f32 %v3997, %v4029
    %v4062 = vmul.f32 %v3998, %v4030
    %v4063 = vmul.f32 %v3999, %v4031
    %v4064 = vmul.f32 %v4000, %v4032
    %v4065 = vmul.f32 %v4001, %v4033
    %v4066 = vmul.f32 %v4002, %v4034
    %v4067 = vmul.f32 %v4003, %v4035
    %v4068 = vmul.f32 %v4004, %v4036
    %v4069 = vmul.f32 %v4005, %v4037
    %v4070 = vmul.f32 %v4006, %v4038
    %v4071 = vmul.f32 %v4007, %v4039
    %v4072 = vmul.f32 %v4008, %v4040
    %v4073 = vmul.f32 %v4009, %v4041
    %v4074 = vmul.f32 %v4010, %v4042
    %v4075 = vmul.f32 %v4011, %v4043
    %v4076 = vmul.f32 %v4012, %v4044
    %v4077 = vmul.f32 %v4013, %v4045
    %v4078 = vmul.f32 %v4014, %v4046
    %v4079 = vmul.f32 %v4015, %v4047
    %v4080 = vmul.f32 %v4016, %v4048
    %v4081 = vmul.f32 %v4017, %v4049
    %v4082 = vmul.f32 %v4018, %v4050
    %v4083 = vsub.f32 2.0, %v4051
    %v4084 = vsub.f32 2.0, %v4052
    %v4085 = vsub.f32 2.0, %v4053
    %v4086 = vsub.f32 2.0, %v4054
    %v4087 = vsub.f32 2.0, %v4055
    %v4088 = vsub.f32 2.0, %v4056
    %v4089 = vsub.f32 2.0, %v4057
    %v4090 = vsub.f32 2.0, %v4058
    %v4091 = vsub.f32 2.0, %v4059
    %v4092 = vsub.f32 2.0, %v4060
    %v4093 = vsub.f32 2.0, %v4061
    %v4094 = vsub.f32 2.0, %v4062
    %v4095 = vsub.f32 2.0, %v4063
    %v4096 = vsub.f32 2.0, %v4064
    %v4097 = vsub.f32 2.0, %v4065
    %v4098 = vsub.f32 2.0, %v4066
    %v4099 = vsub.f32 2.0, %v4067
    %v4100 = vsub.f32 2.0, %v4068
    %v4101 = vsub.f32 2.0, %v4069
    %v4102 = vsub.f32 2.0, %v4070
    %v4103 = vsub.f32 2.0, %v4071
    %v4104 = vsub.f32 2.0, %v4072
    %v4105 = vsub.f32 2.0, %v4073
    %v4106 = vsub.f32 2.0, %v4074
    %v4107 = vsub.f32 2.0, %v4075
    %v4108 = vsub.f32 2.0, %v4076
    %v4109 = vsub.f32 2.0, %v4077
    %v4110 = vsub.f32 2.0, %v4078
    %v4111 = vsub.f32 2.0, %v4079
    %v4112 = vsub.f32 2.0, %v4080
    %v4113 = vsub.f32 2.0, %v4081
    %v4114 = vsub.f32 2.0, %v4082
    %v4115 = vmul.f32 %v4019, %v4083
    %v4116 = vmul.f32 %v4020, %v4084
    %v4117 = vmul.f32 %v4021, %v4085
    %v4118 = vmul.f32 %v4022, %v4086
    %v4119 = vmul.f32 %v4023, %v4087
    %v4120 = vmul.f32 %v4024, %v4088
    %v4121 = vmul.f32 %v4025, %v4089
    %v4122 = vmul.f32 %v4026, %v4090
    %v4123 = vmul.f32 %v4027, %v4091
    %v4124 = vmul.f32 %v4028, %v4092
    %v4125 = vmul.f32 %v4029, %v4093
    %v4126 = vmul.f32 %v4030, %v4094
    %v4127 = vmul.f32 %v4031, %v4095
    %v4128 = vmul.f32 %v4032, %v4096
    %v4129 = vmul.f32 %v4033, %v4097
    %v4130 = vmul.f32 %v4034, %v4098
    %v4131 = vmul.f32 %v4035, %v4099
    %v4132 = vmul.f32 %v4036, %v4100
    %v4133 = vmul.f32 %v4037, %v4101
    %v4134 = vmul.f32 %v4038, %v4102
    %v4135 = vmul.f32 %v4039, %v4103
    %v4136 = vmul.f32 %v4040, %v4104
    %v4137 = vmul.f32 %v4041, %v4105
    %v4138 = vmul.f32 %v4042, %v4106
    %v4139 = vmul.f32 %v4043, %v4107
    %v4140 = vmul.f32 %v4044, %v4108
    %v4141 = vmul.f32 %v4045, %v4109
    %v4142 = vmul.f32 %v4046, %v4110
    %v4143 = vmul.f32 %v4047, %v4111
    %v4144 = vmul.f32 %v4048, %v4112
    %v4145 = vmul.f32 %v4049, %v4113
    %v4146 = vmul.f32 %v4050, %v4114
    %v4147 = vmul.f32 %v3731, %v4115
    %v4148 = vmul.f32 %v3732, %v4116
    %v4149 = vmul.f32 %v3733, %v4117
    %v4150 = vmul.f32 %v3734, %v4118
    %v4151 = vmul.f32 %v3735, %v4119
    %v4152 = vmul.f32 %v3736, %v4120
    %v4153 = vmul.f32 %v3737, %v4121
    %v4154 = vmul.f32 %v3738, %v4122
    %v4155 = vmul.f32 %v3739, %v4123
    %v4156 = vmul.f32 %v3740, %v4124
    %v4157 = vmul.f32 %v3741, %v4125
    %v4158 = vmul.f32 %v3742, %v4126
    %v4159 = vmul.f32 %v3743, %v4127
    %v4160 = vmul.f32 %v3744, %v4128
    %v4161 = vmul.f32 %v3745, %v4129
    %v4162 = vmul.f32 %v3746, %v4130
    %v4163 = vmul.f32 %v3747, %v4131
    %v4164 = vmul.f32 %v3748, %v4132
    %v4165 = vmul.f32 %v3749, %v4133
    %v4166 = vmul.f32 %v3750, %v4134
    %v4167 = vmul.f32 %v3751, %v4135
    %v4168 = vmul.f32 %v3752, %v4136
    %v4169 = vmul.f32 %v3753, %v4137
    %v4170 = vmul.f32 %v3754, %v4138
    %v4171 = vmul.f32 %v3755, %v4139
    %v4172 = vmul.f32 %v3756, %v4140
    %v4173 = vmul.f32 %v3757, %v4141
    %v4174 = vmul.f32 %v3758, %v4142
    %v4175 = vmul.f32 %v3759, %v4143
    %v4176 = vmul.f32 %v3760, %v4144
    %v4177 = vmul.f32 %v3761, %v4145
    %v4178 = vmul.f32 %v3762, %v4146
    %v4179 = vmul.f32 %v2912, 0.5
    %v4180 = vmul.f32 %v3172, 0.5
    %v4181 = vmul.f32 %v2915, 0.5
    %v4182 = vmul.f32 %v3175, 0.5
    %v4183 = vmul.f32 %v2918, 0.5
    %v4184 = vmul.f32 %v3178, 0.5
    %v4185 = vmul.f32 %v2921, 0.5
    %v4186 = vmul.f32 %v3181, 0.5
    %v4187 = vmul.f32 %v2924, 0.5
    %v4188 = vmul.f32 %v3184, 0.5
    %v4189 = vmul.f32 %v2927, 0.5
    %v4190 = vmul.f32 %v3187, 0.5
    %v4191 = vmul.f32 %v2930, 0.5
    %v4192 = vmul.f32 %v3190, 0.5
    %v4193 = vmul.f32 %v2933, 0.5
    %v4194 = vmul.f32 %v3193, 0.5
    %v4195 = vmul.f32 %v2936, 0.5
    %v4196 = vmul.f32 %v3196, 0.5
    %v4197 = vmul.f32 %v2939, 0.5
    %v4198 = vmul.f32 %v3199, 0.5
    %v4199 = vmul.f32 %v2942, 0.5
    %v4200 = vmul.f32 %v3202, 0.5
    %v4201 = vmul.f32 %v2945, 0.5
    %v4202 = vmul.f32 %v3205, 0.5
    %v4203 = vmul.f32 %v2948, 0.5
    %v4204 = vmul.f32 %v3208, 0.5
    %v4205 = vmul.f32 %v2951, 0.5
    %v4206 = vmul.f32 %v3211, 0.5
    %v4207 = vmul.f32 %v2954, 0.5
    %v4208 = vmul.f32 %v3214, 0.5
    %v4209 = vmul.f32 %v2957, 0.5
    %v4210 = vmul.f32 %v3217, 0.5
    %v4211 = vadd.f32 %v4147, 1.0
    %v4212 = vadd.f32 %v4148, 1.0
    %v4213 = vadd.f32 %v4149, 1.0
    %v4214 = vadd.f32 %v4150, 1.0
    %v4215 = vadd.f32 %v4151, 1.0
    %v4216 = vadd.f32 %v4152, 1.0
    %v4217 = vadd.f32 %v4153, 1.0
    %v4218 = vadd.f32 %v4154, 1.0
    %v4219 = vadd.f32 %v4155, 1.0
    %v4220 = vadd.f32 %v4156, 1.0
    %v4221 = vadd.f32 %v4157, 1.0
    %v4222 = vadd.f32 %v4158, 1.0
    %v4223 = vadd.f32 %v4159, 1.0
    %v4224 = vadd.f32 %v4160, 1.0
    %v4225 = vadd.f32 %v4161, 1.0
    %v4226 = vadd.f32 %v4162, 1.0
    %v4227 = vadd.f32 %v4163, 1.0
    %v4228 = vadd.f32 %v4164, 1.0
    %v4229 = vadd.f32 %v4165, 1.0
    %v4230 = vadd.f32 %v4166, 1.0
    %v4231 = vadd.f32 %v4167, 1.0
    %v4232 = vadd.f32 %v4168, 1.0
    %v4233 = vadd.f32 %v4169, 1.0
    %v4234 = vadd.f32 %v4170, 1.0
    %v4235 = vadd.f32 %v4171, 1.0
    %v4236 = vadd.f32 %v4172, 1.0
    %v4237 = vadd.f32 %v4173, 1.0
    %v4238 = vadd.f32 %v4174, 1.0
    %v4239 = vadd.f32 %v4175, 1.0
    %v4240 = vadd.f32 %v4176, 1.0
    %v4241 = vadd.f32 %v4177, 1.0
    %v4242 = vadd.f32 %v4178, 1.0
    %v4243 = vmul.f32 %v4179, %v4211
    %v4244 = vmul.f32 %v4180, %v4212
    %v4245 = vmul.f32 %v4181, %v4213
    %v4246 = vmul.f32 %v4182, %v4214
    %v4247 = vmul.f32 %v4183, %v4215
    %v4248 = vmul.f32 %v4184, %v4216
    %v4249 = vmul.f32 %v4185, %v4217
    %v4250 = vmul.f32 %v4186, %v4218
    %v4251 = vmul.f32 %v4187, %v4219
    %v4252 = vmul.f32 %v4188, %v4220
    %v4253 = vmul.f32 %v4189, %v4221
    %v4254 = vmul.f32 %v4190, %v4222
    %v4255 = vmul.f32 %v4191, %v4223
    %v4256 = vmul.f32 %v4192, %v4224
    %v4257 = vmul.f32 %v4193, %v4225
    %v4258 = vmul.f32 %v4194, %v4226
    %v4259 = vmul.f32 %v4195, %v4227
    %v4260 = vmul.f32 %v4196, %v4228
    %v4261 = vmul.f32 %v4197, %v4229
    %v4262 = vmul.f32 %v4198, %v4230
    %v4263 = vmul.f32 %v4199, %v4231
    %v4264 = vmul.f32 %v4200, %v4232
    %v4265 = vmul.f32 %v4201, %v4233
    %v4266 = vmul.f32 %v4202, %v4234
    %v4267 = vmul.f32 %v4203, %v4235
    %v4268 = vmul.f32 %v4204, %v4236
    %v4269 = vmul.f32 %v4205, %v4237
    %v4270 = vmul.f32 %v4206, %v4238
    %v4271 = vmul.f32 %v4207, %v4239
    %v4272 = vmul.f32 %v4208, %v4240
    %v4273 = vmul.f32 %v4209, %v4241
    %v4274 = vmul.f32 %v4210, %v4242
    %v4275 = vld [vmem:[#allocation10] sm:$0xff]
    %v4276 = vld [vmem:[#allocation10 + $0x8] sm:$0xff]
    %v4277 = vld [vmem:[#allocation10 + $0x10] sm:$0xff]
    %v4278 = vld [vmem:[#allocation10 + $0x18] sm:$0xff]
    %v4279 = vld [vmem:[#allocation10 + $0x20] sm:$0xff]
    %v4280 = vld [vmem:[#allocation10 + $0x28] sm:$0xff]
    %v4281 = vld [vmem:[#allocation10 + $0x30] sm:$0xff]
    %v4282 = vld [vmem:[#allocation10 + $0x38] sm:$0xff]
    %v4283 = vld [vmem:[#allocation10 + $0x40] sm:$0xff]
    %v4284 = vld [vmem:[#allocation10 + $0x48] sm:$0xff]
    %v4285 = vld [vmem:[#allocation10 + $0x50] sm:$0xff]
    %v4286 = vld [vmem:[#allocation10 + $0x58] sm:$0xff]
    %v4287 = vld [vmem:[#allocation10 + $0x60] sm:$0xff]
    %v4288 = vld [vmem:[#allocation10 + $0x68] sm:$0xff]
    %v4289 = vld [vmem:[#allocation10 + $0x70] sm:$0xff]
    %v4290 = vld [vmem:[#allocation10 + $0x78] sm:$0xff]
    %v4291 = vld [vmem:[#allocation10 + $0x80] sm:$0xff]
    %v4292 = vld [vmem:[#allocation10 + $0x88] sm:$0xff]
    %v4293 = vld [vmem:[#allocation10 + $0x90] sm:$0xff]
    %v4294 = vld [vmem:[#allocation10 + $0x98] sm:$0xff]
    %v4295 = vld [vmem:[#allocation10 + $0xa0] sm:$0xff]
    %v4296 = vld [vmem:[#allocation10 + $0xa8] sm:$0xff]
    %v4297 = vld [vmem:[#allocation10 + $0xb0] sm:$0xff]
    %v4298 = vld [vmem:[#allocation10 + $0xb8] sm:$0xff]
    %v4299 = vld [vmem:[#allocation10 + $0xc0] sm:$0xff]
    %v4300 = vld [vmem:[#allocation10 + $0xc8] sm:$0xff]
    %v4301 = vld [vmem:[#allocation10 + $0xd0] sm:$0xff]
    %v4302 = vld [vmem:[#allocation10 + $0xd8] sm:$0xff]
    %v4303 = vld [vmem:[#allocation10 + $0xe0] sm:$0xff]
    %v4304 = vld [vmem:[#allocation10 + $0xe8] sm:$0xff]
    %v4305 = vld [vmem:[#allocation10 + $0xf0] sm:$0xff]
    %v4306 = vld [vmem:[#allocation10 + $0xf8] sm:$0xff]
    %v4307 = vld [vmem:[%s6] sm:$0x1]
    %v4309 = vperm.slane %v4307, 0
    %4311 = vmatpush.msra.mxu0 %v4290
    %4312 = vmatpush.msra.mxu0 %v4289
    %4313 = vmatpush.msra.mxu0 %v4288
    %4314 = vmatpush.msra.mxu0 %v4287
    %4315 = vmatpush.msra.mxu0 %v4286
    %4316 = vmatpush.msra.mxu0 %v4285
    %4317 = vmatpush.msra.mxu0 %v4284
    %4318 = vmatpush.msra.mxu0 %v4283
    %4319 = vmatpush.msra.mxu0 %v4282
    %4320 = vmatpush.msra.mxu0 %v4281
    %4321 = vmatpush.msra.mxu0 %v4280
    %4322 = vmatpush.msra.mxu0 %v4279
    %4323 = vmatpush.msra.mxu0 %v4278
    %4324 = vmatpush.msra.mxu0 %v4277
    %4325 = vmatpush.msra.mxu0 %v4276
    %4326 = vmatpush.msra.mxu0 %v4275
    %4327 = vmatmul.f32.gmra.mxu0 %v4243
    %v4328 = vpop.f32.mrf.mxu0
    %v4329 = vadd.f32 %v4309, %v4328
    %4330 = vmatmul.f32.gmra.mxu0 %v4245
    %v4331 = vpop.f32.mrf.mxu0
    %v4332 = vadd.f32 %v4309, %v4331
    %4333 = vmatmul.f32.gmra.mxu0 %v4247
    %v4334 = vpop.f32.mrf.mxu0
    %v4335 = vadd.f32 %v4309, %v4334
    %4336 = vmatmul.f32.gmra.mxu0 %v4249
    %v4337 = vpop.f32.mrf.mxu0
    %v4338 = vadd.f32 %v4309, %v4337
    %4339 = vmatmul.f32.gmra.mxu0 %v4251
    %v4340 = vpop.f32.mrf.mxu0
    %v4341 = vadd.f32 %v4309, %v4340
    %4342 = vmatmul.f32.gmra.mxu0 %v4253
    %v4343 = vpop.f32.mrf.mxu0
    %v4344 = vadd.f32 %v4309, %v4343
    %4345 = vmatmul.f32.gmra.mxu0 %v4255
    %v4346 = vpop.f32.mrf.mxu0
    %v4347 = vadd.f32 %v4309, %v4346
    %4348 = vmatmul.f32.gmra.mxu0 %v4257
    %v4349 = vpop.f32.mrf.mxu0
    %v4350 = vadd.f32 %v4309, %v4349
    %4351 = vmatmul.f32.gmra.mxu0 %v4259
    %v4352 = vpop.f32.mrf.mxu0
    %v4353 = vadd.f32 %v4309, %v4352
    %4354 = vmatmul.f32.gmra.mxu0 %v4261
    %v4355 = vpop.f32.mrf.mxu0
    %v4356 = vadd.f32 %v4309, %v4355
    %4357 = vmatmul.f32.gmra.mxu0 %v4263
    %v4358 = vpop.f32.mrf.mxu0
    %v4359 = vadd.f32 %v4309, %v4358
    %4360 = vmatmul.f32.gmra.mxu0 %v4265
    %v4361 = vpop.f32.mrf.mxu0
    %v4362 = vadd.f32 %v4309, %v4361
    %4363 = vmatmul.f32.gmra.mxu0 %v4267
    %v4364 = vpop.f32.mrf.mxu0
    %v4365 = vadd.f32 %v4309, %v4364
    %4366 = vmatmul.f32.gmra.mxu0 %v4269
    %v4367 = vpop.f32.mrf.mxu0
    %v4368 = vadd.f32 %v4309, %v4367
    %4369 = vmatmul.f32.gmra.mxu0 %v4271
    %v4370 = vpop.f32.mrf.mxu0
    %v4371 = vadd.f32 %v4309, %v4370
    %4372 = vmatmul.f32.gmra.mxu0 %v4273
    %v4373 = vpop.f32.mrf.mxu0
    %v4374 = vadd.f32 %v4309, %v4373
    %4375 = vdwg.mxu0
    %4376 = vmatpush.msra.mxu0 %v4306
    %4377 = vmatpush.msra.mxu0 %v4305
    %4378 = vmatpush.msra.mxu0 %v4304
    %4379 = vmatpush.msra.mxu0 %v4303
    %4380 = vmatpush.msra.mxu0 %v4302
    %4381 = vmatpush.msra.mxu0 %v4301
    %4382 = vmatpush.msra.mxu0 %v4300
    %4383 = vmatpush.msra.mxu0 %v4299
    %4384 = vmatpush.msra.mxu0 %v4298
    %4385 = vmatpush.msra.mxu0 %v4297
    %4386 = vmatpush.msra.mxu0 %v4296
    %4387 = vmatpush.msra.mxu0 %v4295
    %4388 = vmatpush.msra.mxu0 %v4294
    %4389 = vmatpush.msra.mxu0 %v4293
    %4390 = vmatpush.msra.mxu0 %v4292
    %4391 = vmatpush.msra.mxu0 %v4291
    %4392 = vmatmul.f32.gmra.mxu0 %v4244
    %v4393 = vpop.f32.mrf.mxu0
    %v4394 = vadd.f32 %v4329, %v4393
    %4395 = vmatmul.f32.gmra.mxu0 %v4246
    %v4396 = vpop.f32.mrf.mxu0
    %v4397 = vadd.f32 %v4332, %v4396
    %4398 = vmatmul.f32.gmra.mxu0 %v4248
    %v4399 = vpop.f32.mrf.mxu0
    %v4400 = vadd.f32 %v4335, %v4399
    %4401 = vmatmul.f32.gmra.mxu0 %v4250
    %v4402 = vpop.f32.mrf.mxu0
    %v4403 = vadd.f32 %v4338, %v4402
    %4404 = vmatmul.f32.gmra.mxu0 %v4252
    %v4405 = vpop.f32.mrf.mxu0
    %v4406 = vadd.f32 %v4341, %v4405
    %4407 = vmatmul.f32.gmra.mxu0 %v4254
    %v4408 = vpop.f32.mrf.mxu0
    %v4409 = vadd.f32 %v4344, %v4408
    %4410 = vmatmul.f32.gmra.mxu0 %v4256
    %v4411 = vpop.f32.mrf.mxu0
    %v4412 = vadd.f32 %v4347, %v4411
    %4413 = vmatmul.f32.gmra.mxu0 %v4258
    %v4414 = vpop.f32.mrf.mxu0
    %v4415 = vadd.f32 %v4350, %v4414
    %4416 = vmatmul.f32.gmra.mxu0 %v4260
    %v4417 = vpop.f32.mrf.mxu0
    %v4418 = vadd.f32 %v4353, %v4417
    %4419 = vmatmul.f32.gmra.mxu0 %v4262
    %v4420 = vpop.f32.mrf.mxu0
    %v4421 = vadd.f32 %v4356, %v4420
    %4422 = vmatmul.f32.gmra.mxu0 %v4264
    %v4423 = vpop.f32.mrf.mxu0
    %v4424 = vadd.f32 %v4359, %v4423
    %4425 = vmatmul.f32.gmra.mxu0 %v4266
    %v4426 = vpop.f32.mrf.mxu0
    %v4427 = vadd.f32 %v4362, %v4426
    %4428 = vmatmul.f32.gmra.mxu0 %v4268
    %v4429 = vpop.f32.mrf.mxu0
    %v4430 = vadd.f32 %v4365, %v4429
    %4431 = vmatmul.f32.gmra.mxu0 %v4270
    %v4432 = vpop.f32.mrf.mxu0
    %v4433 = vadd.f32 %v4368, %v4432
    %4434 = vmatmul.f32.gmra.mxu0 %v4272
    %v4435 = vpop.f32.mrf.mxu0
    %v4436 = vadd.f32 %v4371, %v4435
    %4437 = vmatmul.f32.gmra.mxu0 %v4274
    %v4438 = vpop.f32.mrf.mxu0
    %v4439 = vadd.f32 %v4374, %v4438
    %4440 = vdwg.mxu0
    %4441 = vst [vmem:[#allocation11] sm:$0xff] %v4394
    %4442 = vst [vmem:[#allocation11 + $0x8] sm:$0xff] %v4397
    %4443 = vst [vmem:[#allocation11 + $0x10] sm:$0xff] %v4400
    %4444 = vst [vmem:[#allocation11 + $0x18] sm:$0xff] %v4403
    %4445 = vst [vmem:[#allocation11 + $0x20] sm:$0xff] %v4406
    %4446 = vst [vmem:[#allocation11 + $0x28] sm:$0xff] %v4409
    %4447 = vst [vmem:[#allocation11 + $0x30] sm:$0xff] %v4412
    %4448 = vst [vmem:[#allocation11 + $0x38] sm:$0xff] %v4415
    %4449 = vst [vmem:[#allocation11 + $0x40] sm:$0xff] %v4418
    %4450 = vst [vmem:[#allocation11 + $0x48] sm:$0xff] %v4421
    %4451 = vst [vmem:[#allocation11 + $0x50] sm:$0xff] %v4424
    %4452 = vst [vmem:[#allocation11 + $0x58] sm:$0xff] %v4427
    %4453 = vst [vmem:[#allocation11 + $0x60] sm:$0xff] %v4430
    %4454 = vst [vmem:[#allocation11 + $0x68] sm:$0xff] %v4433
    %4455 = vst [vmem:[#allocation11 + $0x70] sm:$0xff] %v4436
    %4456 = vst [vmem:[#allocation11 + $0x78] sm:$0xff] %v4439
    // Predicated region
    $region50: #{tpu_custom_call.1} parent=1 // pred_check
      _
    $region51: #{tpu_custom_call.1} parent=1 // pred_check_branch
      %4458 = sbr.rel (0) target = $region53
    $region52: #{tpu_custom_call.1} parent=1 // pred_region
      %4460 = vsyncadd [#allocation4], 0
      %s4461 = sshll.u32 [#allocation11], 4
      %s4462 = int_to_ptr.vmem [resolvable:$true] %s4461
      %s4463 = sshll.u32 %s7, 4
      %s4464 = int_to_ptr.hbm [resolvable:$true] %s4463
      %4469 = dma.vmem_to_hbm [thread:$0]  %s4462, 2048, %s4464, [#allocation4], 128, 128, 8
    $region53: #{tpu_custom_call.1} parent=1 // pred_fallthru
      _
    // Predicated region
    $region54: #{tpu_custom_call.1} parent=1 // pred_check
      _
    $region55: #{tpu_custom_call.1} parent=1 // pred_check_branch
      %4471 = sbr.rel (0) target = $region57
    $region56: #{tpu_custom_call.1} parent=1 // pred_region
      %4473 = dma.done [#allocation4], 2048
    $region57: #{tpu_custom_call.1} parent=1 // pred_fallthru
      _
    %4474 = vsyncpa [#allocation3], 1
    %4475 = vsyncpa [#allocation6], 1
    %4476 = vsyncpa [#allocation9], 1
    %4477 = vsyncpa [#allocation4], 1

</llo_original>
